<compile_context>
chip_gen: v5e
topology: v5e:2x2
jax: 0.10.0
libtpu: 0.0.40
codegen_flags: <defaults>
</compile_context>

<pallas_src>
import math
import functools

import jax
import jax.numpy as jnp
from jax.experimental import pallas as pl
from jax.experimental.pallas import tpu as pltpu

# ---------------- small synthetic config ----------------
B        = 2                      # batch
SEQ      = 9                      # code length; mamba consumes SEQ-1 tokens
D_MODEL  = 32                     # config.d_model
CLIP_DIM = 512                    # clip_embed_dim (hard-coded in AiM.__init__)
VOCAB    = 128                    # synthetic codebook_size + 1
D_INNER  = 2 * D_MODEL            # mamba expand = 2
D_STATE  = 16
D_CONV   = 4
DT_RANK  = math.ceil(D_MODEL / 16)
N_LAYERS = 2
EPS      = 1e-5

# per-layer small-vector pack layout (rows of width D_INNER):
#   0..3  : conv_w (K, Di)
#   4     : norm_w (first D_MODEL lanes)
#   5     : conv_b
#   6     : dt_proj_b
#   7     : D
#   8..23 : A = -exp(A_log).T   (Ds, Di)
_PACK_ROWS = 8 + D_STATE


# ---------------- in-kernel helpers ----------------
def _rmsnorm(x, w):
    var = jnp.mean(x * x, axis=-1, keepdims=True)
    return x * jax.lax.rsqrt(var + EPS) * w


def _softplus(x):
    # clamped so the unselected branch never feeds a huge value into exp
    return jnp.where(x > 20.0, x, jnp.log1p(jnp.exp(jnp.minimum(x, 20.0))))


def _silu(x):
    return x * jax.nn.sigmoid(x)


# ---------------- fused whole-model kernel ----------------
def _fused_aim_kernel(code_smem, wte_ref, c_ref, tw_ref, glob_ref, small_ref,
                      inw_ref, xdbc_ref, outw_ref, lmw_ref, logits_ref,
                      *, bps, t_len):
    """One grid step processes `bps` batch elements (all matmuls batched over
    bps*t_len rows).  code_smem: (B, SEQ) int32 in SMEM (scalar prefetch)."""
    T = t_len
    R = bps * T
    g = pl.program_id(0)

    # ---- in-kernel token-embedding gather (unrolled dynamic row reads) ----
    rows = []
    for b in range(bps):
        for t in range(T):
            tok = code_smem[g * bps + b, t]
            rows.append(wte_ref[pl.ds(tok, 1), :])                   # (1, D)
    h = jnp.concatenate(rows, axis=0)                                # (R, D) f32

    # ---- cond = text_embed_proj(c), added to every position ----
    # TODO(synk): AiM's repo-specific adaLN conditioning inside MambaLMHeadModel
    # is not part of the provided source; the projected cond is added per token.
    c2 = c_ref[...].reshape(bps, CLIP_DIM).astype(jnp.bfloat16)
    cond = jnp.dot(c2, tw_ref[...], preferred_element_type=jnp.float32)   # (bps, D)
    cond = cond + glob_ref[0:1, :]                                        # + text_proj_b
    cond_full = jnp.concatenate(
        [jnp.broadcast_to(cond[b:b + 1, :], (T, D_MODEL)) for b in range(bps)],
        axis=0)                                                           # (R, D)
    h = h + cond_full

    # local time index within each batch segment (causal-conv mask)
    local_t = jax.lax.broadcasted_iota(jnp.int32, (R, D_INNER), 0) % T

    for l in range(N_LAYERS):                       # static unroll over layers
        resid = h
        sp = small_ref[l]                           # (24, Di) f32 layer pack
        conv_w = sp[0:D_CONV, :]                    # (K, Di)
        norm_w = sp[4:5, :D_MODEL]                  # (1, D)
        conv_b = sp[5:6, :]                         # (1, Di)
        dt_b   = sp[6:7, :]                         # (1, Di)
        Dp     = sp[7:8, :]                         # (1, Di)
        A      = sp[8:8 + D_STATE, :]               # (Ds, Di) = -exp(A_log).T

        hn = _rmsnorm(resid, norm_w)                                        # (R, D)
        xz = jnp.dot(hn.astype(jnp.bfloat16), inw_ref[l],
                     preferred_element_type=jnp.float32)                    # (R, 2*Di)
        x = xz[:, :D_INNER]
        z = xz[:, D_INNER:]

        # causal depthwise conv1d + SiLU: XLU rolls + iota mask (no concat /
        # unaligned sublane slices); mask also prevents cross-batch leakage.
        acc = jnp.broadcast_to(conv_b, (R, D_INNER))
        for k in range(D_CONV):
            s = D_CONV - 1 - k
            xk = x if s == 0 else jnp.where(local_t >= s,
                                            pltpu.roll(x, shift=s, axis=0), 0.0)
            acc = acc + xk * conv_w[k:k + 1, :]
        xc = _silu(acc)                                                     # (R, Di)

        # fused x_proj + dt_proj (weights pre-combined): one matmul -> [dt|B|C]
        dbc = jnp.dot(xc.astype(jnp.bfloat16), xdbc_ref[l],
                      preferred_element_type=jnp.float32)                   # (R, Di+2*Ds)
        delta = _softplus(dbc[:, :D_INNER] + dt_b)                          # (R, Di)
        Bm = dbc[:, D_INNER:D_INNER + D_STATE]                              # (R, Ds)
        Cm = dbc[:, D_INNER + D_STATE:]                                     # (R, Ds)
        dtu = delta * xc                                                    # (R, Di)

        # selective scan per batch element; exp/broadcasts hoisted off the
        # serial `state = state*dA + dBu` chain, state carried in vregs.
        y_parts = []
        for b in range(bps):
            lo = b * T
            d_b, Bm_b = delta[lo:lo + T, :], Bm[lo:lo + T, :]
            Cm_b, dtu_b = Cm[lo:lo + T, :], dtu[lo:lo + T, :]
            dA_all = jnp.exp(d_b[:, None, :] * A[None, :, :])               # (T, Ds, Di)
            state = jnp.zeros((D_STATE, D_INNER), jnp.float32)
            y_rows = []
            for t in range(T):
                dBu_t = jax.lax.dot_general(                                # outer product
                    Bm_b[t:t + 1, :], dtu_b[t:t + 1, :],
                    (((0,), (0,)), ((), ())),
                    preferred_element_type=jnp.float32)                     # (Ds, Di)
                state = state * dA_all[t] + dBu_t
                y_rows.append(jnp.dot(Cm_b[t:t + 1, :], state,
                                      preferred_element_type=jnp.float32))  # (1, Di)
            y_parts.append(jnp.concatenate(y_rows, axis=0))                 # (T, Di)
        y = jnp.concatenate(y_parts, axis=0) if bps > 1 else y_parts[0]     # (R, Di)

        y = y + Dp * xc
        y = y * _silu(z)                                                    # gate
        h = resid + jnp.dot(y.astype(jnp.bfloat16), outw_ref[l],
                            preferred_element_type=jnp.float32)

    hf = _rmsnorm(h, glob_ref[1:2, :])
    logits = jnp.dot(hf.astype(jnp.bfloat16), lmw_ref[...],
                     preferred_element_type=jnp.float32)                    # (R, VOCAB)
    for b in range(bps):                             # lane-dense (T, 128) stores
        logits_ref[b] = logits[b * T:(b + 1) * T, :]


# ---------------- parameter packing (done once, outside the hot path) ----------------
def pack_params(params):
    layers = params["layers"]

    small = []
    for lyr in layers:
        rows = jnp.zeros((_PACK_ROWS, D_INNER), jnp.float32)
        rows = rows.at[0:D_CONV, :].set(lyr["conv_w"])
        rows = rows.at[4, :D_MODEL].set(lyr["norm_w"])
        rows = rows.at[5, :].set(lyr["conv_b"])
        rows = rows.at[6, :].set(lyr["dt_proj_b"])
        rows = rows.at[7, :].set(lyr["D"])
        rows = rows.at[8:8 + D_STATE, :].set(-jnp.exp(lyr["A_log"]).T)
        small.append(rows)
    small = jnp.stack(small, axis=0)                            # (L, 24, Di) f32

    glob = jnp.zeros((2, D_MODEL), jnp.float32)
    glob = glob.at[0, :].set(params["text_embed_proj_b"])
    glob = glob.at[1, :].set(params["norm_f_w"])

    # fold x_proj's dt slice through dt_proj: one matmul emits [dt | B | C]
    xdbc = jnp.stack([
        jnp.concatenate([lyr["x_proj_w"][:, :DT_RANK] @ lyr["dt_proj_w"],
                         lyr["x_proj_w"][:, DT_RANK:]], axis=1)
        for lyr in layers], axis=0)                             # (L, Di, Di+2*Ds)

    return {
        "wte":     params["wte"].astype(jnp.float32),                       # (V, D)
        "text_w":  params["text_embed_proj_w"].astype(jnp.bfloat16),        # (512, D)
        "glob":    glob,                                                    # (2, D)
        "small":   small,                                                   # (L, 24, Di)
        "inw":     jnp.stack([l["in_proj_w"] for l in layers]).astype(jnp.bfloat16),
        "xdbc":    xdbc.astype(jnp.bfloat16),
        "outw":    jnp.stack([l["out_proj_w"] for l in layers]).astype(jnp.bfloat16),
        "lm_head": params["lm_head_w"].astype(jnp.bfloat16),                # (D, V)
    }


def _batch_per_step(batch):
    """grid=(B,) 'parallel' on dual-TensorCore chips (v7x) so both cores take
    batch elements; fold the whole batch into one grid step on single-TC
    v5e/v6e to drop per-step overhead and double MXU row occupancy."""
    try:
        kind = jax.devices()[0].device_kind.lower()
    except Exception:
        kind = ""
    dual_tc = ("v7" in kind) or ("7x" in kind)
    if dual_tc and batch % 2 == 0:
        return batch // 2
    return batch


# ---------------- wrapper (entire forward = one pallas_call) ----------------
def aim_forward(x, c, packed):
    """AiM.forward: x is the pre-tokenized code tensor (B, 1, SEQ) int32, c is (B, 512) f32."""
    # TODO(synk): the x.ndim == 4 path (frozen VQ-f16 VQVAE conv encoder + quantizer) has no
    # source in the provided module; only the pre-tokenized-code path is implemented.
    code = jnp.squeeze(x, axis=1) if x.ndim == 3 else x          # (B, SEQ) int32
    target = code
    Bt, S = code.shape
    T = S - 1

    bps = _batch_per_step(Bt)
    grid = Bt // bps
    c3 = c.astype(jnp.float32).reshape(Bt, 1, CLIP_DIM)

    kernel = functools.partial(_fused_aim_kernel, bps=bps, t_len=T)
    logits = pl.pallas_call(
        kernel,
        out_shape=jax.ShapeDtypeStruct((Bt, T, VOCAB), jnp.float32),
        grid_spec=pltpu.PrefetchScalarGridSpec(
            num_scalar_prefetch=1,                     # code -> SMEM
            grid=(grid,),
            in_specs=[
                pl.BlockSpec((VOCAB, D_MODEL), lambda g, tok: (0, 0)),            # wte (f32)
                pl.BlockSpec((bps, 1, CLIP_DIM), lambda g, tok: (g, 0, 0)),       # c
                pl.BlockSpec((CLIP_DIM, D_MODEL), lambda g, tok: (0, 0)),         # text proj w (bf16)
                pl.BlockSpec((2, D_MODEL), lambda g, tok: (0, 0)),                # [text_b ; norm_f]
                pl.BlockSpec((N_LAYERS, _PACK_ROWS, D_INNER), lambda g, tok: (0, 0, 0)),          # vec pack
                pl.BlockSpec((N_LAYERS, D_MODEL, 2 * D_INNER), lambda g, tok: (0, 0, 0)),         # in_proj
                pl.BlockSpec((N_LAYERS, D_INNER, D_INNER + 2 * D_STATE), lambda g, tok: (0, 0, 0)),  # x/dt proj
                pl.BlockSpec((N_LAYERS, D_INNER, D_MODEL), lambda g, tok: (0, 0, 0)),             # out_proj
                pl.BlockSpec((D_MODEL, VOCAB), lambda g, tok: (0, 0)),            # lm_head (bf16)
            ],
            out_specs=pl.BlockSpec((bps, T, VOCAB), lambda g, tok: (g, 0, 0)),
        ),
        compiler_params=pltpu.CompilerParams(
            dimension_semantics=("parallel",)),        # v7x: shard batch over 2 TCs
    )(code.astype(jnp.int32), packed["wte"], c3, packed["text_w"], packed["glob"],
      packed["small"], packed["inw"], packed["xdbc"], packed["outw"], packed["lm_head"])
    return logits, target


# ---------------- deterministic parameter init ----------------
def make_params(key):
    keys = iter(jax.random.split(key, 4 + 4 * N_LAYERS))

    def nrm(shape, scale=0.02):
        return (scale * jax.random.normal(next(keys), shape)).astype(jnp.float32)

    params = {
        "wte": nrm((VOCAB, D_MODEL)),
        "norm_f_w": jnp.ones((D_MODEL,), jnp.float32),
        "text_embed_proj_w": nrm((CLIP_DIM, D_MODEL)),
        "text_embed_proj_b": jnp.zeros((D_MODEL,), jnp.float32),
    }
    params["lm_head_w"] = params["wte"].T                  # tied embeddings

    layers = []
    for _ in range(N_LAYERS):
        A = jnp.tile(jnp.arange(1, D_STATE + 1, dtype=jnp.float32)[None, :], (D_INNER, 1))
        layers.append({
            "norm_w": jnp.ones((D_MODEL,), jnp.float32),
            "in_proj_w": nrm((D_MODEL, 2 * D_INNER)),
            "conv_w": nrm((D_CONV, D_INNER), 0.1),
            "conv_b": jnp.zeros((D_INNER,), jnp.float32),
            "x_proj_w": nrm((D_INNER, DT_RANK + 2 * D_STATE)),
            "dt_proj_w": nrm((DT_RANK, D_INNER), 0.1),
            "dt_proj_b": jnp.full((D_INNER,), float(jnp.log(jnp.expm1(jnp.float32(0.01)))),
                                  jnp.float32),
            "A_log": jnp.log(A),
            "D": jnp.ones((D_INNER,), jnp.float32),
            "out_proj_w": nrm((D_INNER, D_MODEL)),
        })
    params["layers"] = layers
    return params


if __name__ == "__main__":
    root = jax.random.PRNGKey(0)
    kp, kx, kc = jax.random.split(root, 3)
    params = make_params(kp)
    packed = jax.tree_util.tree_map(jax.block_until_ready, pack_params(params))

    # x: pre-tokenized VQ codes (B, 1, SEQ) int32; c: CLIP embedding (B, 512) f32.
    x = jax.random.randint(kx, (B, 1, SEQ), 0, VOCAB, dtype=jnp.int32)
    c = jax.random.normal(kc, (B, CLIP_DIM), dtype=jnp.float32)

    fwd = jax.jit(functools.partial(aim_forward, packed=packed))
    logits, target = fwd(x, c)
    jax.block_until_ready((logits, target))

    assert logits.shape == (B, SEQ - 1, VOCAB), logits.shape
    assert target.shape == (B, SEQ), target.shape
    assert jnp.all(jnp.isfinite(logits))
    print("KERNEL_OK")
</pallas_src>

<mosaic_0001>
module attributes {stable_mosaic.version = 11 : i64} {
  func.func @_fused_aim_kernel(%arg0: i32, %arg1: memref<2x9xi32, #tpu.memory_space<smem>>, %arg2: memref<128x32xf32, #tpu.memory_space<vmem>>, %arg3: memref<2x1x512xf32, #tpu.memory_space<vmem>>, %arg4: memref<512x32xbf16, #tpu.memory_space<vmem>>, %arg5: memref<2x32xf32, #tpu.memory_space<vmem>>, %arg6: memref<2x24x64xf32, #tpu.memory_space<vmem>>, %arg7: memref<2x32x128xbf16, #tpu.memory_space<vmem>>, %arg8: memref<2x64x96xbf16, #tpu.memory_space<vmem>>, %arg9: memref<2x64x32xbf16, #tpu.memory_space<vmem>>, %arg10: memref<32x128xbf16, #tpu.memory_space<vmem>>, %arg11: memref<2x8x128xf32, #tpu.memory_space<vmem>>) attributes {dimension_semantics = [#tpu.dimension_semantics<parallel>], iteration_bounds = array<i64: 1>, scalar_prefetch = 1 : i64, scratch_operands = 0 : i64, tpu.core_type = #tpu.core_type<tc>, window_params = [{pipeline_mode = #tpu.pipeline_mode<synchronous>, transform_indices = @transform_0, window_bounds = array<i64: 128, 32>}, {transform_indices = @transform_1, window_bounds = array<i64: 2, 1, 512>}, {pipeline_mode = #tpu.pipeline_mode<synchronous>, transform_indices = @transform_2, window_bounds = array<i64: 512, 32>}, {pipeline_mode = #tpu.pipeline_mode<synchronous>, transform_indices = @transform_3, window_bounds = array<i64: 2, 32>}, {pipeline_mode = #tpu.pipeline_mode<synchronous>, transform_indices = @transform_4, window_bounds = array<i64: 2, 24, 64>}, {pipeline_mode = #tpu.pipeline_mode<synchronous>, transform_indices = @transform_5, window_bounds = array<i64: 2, 32, 128>}, {pipeline_mode = #tpu.pipeline_mode<synchronous>, transform_indices = @transform_6, window_bounds = array<i64: 2, 64, 96>}, {pipeline_mode = #tpu.pipeline_mode<synchronous>, transform_indices = @transform_7, window_bounds = array<i64: 2, 64, 32>}, {pipeline_mode = #tpu.pipeline_mode<synchronous>, transform_indices = @transform_8, window_bounds = array<i64: 32, 128>}, {transform_indices = @transform_9, window_bounds = array<i64: 2, 8, 128>}]} {
    %c2_i32 = arith.constant 2 : i32
    %0 = arith.muli %arg0, %c2_i32 : i32
    %c0_i32 = arith.constant 0 : i32
    %1 = arith.addi %0, %c0_i32 : i32
    %2 = arith.index_cast %1 : i32 to index
    %c0 = arith.constant 0 : index
    %3 = memref.load %arg1[%2, %c0] : memref<2x9xi32, #tpu.memory_space<smem>>
    %4 = arith.index_cast %3 : i32 to index
    %c0_0 = arith.constant 0 : index
    %5 = vector.load %arg2[%4, %c0_0] : memref<128x32xf32, #tpu.memory_space<vmem>>, vector<1x32xf32>
    %c2_i32_1 = arith.constant 2 : i32
    %6 = arith.muli %arg0, %c2_i32_1 : i32
    %c0_i32_2 = arith.constant 0 : i32
    %7 = arith.addi %6, %c0_i32_2 : i32
    %8 = arith.index_cast %7 : i32 to index
    %c1 = arith.constant 1 : index
    %9 = memref.load %arg1[%8, %c1] : memref<2x9xi32, #tpu.memory_space<smem>>
    %10 = arith.index_cast %9 : i32 to index
    %c0_3 = arith.constant 0 : index
    %11 = vector.load %arg2[%10, %c0_3] : memref<128x32xf32, #tpu.memory_space<vmem>>, vector<1x32xf32>
    %c2_i32_4 = arith.constant 2 : i32
    %12 = arith.muli %arg0, %c2_i32_4 : i32
    %c0_i32_5 = arith.constant 0 : i32
    %13 = arith.addi %12, %c0_i32_5 : i32
    %14 = arith.index_cast %13 : i32 to index
    %c2 = arith.constant 2 : index
    %15 = memref.load %arg1[%14, %c2] : memref<2x9xi32, #tpu.memory_space<smem>>
    %16 = arith.index_cast %15 : i32 to index
    %c0_6 = arith.constant 0 : index
    %17 = vector.load %arg2[%16, %c0_6] : memref<128x32xf32, #tpu.memory_space<vmem>>, vector<1x32xf32>
    %c2_i32_7 = arith.constant 2 : i32
    %18 = arith.muli %arg0, %c2_i32_7 : i32
    %c0_i32_8 = arith.constant 0 : i32
    %19 = arith.addi %18, %c0_i32_8 : i32
    %20 = arith.index_cast %19 : i32 to index
    %c3 = arith.constant 3 : index
    %21 = memref.load %arg1[%20, %c3] : memref<2x9xi32, #tpu.memory_space<smem>>
    %22 = arith.index_cast %21 : i32 to index
    %c0_9 = arith.constant 0 : index
    %23 = vector.load %arg2[%22, %c0_9] : memref<128x32xf32, #tpu.memory_space<vmem>>, vector<1x32xf32>
    %c2_i32_10 = arith.constant 2 : i32
    %24 = arith.muli %arg0, %c2_i32_10 : i32
    %c0_i32_11 = arith.constant 0 : i32
    %25 = arith.addi %24, %c0_i32_11 : i32
    %26 = arith.index_cast %25 : i32 to index
    %c4 = arith.constant 4 : index
    %27 = memref.load %arg1[%26, %c4] : memref<2x9xi32, #tpu.memory_space<smem>>
    %28 = arith.index_cast %27 : i32 to index
    %c0_12 = arith.constant 0 : index
    %29 = vector.load %arg2[%28, %c0_12] : memref<128x32xf32, #tpu.memory_space<vmem>>, vector<1x32xf32>
    %c2_i32_13 = arith.constant 2 : i32
    %30 = arith.muli %arg0, %c2_i32_13 : i32
    %c0_i32_14 = arith.constant 0 : i32
    %31 = arith.addi %30, %c0_i32_14 : i32
    %32 = arith.index_cast %31 : i32 to index
    %c5 = arith.constant 5 : index
    %33 = memref.load %arg1[%32, %c5] : memref<2x9xi32, #tpu.memory_space<smem>>
    %34 = arith.index_cast %33 : i32 to index
    %c0_15 = arith.constant 0 : index
    %35 = vector.load %arg2[%34, %c0_15] : memref<128x32xf32, #tpu.memory_space<vmem>>, vector<1x32xf32>
    %c2_i32_16 = arith.constant 2 : i32
    %36 = arith.muli %arg0, %c2_i32_16 : i32
    %c0_i32_17 = arith.constant 0 : i32
    %37 = arith.addi %36, %c0_i32_17 : i32
    %38 = arith.index_cast %37 : i32 to index
    %c6 = arith.constant 6 : index
    %39 = memref.load %arg1[%38, %c6] : memref<2x9xi32, #tpu.memory_space<smem>>
    %40 = arith.index_cast %39 : i32 to index
    %c0_18 = arith.constant 0 : index
    %41 = vector.load %arg2[%40, %c0_18] : memref<128x32xf32, #tpu.memory_space<vmem>>, vector<1x32xf32>
    %c2_i32_19 = arith.constant 2 : i32
    %42 = arith.muli %arg0, %c2_i32_19 : i32
    %c0_i32_20 = arith.constant 0 : i32
    %43 = arith.addi %42, %c0_i32_20 : i32
    %44 = arith.index_cast %43 : i32 to index
    %c7 = arith.constant 7 : index
    %45 = memref.load %arg1[%44, %c7] : memref<2x9xi32, #tpu.memory_space<smem>>
    %46 = arith.index_cast %45 : i32 to index
    %c0_21 = arith.constant 0 : index
    %47 = vector.load %arg2[%46, %c0_21] : memref<128x32xf32, #tpu.memory_space<vmem>>, vector<1x32xf32>
    %c2_i32_22 = arith.constant 2 : i32
    %48 = arith.muli %arg0, %c2_i32_22 : i32
    %c1_i32 = arith.constant 1 : i32
    %49 = arith.addi %48, %c1_i32 : i32
    %50 = arith.index_cast %49 : i32 to index
    %c0_23 = arith.constant 0 : index
    %51 = memref.load %arg1[%50, %c0_23] : memref<2x9xi32, #tpu.memory_space<smem>>
    %52 = arith.index_cast %51 : i32 to index
    %c0_24 = arith.constant 0 : index
    %53 = vector.load %arg2[%52, %c0_24] : memref<128x32xf32, #tpu.memory_space<vmem>>, vector<1x32xf32>
    %c2_i32_25 = arith.constant 2 : i32
    %54 = arith.muli %arg0, %c2_i32_25 : i32
    %c1_i32_26 = arith.constant 1 : i32
    %55 = arith.addi %54, %c1_i32_26 : i32
    %56 = arith.index_cast %55 : i32 to index
    %c1_27 = arith.constant 1 : index
    %57 = memref.load %arg1[%56, %c1_27] : memref<2x9xi32, #tpu.memory_space<smem>>
    %58 = arith.index_cast %57 : i32 to index
    %c0_28 = arith.constant 0 : index
    %59 = vector.load %arg2[%58, %c0_28] : memref<128x32xf32, #tpu.memory_space<vmem>>, vector<1x32xf32>
    %c2_i32_29 = arith.constant 2 : i32
    %60 = arith.muli %arg0, %c2_i32_29 : i32
    %c1_i32_30 = arith.constant 1 : i32
    %61 = arith.addi %60, %c1_i32_30 : i32
    %62 = arith.index_cast %61 : i32 to index
    %c2_31 = arith.constant 2 : index
    %63 = memref.load %arg1[%62, %c2_31] : memref<2x9xi32, #tpu.memory_space<smem>>
    %64 = arith.index_cast %63 : i32 to index
    %c0_32 = arith.constant 0 : index
    %65 = vector.load %arg2[%64, %c0_32] : memref<128x32xf32, #tpu.memory_space<vmem>>, vector<1x32xf32>
    %c2_i32_33 = arith.constant 2 : i32
    %66 = arith.muli %arg0, %c2_i32_33 : i32
    %c1_i32_34 = arith.constant 1 : i32
    %67 = arith.addi %66, %c1_i32_34 : i32
    %68 = arith.index_cast %67 : i32 to index
    %c3_35 = arith.constant 3 : index
    %69 = memref.load %arg1[%68, %c3_35] : memref<2x9xi32, #tpu.memory_space<smem>>
    %70 = arith.index_cast %69 : i32 to index
    %c0_36 = arith.constant 0 : index
    %71 = vector.load %arg2[%70, %c0_36] : memref<128x32xf32, #tpu.memory_space<vmem>>, vector<1x32xf32>
    %c2_i32_37 = arith.constant 2 : i32
    %72 = arith.muli %arg0, %c2_i32_37 : i32
    %c1_i32_38 = arith.constant 1 : i32
    %73 = arith.addi %72, %c1_i32_38 : i32
    %74 = arith.index_cast %73 : i32 to index
    %c4_39 = arith.constant 4 : index
    %75 = memref.load %arg1[%74, %c4_39] : memref<2x9xi32, #tpu.memory_space<smem>>
    %76 = arith.index_cast %75 : i32 to index
    %c0_40 = arith.constant 0 : index
    %77 = vector.load %arg2[%76, %c0_40] : memref<128x32xf32, #tpu.memory_space<vmem>>, vector<1x32xf32>
    %c2_i32_41 = arith.constant 2 : i32
    %78 = arith.muli %arg0, %c2_i32_41 : i32
    %c1_i32_42 = arith.constant 1 : i32
    %79 = arith.addi %78, %c1_i32_42 : i32
    %80 = arith.index_cast %79 : i32 to index
    %c5_43 = arith.constant 5 : index
    %81 = memref.load %arg1[%80, %c5_43] : memref<2x9xi32, #tpu.memory_space<smem>>
    %82 = arith.index_cast %81 : i32 to index
    %c0_44 = arith.constant 0 : index
    %83 = vector.load %arg2[%82, %c0_44] : memref<128x32xf32, #tpu.memory_space<vmem>>, vector<1x32xf32>
    %c2_i32_45 = arith.constant 2 : i32
    %84 = arith.muli %arg0, %c2_i32_45 : i32
    %c1_i32_46 = arith.constant 1 : i32
    %85 = arith.addi %84, %c1_i32_46 : i32
    %86 = arith.index_cast %85 : i32 to index
    %c6_47 = arith.constant 6 : index
    %87 = memref.load %arg1[%86, %c6_47] : memref<2x9xi32, #tpu.memory_space<smem>>
    %88 = arith.index_cast %87 : i32 to index
    %c0_48 = arith.constant 0 : index
    %89 = vector.load %arg2[%88, %c0_48] : memref<128x32xf32, #tpu.memory_space<vmem>>, vector<1x32xf32>
    %c2_i32_49 = arith.constant 2 : i32
    %90 = arith.muli %arg0, %c2_i32_49 : i32
    %c1_i32_50 = arith.constant 1 : i32
    %91 = arith.addi %90, %c1_i32_50 : i32
    %92 = arith.index_cast %91 : i32 to index
    %c7_51 = arith.constant 7 : index
    %93 = memref.load %arg1[%92, %c7_51] : memref<2x9xi32, #tpu.memory_space<smem>>
    %94 = arith.index_cast %93 : i32 to index
    %c0_52 = arith.constant 0 : index
    %95 = vector.load %arg2[%94, %c0_52] : memref<128x32xf32, #tpu.memory_space<vmem>>, vector<1x32xf32>
    %96 = tpu.concatenate %5, %11, %17, %23, %29, %35, %41, %47, %53, %59, %65, %71, %77, %83, %89, %95 in 0 : vector<1x32xf32>, vector<1x32xf32>, vector<1x32xf32>, vector<1x32xf32>, vector<1x32xf32>, vector<1x32xf32>, vector<1x32xf32>, vector<1x32xf32>, vector<1x32xf32>, vector<1x32xf32>, vector<1x32xf32>, vector<1x32xf32>, vector<1x32xf32>, vector<1x32xf32>, vector<1x32xf32>, vector<1x32xf32> -> vector<16x32xf32>
    %c0_53 = arith.constant 0 : index
    %c0_54 = arith.constant 0 : index
    %c0_55 = arith.constant 0 : index
    %97 = vector.load %arg3[%c0_53, %c0_54, %c0_55] : memref<2x1x512xf32, #tpu.memory_space<vmem>>, vector<2x1x512xf32>
    %98 = vector.shape_cast %97 : vector<2x1x512xf32> to vector<2x512xf32>
    %99 = arith.truncf %98 : vector<2x512xf32> to vector<2x512xbf16>
    %c0_56 = arith.constant 0 : index
    %c0_57 = arith.constant 0 : index
    %100 = vector.load %arg4[%c0_56, %c0_57] : memref<512x32xbf16, #tpu.memory_space<vmem>>, vector<512x32xbf16>
    %cst = arith.constant dense<0.000000e+00> : vector<2x32xf32>
    %101 = tpu.matmul %99, %100, %cst {dimension_numbers = #tpu.dot_dimension_numbers<[1], [0], [0], [1], [0, 0, 1, 1], [], []>} : vector<2x512xbf16>, vector<512x32xbf16>, vector<2x32xf32> -> vector<2x32xf32>
    %c0_58 = arith.constant 0 : index
    %c0_59 = arith.constant 0 : index
    %102 = vector.load %arg5[%c0_58, %c0_59] : memref<2x32xf32, #tpu.memory_space<vmem>>, vector<1x32xf32>
    %103 = vector.broadcast %102 : vector<1x32xf32> to vector<2x32xf32>
    %104 = arith.addf %101, %103 : vector<2x32xf32>
    %105 = vector.extract_strided_slice %104 {offsets = [0, 0], sizes = [1, 32], strides = [1, 1]} : vector<2x32xf32> to vector<1x32xf32>
    %106 = vector.shape_cast %105 : vector<1x32xf32> to vector<1x32xf32>
    %107 = vector.broadcast %106 : vector<1x32xf32> to vector<8x32xf32>
    %108 = vector.extract_strided_slice %104 {offsets = [1, 0], sizes = [1, 32], strides = [1, 1]} : vector<2x32xf32> to vector<1x32xf32>
    %109 = vector.shape_cast %108 : vector<1x32xf32> to vector<1x32xf32>
    %110 = vector.broadcast %109 : vector<1x32xf32> to vector<8x32xf32>
    %111 = tpu.concatenate %107, %110 in 0 : vector<8x32xf32>, vector<8x32xf32> -> vector<16x32xf32>
    %112 = arith.addf %96, %111 : vector<16x32xf32>
    %113 = tpu.iota {dimensions = array<i32: 0>} : vector<16x64xi32>
    %c8_i32 = arith.constant 8 : i32
    %c0_i32_60 = arith.constant 0 : i32
    %114 = arith.cmpi eq, %c8_i32, %c0_i32_60 : i32
    %c1_i32_61 = arith.constant 1 : i32
    %115 = arith.select %114, %c1_i32_61, %c8_i32 : i32
    %116 = vector.broadcast %115 : i32 to vector<16x64xi32>
    %117 = arith.remsi %113, %116 : vector<16x64xi32>
    %c0_i32_62 = arith.constant 0 : i32
    %118 = vector.broadcast %c0_i32_62 : i32 to vector<16x64xi32>
    %119 = arith.cmpi ne, %117, %118 : vector<16x64xi32>
    %c0_i32_63 = arith.constant 0 : i32
    %120 = vector.broadcast %c0_i32_63 : i32 to vector<16x64xi32>
    %121 = arith.cmpi slt, %117, %120 : vector<16x64xi32>
    %c0_i32_64 = arith.constant 0 : i32
    %122 = arith.cmpi slt, %115, %c0_i32_64 : i32
    %123 = vector.broadcast %122 : i1 to vector<16x64xi1>
    %124 = vector.broadcast %123 : vector<16x64xi1> to vector<16x64xi1>
    %125 = arith.xori %121, %124 : vector<16x64xi1>
    %126 = arith.andi %125, %119 : vector<16x64xi1>
    %127 = vector.broadcast %115 : i32 to vector<16x64xi32>
    %128 = arith.addi %117, %127 : vector<16x64xi32>
    %129 = arith.select %126, %128, %117 : vector<16x64xi1>, vector<16x64xi32>
    %c0_65 = arith.constant 0 : index
    %c0_66 = arith.constant 0 : index
    %c0_67 = arith.constant 0 : index
    %130 = vector.load %arg6[%c0_65, %c0_66, %c0_67] : memref<2x24x64xf32, #tpu.memory_space<vmem>>, vector<1x24x64xf32>
    %131 = vector.shape_cast %130 : vector<1x24x64xf32> to vector<24x64xf32>
    %132 = vector.extract_strided_slice %131 {offsets = [0, 0], sizes = [4, 64], strides = [1, 1]} : vector<24x64xf32> to vector<4x64xf32>
    %133 = vector.extract_strided_slice %131 {offsets = [4, 0], sizes = [1, 32], strides = [1, 1]} : vector<24x64xf32> to vector<1x32xf32>
    %134 = vector.extract_strided_slice %131 {offsets = [5, 0], sizes = [1, 64], strides = [1, 1]} : vector<24x64xf32> to vector<1x64xf32>
    %135 = vector.extract_strided_slice %131 {offsets = [6, 0], sizes = [1, 64], strides = [1, 1]} : vector<24x64xf32> to vector<1x64xf32>
    %136 = vector.extract_strided_slice %131 {offsets = [7, 0], sizes = [1, 64], strides = [1, 1]} : vector<24x64xf32> to vector<1x64xf32>
    %137 = vector.extract_strided_slice %131 {offsets = [8, 0], sizes = [16, 64], strides = [1, 1]} : vector<24x64xf32> to vector<16x64xf32>
    %138 = arith.mulf %112, %112 : vector<16x32xf32>
    %cst_68 = arith.constant dense<0.000000e+00> : vector<16xf32>
    %139 = vector.multi_reduction <add>, %138, %cst_68 [1] : vector<16x32xf32> to vector<16xf32>
    %140 = vector.shape_cast %139 : vector<16xf32> to vector<16x1xf32>
    %cst_69 = arith.constant 3.200000e+01 : f32
    %141 = vector.broadcast %cst_69 : f32 to vector<16x1xf32>
    %142 = arith.divf %140, %141 : vector<16x1xf32>
    %cst_70 = arith.constant 9.99999974E-6 : f32
    %143 = vector.broadcast %cst_70 : f32 to vector<16x1xf32>
    %144 = arith.addf %142, %143 : vector<16x1xf32>
    %145 = math.rsqrt %144 : vector<16x1xf32>
    %146 = vector.broadcast %145 : vector<16x1xf32> to vector<16x32xf32>
    %147 = arith.mulf %112, %146 : vector<16x32xf32>
    %148 = vector.broadcast %133 : vector<1x32xf32> to vector<16x32xf32>
    %149 = arith.mulf %147, %148 : vector<16x32xf32>
    %150 = arith.truncf %149 : vector<16x32xf32> to vector<16x32xbf16>
    %c0_71 = arith.constant 0 : index
    %c0_72 = arith.constant 0 : index
    %c0_73 = arith.constant 0 : index
    %151 = vector.load %arg7[%c0_71, %c0_72, %c0_73] : memref<2x32x128xbf16, #tpu.memory_space<vmem>>, vector<1x32x128xbf16>
    %152 = vector.shape_cast %151 : vector<1x32x128xbf16> to vector<32x128xbf16>
    %cst_74 = arith.constant dense<0.000000e+00> : vector<16x128xf32>
    %153 = tpu.matmul %150, %152, %cst_74 {dimension_numbers = #tpu.dot_dimension_numbers<[1], [0], [0], [1], [0, 0, 1, 1], [], []>} : vector<16x32xbf16>, vector<32x128xbf16>, vector<16x128xf32> -> vector<16x128xf32>
    %154 = vector.extract_strided_slice %153 {offsets = [0, 0], sizes = [16, 64], strides = [1, 1]} : vector<16x128xf32> to vector<16x64xf32>
    %155 = vector.extract_strided_slice %153 {offsets = [0, 64], sizes = [16, 64], strides = [1, 1]} : vector<16x128xf32> to vector<16x64xf32>
    %156 = vector.shape_cast %134 : vector<1x64xf32> to vector<1x64xf32>
    %157 = vector.broadcast %156 : vector<1x64xf32> to vector<16x64xf32>
    %c3_i32 = arith.constant 3 : i32
    %158 = vector.broadcast %c3_i32 : i32 to vector<16x64xi32>
    %159 = arith.cmpi sge, %129, %158 : vector<16x64xi32>
    %c3_i32_75 = arith.constant 3 : i32
    %160 = tpu.dynamic_rotate %154 by %c3_i32_75 dim 0 : vector<16x64xf32>, i32 -> vector<16x64xf32>
    %cst_76 = arith.constant 0.000000e+00 : f32
    %161 = vector.broadcast %cst_76 : f32 to vector<16x64xf32>
    %162 = arith.select %159, %160, %161 : vector<16x64xi1>, vector<16x64xf32>
    %163 = vector.extract_strided_slice %132 {offsets = [0, 0], sizes = [1, 64], strides = [1, 1]} : vector<4x64xf32> to vector<1x64xf32>
    %164 = vector.broadcast %163 : vector<1x64xf32> to vector<16x64xf32>
    %165 = arith.mulf %162, %164 : vector<16x64xf32>
    %166 = arith.addf %157, %165 : vector<16x64xf32>
    %c2_i32_77 = arith.constant 2 : i32
    %167 = vector.broadcast %c2_i32_77 : i32 to vector<16x64xi32>
    %168 = arith.cmpi sge, %129, %167 : vector<16x64xi32>
    %c2_i32_78 = arith.constant 2 : i32
    %169 = tpu.dynamic_rotate %154 by %c2_i32_78 dim 0 : vector<16x64xf32>, i32 -> vector<16x64xf32>
    %cst_79 = arith.constant 0.000000e+00 : f32
    %170 = vector.broadcast %cst_79 : f32 to vector<16x64xf32>
    %171 = arith.select %168, %169, %170 : vector<16x64xi1>, vector<16x64xf32>
    %172 = vector.extract_strided_slice %132 {offsets = [1, 0], sizes = [1, 64], strides = [1, 1]} : vector<4x64xf32> to vector<1x64xf32>
    %173 = vector.broadcast %172 : vector<1x64xf32> to vector<16x64xf32>
    %174 = arith.mulf %171, %173 : vector<16x64xf32>
    %175 = arith.addf %166, %174 : vector<16x64xf32>
    %c1_i32_80 = arith.constant 1 : i32
    %176 = vector.broadcast %c1_i32_80 : i32 to vector<16x64xi32>
    %177 = arith.cmpi sge, %129, %176 : vector<16x64xi32>
    %c1_i32_81 = arith.constant 1 : i32
    %178 = tpu.dynamic_rotate %154 by %c1_i32_81 dim 0 : vector<16x64xf32>, i32 -> vector<16x64xf32>
    %cst_82 = arith.constant 0.000000e+00 : f32
    %179 = vector.broadcast %cst_82 : f32 to vector<16x64xf32>
    %180 = arith.select %177, %178, %179 : vector<16x64xi1>, vector<16x64xf32>
    %181 = vector.extract_strided_slice %132 {offsets = [2, 0], sizes = [1, 64], strides = [1, 1]} : vector<4x64xf32> to vector<1x64xf32>
    %182 = vector.broadcast %181 : vector<1x64xf32> to vector<16x64xf32>
    %183 = arith.mulf %180, %182 : vector<16x64xf32>
    %184 = arith.addf %175, %183 : vector<16x64xf32>
    %185 = vector.extract_strided_slice %132 {offsets = [3, 0], sizes = [1, 64], strides = [1, 1]} : vector<4x64xf32> to vector<1x64xf32>
    %186 = vector.broadcast %185 : vector<1x64xf32> to vector<16x64xf32>
    %187 = arith.mulf %154, %186 : vector<16x64xf32>
    %188 = arith.addf %184, %187 : vector<16x64xf32>
    %189 = arith.negf %188 : vector<16x64xf32>
    %190 = math.exp %189 : vector<16x64xf32>
    %cst_83 = arith.constant 1.000000e+00 : f32
    %191 = vector.broadcast %cst_83 : f32 to vector<16x64xf32>
    %192 = arith.addf %191, %190 : vector<16x64xf32>
    %193 = arith.divf %191, %192 : vector<16x64xf32>
    %194 = arith.mulf %188, %193 : vector<16x64xf32>
    %195 = arith.truncf %194 : vector<16x64xf32> to vector<16x64xbf16>
    %c0_84 = arith.constant 0 : index
    %c0_85 = arith.constant 0 : index
    %c0_86 = arith.constant 0 : index
    %196 = vector.load %arg8[%c0_84, %c0_85, %c0_86] : memref<2x64x96xbf16, #tpu.memory_space<vmem>>, vector<1x64x96xbf16>
    %197 = vector.shape_cast %196 : vector<1x64x96xbf16> to vector<64x96xbf16>
    %cst_87 = arith.constant dense<0.000000e+00> : vector<16x96xf32>
    %198 = tpu.matmul %195, %197, %cst_87 {dimension_numbers = #tpu.dot_dimension_numbers<[1], [0], [0], [1], [0, 0, 1, 1], [], []>} : vector<16x64xbf16>, vector<64x96xbf16>, vector<16x96xf32> -> vector<16x96xf32>
    %199 = vector.extract_strided_slice %198 {offsets = [0, 0], sizes = [16, 64], strides = [1, 1]} : vector<16x96xf32> to vector<16x64xf32>
    %200 = vector.broadcast %135 : vector<1x64xf32> to vector<16x64xf32>
    %201 = arith.addf %199, %200 : vector<16x64xf32>
    %cst_88 = arith.constant 2.000000e+01 : f32
    %202 = vector.broadcast %cst_88 : f32 to vector<16x64xf32>
    %203 = arith.cmpf ogt, %201, %202 : vector<16x64xf32>
    %cst_89 = arith.constant 2.000000e+01 : f32
    %204 = vector.broadcast %cst_89 : f32 to vector<16x64xf32>
    %205 = arith.minimumf %201, %204 : vector<16x64xf32>
    %206 = math.exp %205 : vector<16x64xf32>
    %207 = math.log1p %206 : vector<16x64xf32>
    %208 = arith.select %203, %201, %207 : vector<16x64xi1>, vector<16x64xf32>
    %209 = vector.extract_strided_slice %198 {offsets = [0, 64], sizes = [16, 16], strides = [1, 1]} : vector<16x96xf32> to vector<16x16xf32>
    %210 = vector.extract_strided_slice %198 {offsets = [0, 80], sizes = [16, 16], strides = [1, 1]} : vector<16x96xf32> to vector<16x16xf32>
    %211 = arith.mulf %208, %194 : vector<16x64xf32>
    %212 = vector.extract_strided_slice %208 {offsets = [0, 0], sizes = [8, 64], strides = [1, 1]} : vector<16x64xf32> to vector<8x64xf32>
    %213 = vector.extract_strided_slice %209 {offsets = [0, 0], sizes = [8, 16], strides = [1, 1]} : vector<16x16xf32> to vector<8x16xf32>
    %214 = vector.extract_strided_slice %210 {offsets = [0, 0], sizes = [8, 16], strides = [1, 1]} : vector<16x16xf32> to vector<8x16xf32>
    %215 = vector.extract_strided_slice %211 {offsets = [0, 0], sizes = [8, 64], strides = [1, 1]} : vector<16x64xf32> to vector<8x64xf32>
    %216 = vector.shape_cast %212 : vector<8x64xf32> to vector<8x1x64xf32>
    %217 = vector.shape_cast %137 : vector<16x64xf32> to vector<1x16x64xf32>
    %218 = vector.broadcast %216 : vector<8x1x64xf32> to vector<8x16x64xf32>
    %219 = vector.broadcast %217 : vector<1x16x64xf32> to vector<8x16x64xf32>
    %220 = arith.mulf %218, %219 : vector<8x16x64xf32>
    %221 = math.exp %220 : vector<8x16x64xf32>
    %cst_90 = arith.constant 0.000000e+00 : f32
    %222 = vector.broadcast %cst_90 : f32 to vector<16x64xf32>
    %223 = vector.extract_strided_slice %213 {offsets = [0, 0], sizes = [1, 16], strides = [1, 1]} : vector<8x16xf32> to vector<1x16xf32>
    %224 = vector.extract_strided_slice %215 {offsets = [0, 0], sizes = [1, 64], strides = [1, 1]} : vector<8x64xf32> to vector<1x64xf32>
    %cst_91 = arith.constant dense<0.000000e+00> : vector<16x64xf32>
    %225 = tpu.matmul %223, %224, %cst_91 {dimension_numbers = #tpu.dot_dimension_numbers<[0], [0], [1], [1], [0, 1, 1, 1], [], []>} : vector<1x16xf32>, vector<1x64xf32>, vector<16x64xf32> -> vector<16x64xf32>
    %226 = vector.extract_strided_slice %221 {offsets = [0, 0, 0], sizes = [1, 16, 64], strides = [1, 1, 1]} : vector<8x16x64xf32> to vector<1x16x64xf32>
    %227 = vector.shape_cast %226 : vector<1x16x64xf32> to vector<16x64xf32>
    %228 = arith.mulf %222, %227 : vector<16x64xf32>
    %229 = arith.addf %228, %225 : vector<16x64xf32>
    %230 = vector.extract_strided_slice %214 {offsets = [0, 0], sizes = [1, 16], strides = [1, 1]} : vector<8x16xf32> to vector<1x16xf32>
    %cst_92 = arith.constant dense<0.000000e+00> : vector<1x64xf32>
    %231 = tpu.matmul %230, %229, %cst_92 {dimension_numbers = #tpu.dot_dimension_numbers<[1], [0], [0], [1], [0, 0, 1, 1], [], []>} : vector<1x16xf32>, vector<16x64xf32>, vector<1x64xf32> -> vector<1x64xf32>
    %232 = vector.extract_strided_slice %213 {offsets = [1, 0], sizes = [1, 16], strides = [1, 1]} : vector<8x16xf32> to vector<1x16xf32>
    %233 = vector.extract_strided_slice %215 {offsets = [1, 0], sizes = [1, 64], strides = [1, 1]} : vector<8x64xf32> to vector<1x64xf32>
    %cst_93 = arith.constant dense<0.000000e+00> : vector<16x64xf32>
    %234 = tpu.matmul %232, %233, %cst_93 {dimension_numbers = #tpu.dot_dimension_numbers<[0], [0], [1], [1], [0, 1, 1, 1], [], []>} : vector<1x16xf32>, vector<1x64xf32>, vector<16x64xf32> -> vector<16x64xf32>
    %235 = vector.extract_strided_slice %221 {offsets = [1, 0, 0], sizes = [1, 16, 64], strides = [1, 1, 1]} : vector<8x16x64xf32> to vector<1x16x64xf32>
    %236 = vector.shape_cast %235 : vector<1x16x64xf32> to vector<16x64xf32>
    %237 = arith.mulf %229, %236 : vector<16x64xf32>
    %238 = arith.addf %237, %234 : vector<16x64xf32>
    %239 = vector.extract_strided_slice %214 {offsets = [1, 0], sizes = [1, 16], strides = [1, 1]} : vector<8x16xf32> to vector<1x16xf32>
    %cst_94 = arith.constant dense<0.000000e+00> : vector<1x64xf32>
    %240 = tpu.matmul %239, %238, %cst_94 {dimension_numbers = #tpu.dot_dimension_numbers<[1], [0], [0], [1], [0, 0, 1, 1], [], []>} : vector<1x16xf32>, vector<16x64xf32>, vector<1x64xf32> -> vector<1x64xf32>
    %241 = vector.extract_strided_slice %213 {offsets = [2, 0], sizes = [1, 16], strides = [1, 1]} : vector<8x16xf32> to vector<1x16xf32>
    %242 = vector.extract_strided_slice %215 {offsets = [2, 0], sizes = [1, 64], strides = [1, 1]} : vector<8x64xf32> to vector<1x64xf32>
    %cst_95 = arith.constant dense<0.000000e+00> : vector<16x64xf32>
    %243 = tpu.matmul %241, %242, %cst_95 {dimension_numbers = #tpu.dot_dimension_numbers<[0], [0], [1], [1], [0, 1, 1, 1], [], []>} : vector<1x16xf32>, vector<1x64xf32>, vector<16x64xf32> -> vector<16x64xf32>
    %244 = vector.extract_strided_slice %221 {offsets = [2, 0, 0], sizes = [1, 16, 64], strides = [1, 1, 1]} : vector<8x16x64xf32> to vector<1x16x64xf32>
    %245 = vector.shape_cast %244 : vector<1x16x64xf32> to vector<16x64xf32>
    %246 = arith.mulf %238, %245 : vector<16x64xf32>
    %247 = arith.addf %246, %243 : vector<16x64xf32>
    %248 = vector.extract_strided_slice %214 {offsets = [2, 0], sizes = [1, 16], strides = [1, 1]} : vector<8x16xf32> to vector<1x16xf32>
    %cst_96 = arith.constant dense<0.000000e+00> : vector<1x64xf32>
    %249 = tpu.matmul %248, %247, %cst_96 {dimension_numbers = #tpu.dot_dimension_numbers<[1], [0], [0], [1], [0, 0, 1, 1], [], []>} : vector<1x16xf32>, vector<16x64xf32>, vector<1x64xf32> -> vector<1x64xf32>
    %250 = vector.extract_strided_slice %213 {offsets = [3, 0], sizes = [1, 16], strides = [1, 1]} : vector<8x16xf32> to vector<1x16xf32>
    %251 = vector.extract_strided_slice %215 {offsets = [3, 0], sizes = [1, 64], strides = [1, 1]} : vector<8x64xf32> to vector<1x64xf32>
    %cst_97 = arith.constant dense<0.000000e+00> : vector<16x64xf32>
    %252 = tpu.matmul %250, %251, %cst_97 {dimension_numbers = #tpu.dot_dimension_numbers<[0], [0], [1], [1], [0, 1, 1, 1], [], []>} : vector<1x16xf32>, vector<1x64xf32>, vector<16x64xf32> -> vector<16x64xf32>
    %253 = vector.extract_strided_slice %221 {offsets = [3, 0, 0], sizes = [1, 16, 64], strides = [1, 1, 1]} : vector<8x16x64xf32> to vector<1x16x64xf32>
    %254 = vector.shape_cast %253 : vector<1x16x64xf32> to vector<16x64xf32>
    %255 = arith.mulf %247, %254 : vector<16x64xf32>
    %256 = arith.addf %255, %252 : vector<16x64xf32>
    %257 = vector.extract_strided_slice %214 {offsets = [3, 0], sizes = [1, 16], strides = [1, 1]} : vector<8x16xf32> to vector<1x16xf32>
    %cst_98 = arith.constant dense<0.000000e+00> : vector<1x64xf32>
    %258 = tpu.matmul %257, %256, %cst_98 {dimension_numbers = #tpu.dot_dimension_numbers<[1], [0], [0], [1], [0, 0, 1, 1], [], []>} : vector<1x16xf32>, vector<16x64xf32>, vector<1x64xf32> -> vector<1x64xf32>
    %259 = vector.extract_strided_slice %213 {offsets = [4, 0], sizes = [1, 16], strides = [1, 1]} : vector<8x16xf32> to vector<1x16xf32>
    %260 = vector.extract_strided_slice %215 {offsets = [4, 0], sizes = [1, 64], strides = [1, 1]} : vector<8x64xf32> to vector<1x64xf32>
    %cst_99 = arith.constant dense<0.000000e+00> : vector<16x64xf32>
    %261 = tpu.matmul %259, %260, %cst_99 {dimension_numbers = #tpu.dot_dimension_numbers<[0], [0], [1], [1], [0, 1, 1, 1], [], []>} : vector<1x16xf32>, vector<1x64xf32>, vector<16x64xf32> -> vector<16x64xf32>
    %262 = vector.extract_strided_slice %221 {offsets = [4, 0, 0], sizes = [1, 16, 64], strides = [1, 1, 1]} : vector<8x16x64xf32> to vector<1x16x64xf32>
    %263 = vector.shape_cast %262 : vector<1x16x64xf32> to vector<16x64xf32>
    %264 = arith.mulf %256, %263 : vector<16x64xf32>
    %265 = arith.addf %264, %261 : vector<16x64xf32>
    %266 = vector.extract_strided_slice %214 {offsets = [4, 0], sizes = [1, 16], strides = [1, 1]} : vector<8x16xf32> to vector<1x16xf32>
    %cst_100 = arith.constant dense<0.000000e+00> : vector<1x64xf32>
    %267 = tpu.matmul %266, %265, %cst_100 {dimension_numbers = #tpu.dot_dimension_numbers<[1], [0], [0], [1], [0, 0, 1, 1], [], []>} : vector<1x16xf32>, vector<16x64xf32>, vector<1x64xf32> -> vector<1x64xf32>
    %268 = vector.extract_strided_slice %213 {offsets = [5, 0], sizes = [1, 16], strides = [1, 1]} : vector<8x16xf32> to vector<1x16xf32>
    %269 = vector.extract_strided_slice %215 {offsets = [5, 0], sizes = [1, 64], strides = [1, 1]} : vector<8x64xf32> to vector<1x64xf32>
    %cst_101 = arith.constant dense<0.000000e+00> : vector<16x64xf32>
    %270 = tpu.matmul %268, %269, %cst_101 {dimension_numbers = #tpu.dot_dimension_numbers<[0], [0], [1], [1], [0, 1, 1, 1], [], []>} : vector<1x16xf32>, vector<1x64xf32>, vector<16x64xf32> -> vector<16x64xf32>
    %271 = vector.extract_strided_slice %221 {offsets = [5, 0, 0], sizes = [1, 16, 64], strides = [1, 1, 1]} : vector<8x16x64xf32> to vector<1x16x64xf32>
    %272 = vector.shape_cast %271 : vector<1x16x64xf32> to vector<16x64xf32>
    %273 = arith.mulf %265, %272 : vector<16x64xf32>
    %274 = arith.addf %273, %270 : vector<16x64xf32>
    %275 = vector.extract_strided_slice %214 {offsets = [5, 0], sizes = [1, 16], strides = [1, 1]} : vector<8x16xf32> to vector<1x16xf32>
    %cst_102 = arith.constant dense<0.000000e+00> : vector<1x64xf32>
    %276 = tpu.matmul %275, %274, %cst_102 {dimension_numbers = #tpu.dot_dimension_numbers<[1], [0], [0], [1], [0, 0, 1, 1], [], []>} : vector<1x16xf32>, vector<16x64xf32>, vector<1x64xf32> -> vector<1x64xf32>
    %277 = vector.extract_strided_slice %213 {offsets = [6, 0], sizes = [1, 16], strides = [1, 1]} : vector<8x16xf32> to vector<1x16xf32>
    %278 = vector.extract_strided_slice %215 {offsets = [6, 0], sizes = [1, 64], strides = [1, 1]} : vector<8x64xf32> to vector<1x64xf32>
    %cst_103 = arith.constant dense<0.000000e+00> : vector<16x64xf32>
    %279 = tpu.matmul %277, %278, %cst_103 {dimension_numbers = #tpu.dot_dimension_numbers<[0], [0], [1], [1], [0, 1, 1, 1], [], []>} : vector<1x16xf32>, vector<1x64xf32>, vector<16x64xf32> -> vector<16x64xf32>
    %280 = vector.extract_strided_slice %221 {offsets = [6, 0, 0], sizes = [1, 16, 64], strides = [1, 1, 1]} : vector<8x16x64xf32> to vector<1x16x64xf32>
    %281 = vector.shape_cast %280 : vector<1x16x64xf32> to vector<16x64xf32>
    %282 = arith.mulf %274, %281 : vector<16x64xf32>
    %283 = arith.addf %282, %279 : vector<16x64xf32>
    %284 = vector.extract_strided_slice %214 {offsets = [6, 0], sizes = [1, 16], strides = [1, 1]} : vector<8x16xf32> to vector<1x16xf32>
    %cst_104 = arith.constant dense<0.000000e+00> : vector<1x64xf32>
    %285 = tpu.matmul %284, %283, %cst_104 {dimension_numbers = #tpu.dot_dimension_numbers<[1], [0], [0], [1], [0, 0, 1, 1], [], []>} : vector<1x16xf32>, vector<16x64xf32>, vector<1x64xf32> -> vector<1x64xf32>
    %286 = vector.extract_strided_slice %213 {offsets = [7, 0], sizes = [1, 16], strides = [1, 1]} : vector<8x16xf32> to vector<1x16xf32>
    %287 = vector.extract_strided_slice %215 {offsets = [7, 0], sizes = [1, 64], strides = [1, 1]} : vector<8x64xf32> to vector<1x64xf32>
    %cst_105 = arith.constant dense<0.000000e+00> : vector<16x64xf32>
    %288 = tpu.matmul %286, %287, %cst_105 {dimension_numbers = #tpu.dot_dimension_numbers<[0], [0], [1], [1], [0, 1, 1, 1], [], []>} : vector<1x16xf32>, vector<1x64xf32>, vector<16x64xf32> -> vector<16x64xf32>
    %289 = vector.extract_strided_slice %221 {offsets = [7, 0, 0], sizes = [1, 16, 64], strides = [1, 1, 1]} : vector<8x16x64xf32> to vector<1x16x64xf32>
    %290 = vector.shape_cast %289 : vector<1x16x64xf32> to vector<16x64xf32>
    %291 = arith.mulf %283, %290 : vector<16x64xf32>
    %292 = arith.addf %291, %288 : vector<16x64xf32>
    %293 = vector.extract_strided_slice %214 {offsets = [7, 0], sizes = [1, 16], strides = [1, 1]} : vector<8x16xf32> to vector<1x16xf32>
    %cst_106 = arith.constant dense<0.000000e+00> : vector<1x64xf32>
    %294 = tpu.matmul %293, %292, %cst_106 {dimension_numbers = #tpu.dot_dimension_numbers<[1], [0], [0], [1], [0, 0, 1, 1], [], []>} : vector<1x16xf32>, vector<16x64xf32>, vector<1x64xf32> -> vector<1x64xf32>
    %295 = tpu.concatenate %231, %240, %249, %258, %267, %276, %285, %294 in 0 : vector<1x64xf32>, vector<1x64xf32>, vector<1x64xf32>, vector<1x64xf32>, vector<1x64xf32>, vector<1x64xf32>, vector<1x64xf32>, vector<1x64xf32> -> vector<8x64xf32>
    %296 = vector.extract_strided_slice %208 {offsets = [8, 0], sizes = [8, 64], strides = [1, 1]} : vector<16x64xf32> to vector<8x64xf32>
    %297 = vector.extract_strided_slice %209 {offsets = [8, 0], sizes = [8, 16], strides = [1, 1]} : vector<16x16xf32> to vector<8x16xf32>
    %298 = vector.extract_strided_slice %210 {offsets = [8, 0], sizes = [8, 16], strides = [1, 1]} : vector<16x16xf32> to vector<8x16xf32>
    %299 = vector.extract_strided_slice %211 {offsets = [8, 0], sizes = [8, 64], strides = [1, 1]} : vector<16x64xf32> to vector<8x64xf32>
    %300 = vector.shape_cast %296 : vector<8x64xf32> to vector<8x1x64xf32>
    %301 = vector.shape_cast %137 : vector<16x64xf32> to vector<1x16x64xf32>
    %302 = vector.broadcast %300 : vector<8x1x64xf32> to vector<8x16x64xf32>
    %303 = vector.broadcast %301 : vector<1x16x64xf32> to vector<8x16x64xf32>
    %304 = arith.mulf %302, %303 : vector<8x16x64xf32>
    %305 = math.exp %304 : vector<8x16x64xf32>
    %cst_107 = arith.constant 0.000000e+00 : f32
    %306 = vector.broadcast %cst_107 : f32 to vector<16x64xf32>
    %307 = vector.extract_strided_slice %297 {offsets = [0, 0], sizes = [1, 16], strides = [1, 1]} : vector<8x16xf32> to vector<1x16xf32>
    %308 = vector.extract_strided_slice %299 {offsets = [0, 0], sizes = [1, 64], strides = [1, 1]} : vector<8x64xf32> to vector<1x64xf32>
    %cst_108 = arith.constant dense<0.000000e+00> : vector<16x64xf32>
    %309 = tpu.matmul %307, %308, %cst_108 {dimension_numbers = #tpu.dot_dimension_numbers<[0], [0], [1], [1], [0, 1, 1, 1], [], []>} : vector<1x16xf32>, vector<1x64xf32>, vector<16x64xf32> -> vector<16x64xf32>
    %310 = vector.extract_strided_slice %305 {offsets = [0, 0, 0], sizes = [1, 16, 64], strides = [1, 1, 1]} : vector<8x16x64xf32> to vector<1x16x64xf32>
    %311 = vector.shape_cast %310 : vector<1x16x64xf32> to vector<16x64xf32>
    %312 = arith.mulf %306, %311 : vector<16x64xf32>
    %313 = arith.addf %312, %309 : vector<16x64xf32>
    %314 = vector.extract_strided_slice %298 {offsets = [0, 0], sizes = [1, 16], strides = [1, 1]} : vector<8x16xf32> to vector<1x16xf32>
    %cst_109 = arith.constant dense<0.000000e+00> : vector<1x64xf32>
    %315 = tpu.matmul %314, %313, %cst_109 {dimension_numbers = #tpu.dot_dimension_numbers<[1], [0], [0], [1], [0, 0, 1, 1], [], []>} : vector<1x16xf32>, vector<16x64xf32>, vector<1x64xf32> -> vector<1x64xf32>
    %316 = vector.extract_strided_slice %297 {offsets = [1, 0], sizes = [1, 16], strides = [1, 1]} : vector<8x16xf32> to vector<1x16xf32>
    %317 = vector.extract_strided_slice %299 {offsets = [1, 0], sizes = [1, 64], strides = [1, 1]} : vector<8x64xf32> to vector<1x64xf32>
    %cst_110 = arith.constant dense<0.000000e+00> : vector<16x64xf32>
    %318 = tpu.matmul %316, %317, %cst_110 {dimension_numbers = #tpu.dot_dimension_numbers<[0], [0], [1], [1], [0, 1, 1, 1], [], []>} : vector<1x16xf32>, vector<1x64xf32>, vector<16x64xf32> -> vector<16x64xf32>
    %319 = vector.extract_strided_slice %305 {offsets = [1, 0, 0], sizes = [1, 16, 64], strides = [1, 1, 1]} : vector<8x16x64xf32> to vector<1x16x64xf32>
    %320 = vector.shape_cast %319 : vector<1x16x64xf32> to vector<16x64xf32>
    %321 = arith.mulf %313, %320 : vector<16x64xf32>
    %322 = arith.addf %321, %318 : vector<16x64xf32>
    %323 = vector.extract_strided_slice %298 {offsets = [1, 0], sizes = [1, 16], strides = [1, 1]} : vector<8x16xf32> to vector<1x16xf32>
    %cst_111 = arith.constant dense<0.000000e+00> : vector<1x64xf32>
    %324 = tpu.matmul %323, %322, %cst_111 {dimension_numbers = #tpu.dot_dimension_numbers<[1], [0], [0], [1], [0, 0, 1, 1], [], []>} : vector<1x16xf32>, vector<16x64xf32>, vector<1x64xf32> -> vector<1x64xf32>
    %325 = vector.extract_strided_slice %297 {offsets = [2, 0], sizes = [1, 16], strides = [1, 1]} : vector<8x16xf32> to vector<1x16xf32>
    %326 = vector.extract_strided_slice %299 {offsets = [2, 0], sizes = [1, 64], strides = [1, 1]} : vector<8x64xf32> to vector<1x64xf32>
    %cst_112 = arith.constant dense<0.000000e+00> : vector<16x64xf32>
    %327 = tpu.matmul %325, %326, %cst_112 {dimension_numbers = #tpu.dot_dimension_numbers<[0], [0], [1], [1], [0, 1, 1, 1], [], []>} : vector<1x16xf32>, vector<1x64xf32>, vector<16x64xf32> -> vector<16x64xf32>
    %328 = vector.extract_strided_slice %305 {offsets = [2, 0, 0], sizes = [1, 16, 64], strides = [1, 1, 1]} : vector<8x16x64xf32> to vector<1x16x64xf32>
    %329 = vector.shape_cast %328 : vector<1x16x64xf32> to vector<16x64xf32>
    %330 = arith.mulf %322, %329 : vector<16x64xf32>
    %331 = arith.addf %330, %327 : vector<16x64xf32>
    %332 = vector.extract_strided_slice %298 {offsets = [2, 0], sizes = [1, 16], strides = [1, 1]} : vector<8x16xf32> to vector<1x16xf32>
    %cst_113 = arith.constant dense<0.000000e+00> : vector<1x64xf32>
    %333 = tpu.matmul %332, %331, %cst_113 {dimension_numbers = #tpu.dot_dimension_numbers<[1], [0], [0], [1], [0, 0, 1, 1], [], []>} : vector<1x16xf32>, vector<16x64xf32>, vector<1x64xf32> -> vector<1x64xf32>
    %334 = vector.extract_strided_slice %297 {offsets = [3, 0], sizes = [1, 16], strides = [1, 1]} : vector<8x16xf32> to vector<1x16xf32>
    %335 = vector.extract_strided_slice %299 {offsets = [3, 0], sizes = [1, 64], strides = [1, 1]} : vector<8x64xf32> to vector<1x64xf32>
    %cst_114 = arith.constant dense<0.000000e+00> : vector<16x64xf32>
    %336 = tpu.matmul %334, %335, %cst_114 {dimension_numbers = #tpu.dot_dimension_numbers<[0], [0], [1], [1], [0, 1, 1, 1], [], []>} : vector<1x16xf32>, vector<1x64xf32>, vector<16x64xf32> -> vector<16x64xf32>
    %337 = vector.extract_strided_slice %305 {offsets = [3, 0, 0], sizes = [1, 16, 64], strides = [1, 1, 1]} : vector<8x16x64xf32> to vector<1x16x64xf32>
    %338 = vector.shape_cast %337 : vector<1x16x64xf32> to vector<16x64xf32>
    %339 = arith.mulf %331, %338 : vector<16x64xf32>
    %340 = arith.addf %339, %336 : vector<16x64xf32>
    %341 = vector.extract_strided_slice %298 {offsets = [3, 0], sizes = [1, 16], strides = [1, 1]} : vector<8x16xf32> to vector<1x16xf32>
    %cst_115 = arith.constant dense<0.000000e+00> : vector<1x64xf32>
    %342 = tpu.matmul %341, %340, %cst_115 {dimension_numbers = #tpu.dot_dimension_numbers<[1], [0], [0], [1], [0, 0, 1, 1], [], []>} : vector<1x16xf32>, vector<16x64xf32>, vector<1x64xf32> -> vector<1x64xf32>
    %343 = vector.extract_strided_slice %297 {offsets = [4, 0], sizes = [1, 16], strides = [1, 1]} : vector<8x16xf32> to vector<1x16xf32>
    %344 = vector.extract_strided_slice %299 {offsets = [4, 0], sizes = [1, 64], strides = [1, 1]} : vector<8x64xf32> to vector<1x64xf32>
    %cst_116 = arith.constant dense<0.000000e+00> : vector<16x64xf32>
    %345 = tpu.matmul %343, %344, %cst_116 {dimension_numbers = #tpu.dot_dimension_numbers<[0], [0], [1], [1], [0, 1, 1, 1], [], []>} : vector<1x16xf32>, vector<1x64xf32>, vector<16x64xf32> -> vector<16x64xf32>
    %346 = vector.extract_strided_slice %305 {offsets = [4, 0, 0], sizes = [1, 16, 64], strides = [1, 1, 1]} : vector<8x16x64xf32> to vector<1x16x64xf32>
    %347 = vector.shape_cast %346 : vector<1x16x64xf32> to vector<16x64xf32>
    %348 = arith.mulf %340, %347 : vector<16x64xf32>
    %349 = arith.addf %348, %345 : vector<16x64xf32>
    %350 = vector.extract_strided_slice %298 {offsets = [4, 0], sizes = [1, 16], strides = [1, 1]} : vector<8x16xf32> to vector<1x16xf32>
    %cst_117 = arith.constant dense<0.000000e+00> : vector<1x64xf32>
    %351 = tpu.matmul %350, %349, %cst_117 {dimension_numbers = #tpu.dot_dimension_numbers<[1], [0], [0], [1], [0, 0, 1, 1], [], []>} : vector<1x16xf32>, vector<16x64xf32>, vector<1x64xf32> -> vector<1x64xf32>
    %352 = vector.extract_strided_slice %297 {offsets = [5, 0], sizes = [1, 16], strides = [1, 1]} : vector<8x16xf32> to vector<1x16xf32>
    %353 = vector.extract_strided_slice %299 {offsets = [5, 0], sizes = [1, 64], strides = [1, 1]} : vector<8x64xf32> to vector<1x64xf32>
    %cst_118 = arith.constant dense<0.000000e+00> : vector<16x64xf32>
    %354 = tpu.matmul %352, %353, %cst_118 {dimension_numbers = #tpu.dot_dimension_numbers<[0], [0], [1], [1], [0, 1, 1, 1], [], []>} : vector<1x16xf32>, vector<1x64xf32>, vector<16x64xf32> -> vector<16x64xf32>
    %355 = vector.extract_strided_slice %305 {offsets = [5, 0, 0], sizes = [1, 16, 64], strides = [1, 1, 1]} : vector<8x16x64xf32> to vector<1x16x64xf32>
    %356 = vector.shape_cast %355 : vector<1x16x64xf32> to vector<16x64xf32>
    %357 = arith.mulf %349, %356 : vector<16x64xf32>
    %358 = arith.addf %357, %354 : vector<16x64xf32>
    %359 = vector.extract_strided_slice %298 {offsets = [5, 0], sizes = [1, 16], strides = [1, 1]} : vector<8x16xf32> to vector<1x16xf32>
    %cst_119 = arith.constant dense<0.000000e+00> : vector<1x64xf32>
    %360 = tpu.matmul %359, %358, %cst_119 {dimension_numbers = #tpu.dot_dimension_numbers<[1], [0], [0], [1], [0, 0, 1, 1], [], []>} : vector<1x16xf32>, vector<16x64xf32>, vector<1x64xf32> -> vector<1x64xf32>
    %361 = vector.extract_strided_slice %297 {offsets = [6, 0], sizes = [1, 16], strides = [1, 1]} : vector<8x16xf32> to vector<1x16xf32>
    %362 = vector.extract_strided_slice %299 {offsets = [6, 0], sizes = [1, 64], strides = [1, 1]} : vector<8x64xf32> to vector<1x64xf32>
    %cst_120 = arith.constant dense<0.000000e+00> : vector<16x64xf32>
    %363 = tpu.matmul %361, %362, %cst_120 {dimension_numbers = #tpu.dot_dimension_numbers<[0], [0], [1], [1], [0, 1, 1, 1], [], []>} : vector<1x16xf32>, vector<1x64xf32>, vector<16x64xf32> -> vector<16x64xf32>
    %364 = vector.extract_strided_slice %305 {offsets = [6, 0, 0], sizes = [1, 16, 64], strides = [1, 1, 1]} : vector<8x16x64xf32> to vector<1x16x64xf32>
    %365 = vector.shape_cast %364 : vector<1x16x64xf32> to vector<16x64xf32>
    %366 = arith.mulf %358, %365 : vector<16x64xf32>
    %367 = arith.addf %366, %363 : vector<16x64xf32>
    %368 = vector.extract_strided_slice %298 {offsets = [6, 0], sizes = [1, 16], strides = [1, 1]} : vector<8x16xf32> to vector<1x16xf32>
    %cst_121 = arith.constant dense<0.000000e+00> : vector<1x64xf32>
    %369 = tpu.matmul %368, %367, %cst_121 {dimension_numbers = #tpu.dot_dimension_numbers<[1], [0], [0], [1], [0, 0, 1, 1], [], []>} : vector<1x16xf32>, vector<16x64xf32>, vector<1x64xf32> -> vector<1x64xf32>
    %370 = vector.extract_strided_slice %297 {offsets = [7, 0], sizes = [1, 16], strides = [1, 1]} : vector<8x16xf32> to vector<1x16xf32>
    %371 = vector.extract_strided_slice %299 {offsets = [7, 0], sizes = [1, 64], strides = [1, 1]} : vector<8x64xf32> to vector<1x64xf32>
    %cst_122 = arith.constant dense<0.000000e+00> : vector<16x64xf32>
    %372 = tpu.matmul %370, %371, %cst_122 {dimension_numbers = #tpu.dot_dimension_numbers<[0], [0], [1], [1], [0, 1, 1, 1], [], []>} : vector<1x16xf32>, vector<1x64xf32>, vector<16x64xf32> -> vector<16x64xf32>
    %373 = vector.extract_strided_slice %305 {offsets = [7, 0, 0], sizes = [1, 16, 64], strides = [1, 1, 1]} : vector<8x16x64xf32> to vector<1x16x64xf32>
    %374 = vector.shape_cast %373 : vector<1x16x64xf32> to vector<16x64xf32>
    %375 = arith.mulf %367, %374 : vector<16x64xf32>
    %376 = arith.addf %375, %372 : vector<16x64xf32>
    %377 = vector.extract_strided_slice %298 {offsets = [7, 0], sizes = [1, 16], strides = [1, 1]} : vector<8x16xf32> to vector<1x16xf32>
    %cst_123 = arith.constant dense<0.000000e+00> : vector<1x64xf32>
    %378 = tpu.matmul %377, %376, %cst_123 {dimension_numbers = #tpu.dot_dimension_numbers<[1], [0], [0], [1], [0, 0, 1, 1], [], []>} : vector<1x16xf32>, vector<16x64xf32>, vector<1x64xf32> -> vector<1x64xf32>
    %379 = tpu.concatenate %315, %324, %333, %342, %351, %360, %369, %378 in 0 : vector<1x64xf32>, vector<1x64xf32>, vector<1x64xf32>, vector<1x64xf32>, vector<1x64xf32>, vector<1x64xf32>, vector<1x64xf32>, vector<1x64xf32> -> vector<8x64xf32>
    %380 = tpu.concatenate %295, %379 in 0 : vector<8x64xf32>, vector<8x64xf32> -> vector<16x64xf32>
    %381 = vector.broadcast %136 : vector<1x64xf32> to vector<16x64xf32>
    %382 = arith.mulf %381, %194 : vector<16x64xf32>
    %383 = arith.addf %380, %382 : vector<16x64xf32>
    %384 = arith.negf %155 : vector<16x64xf32>
    %385 = math.exp %384 : vector<16x64xf32>
    %cst_124 = arith.constant 1.000000e+00 : f32
    %386 = vector.broadcast %cst_124 : f32 to vector<16x64xf32>
    %387 = arith.addf %386, %385 : vector<16x64xf32>
    %388 = arith.divf %386, %387 : vector<16x64xf32>
    %389 = arith.mulf %155, %388 : vector<16x64xf32>
    %390 = arith.mulf %383, %389 : vector<16x64xf32>
    %391 = arith.truncf %390 : vector<16x64xf32> to vector<16x64xbf16>
    %c0_125 = arith.constant 0 : index
    %c0_126 = arith.constant 0 : index
    %c0_127 = arith.constant 0 : index
    %392 = vector.load %arg9[%c0_125, %c0_126, %c0_127] : memref<2x64x32xbf16, #tpu.memory_space<vmem>>, vector<1x64x32xbf16>
    %393 = vector.shape_cast %392 : vector<1x64x32xbf16> to vector<64x32xbf16>
    %cst_128 = arith.constant dense<0.000000e+00> : vector<16x32xf32>
    %394 = tpu.matmul %391, %393, %cst_128 {dimension_numbers = #tpu.dot_dimension_numbers<[1], [0], [0], [1], [0, 0, 1, 1], [], []>} : vector<16x64xbf16>, vector<64x32xbf16>, vector<16x32xf32> -> vector<16x32xf32>
    %395 = arith.addf %112, %394 : vector<16x32xf32>
    %c1_129 = arith.constant 1 : index
    %c0_130 = arith.constant 0 : index
    %c0_131 = arith.constant 0 : index
    %396 = vector.load %arg6[%c1_129, %c0_130, %c0_131] : memref<2x24x64xf32, #tpu.memory_space<vmem>>, vector<1x24x64xf32>
    %397 = vector.shape_cast %396 : vector<1x24x64xf32> to vector<24x64xf32>
    %398 = vector.extract_strided_slice %397 {offsets = [0, 0], sizes = [4, 64], strides = [1, 1]} : vector<24x64xf32> to vector<4x64xf32>
    %399 = vector.extract_strided_slice %397 {offsets = [4, 0], sizes = [1, 32], strides = [1, 1]} : vector<24x64xf32> to vector<1x32xf32>
    %400 = vector.extract_strided_slice %397 {offsets = [5, 0], sizes = [1, 64], strides = [1, 1]} : vector<24x64xf32> to vector<1x64xf32>
    %401 = vector.extract_strided_slice %397 {offsets = [6, 0], sizes = [1, 64], strides = [1, 1]} : vector<24x64xf32> to vector<1x64xf32>
    %402 = vector.extract_strided_slice %397 {offsets = [7, 0], sizes = [1, 64], strides = [1, 1]} : vector<24x64xf32> to vector<1x64xf32>
    %403 = vector.extract_strided_slice %397 {offsets = [8, 0], sizes = [16, 64], strides = [1, 1]} : vector<24x64xf32> to vector<16x64xf32>
    %404 = arith.mulf %395, %395 : vector<16x32xf32>
    %cst_132 = arith.constant dense<0.000000e+00> : vector<16xf32>
    %405 = vector.multi_reduction <add>, %404, %cst_132 [1] : vector<16x32xf32> to vector<16xf32>
    %406 = vector.shape_cast %405 : vector<16xf32> to vector<16x1xf32>
    %cst_133 = arith.constant 3.200000e+01 : f32
    %407 = vector.broadcast %cst_133 : f32 to vector<16x1xf32>
    %408 = arith.divf %406, %407 : vector<16x1xf32>
    %cst_134 = arith.constant 9.99999974E-6 : f32
    %409 = vector.broadcast %cst_134 : f32 to vector<16x1xf32>
    %410 = arith.addf %408, %409 : vector<16x1xf32>
    %411 = math.rsqrt %410 : vector<16x1xf32>
    %412 = vector.broadcast %411 : vector<16x1xf32> to vector<16x32xf32>
    %413 = arith.mulf %395, %412 : vector<16x32xf32>
    %414 = vector.broadcast %399 : vector<1x32xf32> to vector<16x32xf32>
    %415 = arith.mulf %413, %414 : vector<16x32xf32>
    %416 = arith.truncf %415 : vector<16x32xf32> to vector<16x32xbf16>
    %c1_135 = arith.constant 1 : index
    %c0_136 = arith.constant 0 : index
    %c0_137 = arith.constant 0 : index
    %417 = vector.load %arg7[%c1_135, %c0_136, %c0_137] : memref<2x32x128xbf16, #tpu.memory_space<vmem>>, vector<1x32x128xbf16>
    %418 = vector.shape_cast %417 : vector<1x32x128xbf16> to vector<32x128xbf16>
    %cst_138 = arith.constant dense<0.000000e+00> : vector<16x128xf32>
    %419 = tpu.matmul %416, %418, %cst_138 {dimension_numbers = #tpu.dot_dimension_numbers<[1], [0], [0], [1], [0, 0, 1, 1], [], []>} : vector<16x32xbf16>, vector<32x128xbf16>, vector<16x128xf32> -> vector<16x128xf32>
    %420 = vector.extract_strided_slice %419 {offsets = [0, 0], sizes = [16, 64], strides = [1, 1]} : vector<16x128xf32> to vector<16x64xf32>
    %421 = vector.extract_strided_slice %419 {offsets = [0, 64], sizes = [16, 64], strides = [1, 1]} : vector<16x128xf32> to vector<16x64xf32>
    %422 = vector.shape_cast %400 : vector<1x64xf32> to vector<1x64xf32>
    %423 = vector.broadcast %422 : vector<1x64xf32> to vector<16x64xf32>
    %c3_i32_139 = arith.constant 3 : i32
    %424 = vector.broadcast %c3_i32_139 : i32 to vector<16x64xi32>
    %425 = arith.cmpi sge, %129, %424 : vector<16x64xi32>
    %c3_i32_140 = arith.constant 3 : i32
    %426 = tpu.dynamic_rotate %420 by %c3_i32_140 dim 0 : vector<16x64xf32>, i32 -> vector<16x64xf32>
    %cst_141 = arith.constant 0.000000e+00 : f32
    %427 = vector.broadcast %cst_141 : f32 to vector<16x64xf32>
    %428 = arith.select %425, %426, %427 : vector<16x64xi1>, vector<16x64xf32>
    %429 = vector.extract_strided_slice %398 {offsets = [0, 0], sizes = [1, 64], strides = [1, 1]} : vector<4x64xf32> to vector<1x64xf32>
    %430 = vector.broadcast %429 : vector<1x64xf32> to vector<16x64xf32>
    %431 = arith.mulf %428, %430 : vector<16x64xf32>
    %432 = arith.addf %423, %431 : vector<16x64xf32>
    %c2_i32_142 = arith.constant 2 : i32
    %433 = vector.broadcast %c2_i32_142 : i32 to vector<16x64xi32>
    %434 = arith.cmpi sge, %129, %433 : vector<16x64xi32>
    %c2_i32_143 = arith.constant 2 : i32
    %435 = tpu.dynamic_rotate %420 by %c2_i32_143 dim 0 : vector<16x64xf32>, i32 -> vector<16x64xf32>
    %cst_144 = arith.constant 0.000000e+00 : f32
    %436 = vector.broadcast %cst_144 : f32 to vector<16x64xf32>
    %437 = arith.select %434, %435, %436 : vector<16x64xi1>, vector<16x64xf32>
    %438 = vector.extract_strided_slice %398 {offsets = [1, 0], sizes = [1, 64], strides = [1, 1]} : vector<4x64xf32> to vector<1x64xf32>
    %439 = vector.broadcast %438 : vector<1x64xf32> to vector<16x64xf32>
    %440 = arith.mulf %437, %439 : vector<16x64xf32>
    %441 = arith.addf %432, %440 : vector<16x64xf32>
    %c1_i32_145 = arith.constant 1 : i32
    %442 = vector.broadcast %c1_i32_145 : i32 to vector<16x64xi32>
    %443 = arith.cmpi sge, %129, %442 : vector<16x64xi32>
    %c1_i32_146 = arith.constant 1 : i32
    %444 = tpu.dynamic_rotate %420 by %c1_i32_146 dim 0 : vector<16x64xf32>, i32 -> vector<16x64xf32>
    %cst_147 = arith.constant 0.000000e+00 : f32
    %445 = vector.broadcast %cst_147 : f32 to vector<16x64xf32>
    %446 = arith.select %443, %444, %445 : vector<16x64xi1>, vector<16x64xf32>
    %447 = vector.extract_strided_slice %398 {offsets = [2, 0], sizes = [1, 64], strides = [1, 1]} : vector<4x64xf32> to vector<1x64xf32>
    %448 = vector.broadcast %447 : vector<1x64xf32> to vector<16x64xf32>
    %449 = arith.mulf %446, %448 : vector<16x64xf32>
    %450 = arith.addf %441, %449 : vector<16x64xf32>
    %451 = vector.extract_strided_slice %398 {offsets = [3, 0], sizes = [1, 64], strides = [1, 1]} : vector<4x64xf32> to vector<1x64xf32>
    %452 = vector.broadcast %451 : vector<1x64xf32> to vector<16x64xf32>
    %453 = arith.mulf %420, %452 : vector<16x64xf32>
    %454 = arith.addf %450, %453 : vector<16x64xf32>
    %455 = arith.negf %454 : vector<16x64xf32>
    %456 = math.exp %455 : vector<16x64xf32>
    %cst_148 = arith.constant 1.000000e+00 : f32
    %457 = vector.broadcast %cst_148 : f32 to vector<16x64xf32>
    %458 = arith.addf %457, %456 : vector<16x64xf32>
    %459 = arith.divf %457, %458 : vector<16x64xf32>
    %460 = arith.mulf %454, %459 : vector<16x64xf32>
    %461 = arith.truncf %460 : vector<16x64xf32> to vector<16x64xbf16>
    %c1_149 = arith.constant 1 : index
    %c0_150 = arith.constant 0 : index
    %c0_151 = arith.constant 0 : index
    %462 = vector.load %arg8[%c1_149, %c0_150, %c0_151] : memref<2x64x96xbf16, #tpu.memory_space<vmem>>, vector<1x64x96xbf16>
    %463 = vector.shape_cast %462 : vector<1x64x96xbf16> to vector<64x96xbf16>
    %cst_152 = arith.constant dense<0.000000e+00> : vector<16x96xf32>
    %464 = tpu.matmul %461, %463, %cst_152 {dimension_numbers = #tpu.dot_dimension_numbers<[1], [0], [0], [1], [0, 0, 1, 1], [], []>} : vector<16x64xbf16>, vector<64x96xbf16>, vector<16x96xf32> -> vector<16x96xf32>
    %465 = vector.extract_strided_slice %464 {offsets = [0, 0], sizes = [16, 64], strides = [1, 1]} : vector<16x96xf32> to vector<16x64xf32>
    %466 = vector.broadcast %401 : vector<1x64xf32> to vector<16x64xf32>
    %467 = arith.addf %465, %466 : vector<16x64xf32>
    %cst_153 = arith.constant 2.000000e+01 : f32
    %468 = vector.broadcast %cst_153 : f32 to vector<16x64xf32>
    %469 = arith.cmpf ogt, %467, %468 : vector<16x64xf32>
    %cst_154 = arith.constant 2.000000e+01 : f32
    %470 = vector.broadcast %cst_154 : f32 to vector<16x64xf32>
    %471 = arith.minimumf %467, %470 : vector<16x64xf32>
    %472 = math.exp %471 : vector<16x64xf32>
    %473 = math.log1p %472 : vector<16x64xf32>
    %474 = arith.select %469, %467, %473 : vector<16x64xi1>, vector<16x64xf32>
    %475 = vector.extract_strided_slice %464 {offsets = [0, 64], sizes = [16, 16], strides = [1, 1]} : vector<16x96xf32> to vector<16x16xf32>
    %476 = vector.extract_strided_slice %464 {offsets = [0, 80], sizes = [16, 16], strides = [1, 1]} : vector<16x96xf32> to vector<16x16xf32>
    %477 = arith.mulf %474, %460 : vector<16x64xf32>
    %478 = vector.extract_strided_slice %474 {offsets = [0, 0], sizes = [8, 64], strides = [1, 1]} : vector<16x64xf32> to vector<8x64xf32>
    %479 = vector.extract_strided_slice %475 {offsets = [0, 0], sizes = [8, 16], strides = [1, 1]} : vector<16x16xf32> to vector<8x16xf32>
    %480 = vector.extract_strided_slice %476 {offsets = [0, 0], sizes = [8, 16], strides = [1, 1]} : vector<16x16xf32> to vector<8x16xf32>
    %481 = vector.extract_strided_slice %477 {offsets = [0, 0], sizes = [8, 64], strides = [1, 1]} : vector<16x64xf32> to vector<8x64xf32>
    %482 = vector.shape_cast %478 : vector<8x64xf32> to vector<8x1x64xf32>
    %483 = vector.shape_cast %403 : vector<16x64xf32> to vector<1x16x64xf32>
    %484 = vector.broadcast %482 : vector<8x1x64xf32> to vector<8x16x64xf32>
    %485 = vector.broadcast %483 : vector<1x16x64xf32> to vector<8x16x64xf32>
    %486 = arith.mulf %484, %485 : vector<8x16x64xf32>
    %487 = math.exp %486 : vector<8x16x64xf32>
    %cst_155 = arith.constant 0.000000e+00 : f32
    %488 = vector.broadcast %cst_155 : f32 to vector<16x64xf32>
    %489 = vector.extract_strided_slice %479 {offsets = [0, 0], sizes = [1, 16], strides = [1, 1]} : vector<8x16xf32> to vector<1x16xf32>
    %490 = vector.extract_strided_slice %481 {offsets = [0, 0], sizes = [1, 64], strides = [1, 1]} : vector<8x64xf32> to vector<1x64xf32>
    %cst_156 = arith.constant dense<0.000000e+00> : vector<16x64xf32>
    %491 = tpu.matmul %489, %490, %cst_156 {dimension_numbers = #tpu.dot_dimension_numbers<[0], [0], [1], [1], [0, 1, 1, 1], [], []>} : vector<1x16xf32>, vector<1x64xf32>, vector<16x64xf32> -> vector<16x64xf32>
    %492 = vector.extract_strided_slice %487 {offsets = [0, 0, 0], sizes = [1, 16, 64], strides = [1, 1, 1]} : vector<8x16x64xf32> to vector<1x16x64xf32>
    %493 = vector.shape_cast %492 : vector<1x16x64xf32> to vector<16x64xf32>
    %494 = arith.mulf %488, %493 : vector<16x64xf32>
    %495 = arith.addf %494, %491 : vector<16x64xf32>
    %496 = vector.extract_strided_slice %480 {offsets = [0, 0], sizes = [1, 16], strides = [1, 1]} : vector<8x16xf32> to vector<1x16xf32>
    %cst_157 = arith.constant dense<0.000000e+00> : vector<1x64xf32>
    %497 = tpu.matmul %496, %495, %cst_157 {dimension_numbers = #tpu.dot_dimension_numbers<[1], [0], [0], [1], [0, 0, 1, 1], [], []>} : vector<1x16xf32>, vector<16x64xf32>, vector<1x64xf32> -> vector<1x64xf32>
    %498 = vector.extract_strided_slice %479 {offsets = [1, 0], sizes = [1, 16], strides = [1, 1]} : vector<8x16xf32> to vector<1x16xf32>
    %499 = vector.extract_strided_slice %481 {offsets = [1, 0], sizes = [1, 64], strides = [1, 1]} : vector<8x64xf32> to vector<1x64xf32>
    %cst_158 = arith.constant dense<0.000000e+00> : vector<16x64xf32>
    %500 = tpu.matmul %498, %499, %cst_158 {dimension_numbers = #tpu.dot_dimension_numbers<[0], [0], [1], [1], [0, 1, 1, 1], [], []>} : vector<1x16xf32>, vector<1x64xf32>, vector<16x64xf32> -> vector<16x64xf32>
    %501 = vector.extract_strided_slice %487 {offsets = [1, 0, 0], sizes = [1, 16, 64], strides = [1, 1, 1]} : vector<8x16x64xf32> to vector<1x16x64xf32>
    %502 = vector.shape_cast %501 : vector<1x16x64xf32> to vector<16x64xf32>
    %503 = arith.mulf %495, %502 : vector<16x64xf32>
    %504 = arith.addf %503, %500 : vector<16x64xf32>
    %505 = vector.extract_strided_slice %480 {offsets = [1, 0], sizes = [1, 16], strides = [1, 1]} : vector<8x16xf32> to vector<1x16xf32>
    %cst_159 = arith.constant dense<0.000000e+00> : vector<1x64xf32>
    %506 = tpu.matmul %505, %504, %cst_159 {dimension_numbers = #tpu.dot_dimension_numbers<[1], [0], [0], [1], [0, 0, 1, 1], [], []>} : vector<1x16xf32>, vector<16x64xf32>, vector<1x64xf32> -> vector<1x64xf32>
    %507 = vector.extract_strided_slice %479 {offsets = [2, 0], sizes = [1, 16], strides = [1, 1]} : vector<8x16xf32> to vector<1x16xf32>
    %508 = vector.extract_strided_slice %481 {offsets = [2, 0], sizes = [1, 64], strides = [1, 1]} : vector<8x64xf32> to vector<1x64xf32>
    %cst_160 = arith.constant dense<0.000000e+00> : vector<16x64xf32>
    %509 = tpu.matmul %507, %508, %cst_160 {dimension_numbers = #tpu.dot_dimension_numbers<[0], [0], [1], [1], [0, 1, 1, 1], [], []>} : vector<1x16xf32>, vector<1x64xf32>, vector<16x64xf32> -> vector<16x64xf32>
    %510 = vector.extract_strided_slice %487 {offsets = [2, 0, 0], sizes = [1, 16, 64], strides = [1, 1, 1]} : vector<8x16x64xf32> to vector<1x16x64xf32>
    %511 = vector.shape_cast %510 : vector<1x16x64xf32> to vector<16x64xf32>
    %512 = arith.mulf %504, %511 : vector<16x64xf32>
    %513 = arith.addf %512, %509 : vector<16x64xf32>
    %514 = vector.extract_strided_slice %480 {offsets = [2, 0], sizes = [1, 16], strides = [1, 1]} : vector<8x16xf32> to vector<1x16xf32>
    %cst_161 = arith.constant dense<0.000000e+00> : vector<1x64xf32>
    %515 = tpu.matmul %514, %513, %cst_161 {dimension_numbers = #tpu.dot_dimension_numbers<[1], [0], [0], [1], [0, 0, 1, 1], [], []>} : vector<1x16xf32>, vector<16x64xf32>, vector<1x64xf32> -> vector<1x64xf32>
    %516 = vector.extract_strided_slice %479 {offsets = [3, 0], sizes = [1, 16], strides = [1, 1]} : vector<8x16xf32> to vector<1x16xf32>
    %517 = vector.extract_strided_slice %481 {offsets = [3, 0], sizes = [1, 64], strides = [1, 1]} : vector<8x64xf32> to vector<1x64xf32>
    %cst_162 = arith.constant dense<0.000000e+00> : vector<16x64xf32>
    %518 = tpu.matmul %516, %517, %cst_162 {dimension_numbers = #tpu.dot_dimension_numbers<[0], [0], [1], [1], [0, 1, 1, 1], [], []>} : vector<1x16xf32>, vector<1x64xf32>, vector<16x64xf32> -> vector<16x64xf32>
    %519 = vector.extract_strided_slice %487 {offsets = [3, 0, 0], sizes = [1, 16, 64], strides = [1, 1, 1]} : vector<8x16x64xf32> to vector<1x16x64xf32>
    %520 = vector.shape_cast %519 : vector<1x16x64xf32> to vector<16x64xf32>
    %521 = arith.mulf %513, %520 : vector<16x64xf32>
    %522 = arith.addf %521, %518 : vector<16x64xf32>
    %523 = vector.extract_strided_slice %480 {offsets = [3, 0], sizes = [1, 16], strides = [1, 1]} : vector<8x16xf32> to vector<1x16xf32>
    %cst_163 = arith.constant dense<0.000000e+00> : vector<1x64xf32>
    %524 = tpu.matmul %523, %522, %cst_163 {dimension_numbers = #tpu.dot_dimension_numbers<[1], [0], [0], [1], [0, 0, 1, 1], [], []>} : vector<1x16xf32>, vector<16x64xf32>, vector<1x64xf32> -> vector<1x64xf32>
    %525 = vector.extract_strided_slice %479 {offsets = [4, 0], sizes = [1, 16], strides = [1, 1]} : vector<8x16xf32> to vector<1x16xf32>
    %526 = vector.extract_strided_slice %481 {offsets = [4, 0], sizes = [1, 64], strides = [1, 1]} : vector<8x64xf32> to vector<1x64xf32>
    %cst_164 = arith.constant dense<0.000000e+00> : vector<16x64xf32>
    %527 = tpu.matmul %525, %526, %cst_164 {dimension_numbers = #tpu.dot_dimension_numbers<[0], [0], [1], [1], [0, 1, 1, 1], [], []>} : vector<1x16xf32>, vector<1x64xf32>, vector<16x64xf32> -> vector<16x64xf32>
    %528 = vector.extract_strided_slice %487 {offsets = [4, 0, 0], sizes = [1, 16, 64], strides = [1, 1, 1]} : vector<8x16x64xf32> to vector<1x16x64xf32>
    %529 = vector.shape_cast %528 : vector<1x16x64xf32> to vector<16x64xf32>
    %530 = arith.mulf %522, %529 : vector<16x64xf32>
    %531 = arith.addf %530, %527 : vector<16x64xf32>
    %532 = vector.extract_strided_slice %480 {offsets = [4, 0], sizes = [1, 16], strides = [1, 1]} : vector<8x16xf32> to vector<1x16xf32>
    %cst_165 = arith.constant dense<0.000000e+00> : vector<1x64xf32>
    %533 = tpu.matmul %532, %531, %cst_165 {dimension_numbers = #tpu.dot_dimension_numbers<[1], [0], [0], [1], [0, 0, 1, 1], [], []>} : vector<1x16xf32>, vector<16x64xf32>, vector<1x64xf32> -> vector<1x64xf32>
    %534 = vector.extract_strided_slice %479 {offsets = [5, 0], sizes = [1, 16], strides = [1, 1]} : vector<8x16xf32> to vector<1x16xf32>
    %535 = vector.extract_strided_slice %481 {offsets = [5, 0], sizes = [1, 64], strides = [1, 1]} : vector<8x64xf32> to vector<1x64xf32>
    %cst_166 = arith.constant dense<0.000000e+00> : vector<16x64xf32>
    %536 = tpu.matmul %534, %535, %cst_166 {dimension_numbers = #tpu.dot_dimension_numbers<[0], [0], [1], [1], [0, 1, 1, 1], [], []>} : vector<1x16xf32>, vector<1x64xf32>, vector<16x64xf32> -> vector<16x64xf32>
    %537 = vector.extract_strided_slice %487 {offsets = [5, 0, 0], sizes = [1, 16, 64], strides = [1, 1, 1]} : vector<8x16x64xf32> to vector<1x16x64xf32>
    %538 = vector.shape_cast %537 : vector<1x16x64xf32> to vector<16x64xf32>
    %539 = arith.mulf %531, %538 : vector<16x64xf32>
    %540 = arith.addf %539, %536 : vector<16x64xf32>
    %541 = vector.extract_strided_slice %480 {offsets = [5, 0], sizes = [1, 16], strides = [1, 1]} : vector<8x16xf32> to vector<1x16xf32>
    %cst_167 = arith.constant dense<0.000000e+00> : vector<1x64xf32>
    %542 = tpu.matmul %541, %540, %cst_167 {dimension_numbers = #tpu.dot_dimension_numbers<[1], [0], [0], [1], [0, 0, 1, 1], [], []>} : vector<1x16xf32>, vector<16x64xf32>, vector<1x64xf32> -> vector<1x64xf32>
    %543 = vector.extract_strided_slice %479 {offsets = [6, 0], sizes = [1, 16], strides = [1, 1]} : vector<8x16xf32> to vector<1x16xf32>
    %544 = vector.extract_strided_slice %481 {offsets = [6, 0], sizes = [1, 64], strides = [1, 1]} : vector<8x64xf32> to vector<1x64xf32>
    %cst_168 = arith.constant dense<0.000000e+00> : vector<16x64xf32>
    %545 = tpu.matmul %543, %544, %cst_168 {dimension_numbers = #tpu.dot_dimension_numbers<[0], [0], [1], [1], [0, 1, 1, 1], [], []>} : vector<1x16xf32>, vector<1x64xf32>, vector<16x64xf32> -> vector<16x64xf32>
    %546 = vector.extract_strided_slice %487 {offsets = [6, 0, 0], sizes = [1, 16, 64], strides = [1, 1, 1]} : vector<8x16x64xf32> to vector<1x16x64xf32>
    %547 = vector.shape_cast %546 : vector<1x16x64xf32> to vector<16x64xf32>
    %548 = arith.mulf %540, %547 : vector<16x64xf32>
    %549 = arith.addf %548, %545 : vector<16x64xf32>
    %550 = vector.extract_strided_slice %480 {offsets = [6, 0], sizes = [1, 16], strides = [1, 1]} : vector<8x16xf32> to vector<1x16xf32>
    %cst_169 = arith.constant dense<0.000000e+00> : vector<1x64xf32>
    %551 = tpu.matmul %550, %549, %cst_169 {dimension_numbers = #tpu.dot_dimension_numbers<[1], [0], [0], [1], [0, 0, 1, 1], [], []>} : vector<1x16xf32>, vector<16x64xf32>, vector<1x64xf32> -> vector<1x64xf32>
    %552 = vector.extract_strided_slice %479 {offsets = [7, 0], sizes = [1, 16], strides = [1, 1]} : vector<8x16xf32> to vector<1x16xf32>
    %553 = vector.extract_strided_slice %481 {offsets = [7, 0], sizes = [1, 64], strides = [1, 1]} : vector<8x64xf32> to vector<1x64xf32>
    %cst_170 = arith.constant dense<0.000000e+00> : vector<16x64xf32>
    %554 = tpu.matmul %552, %553, %cst_170 {dimension_numbers = #tpu.dot_dimension_numbers<[0], [0], [1], [1], [0, 1, 1, 1], [], []>} : vector<1x16xf32>, vector<1x64xf32>, vector<16x64xf32> -> vector<16x64xf32>
    %555 = vector.extract_strided_slice %487 {offsets = [7, 0, 0], sizes = [1, 16, 64], strides = [1, 1, 1]} : vector<8x16x64xf32> to vector<1x16x64xf32>
    %556 = vector.shape_cast %555 : vector<1x16x64xf32> to vector<16x64xf32>
    %557 = arith.mulf %549, %556 : vector<16x64xf32>
    %558 = arith.addf %557, %554 : vector<16x64xf32>
    %559 = vector.extract_strided_slice %480 {offsets = [7, 0], sizes = [1, 16], strides = [1, 1]} : vector<8x16xf32> to vector<1x16xf32>
    %cst_171 = arith.constant dense<0.000000e+00> : vector<1x64xf32>
    %560 = tpu.matmul %559, %558, %cst_171 {dimension_numbers = #tpu.dot_dimension_numbers<[1], [0], [0], [1], [0, 0, 1, 1], [], []>} : vector<1x16xf32>, vector<16x64xf32>, vector<1x64xf32> -> vector<1x64xf32>
    %561 = tpu.concatenate %497, %506, %515, %524, %533, %542, %551, %560 in 0 : vector<1x64xf32>, vector<1x64xf32>, vector<1x64xf32>, vector<1x64xf32>, vector<1x64xf32>, vector<1x64xf32>, vector<1x64xf32>, vector<1x64xf32> -> vector<8x64xf32>
    %562 = vector.extract_strided_slice %474 {offsets = [8, 0], sizes = [8, 64], strides = [1, 1]} : vector<16x64xf32> to vector<8x64xf32>
    %563 = vector.extract_strided_slice %475 {offsets = [8, 0], sizes = [8, 16], strides = [1, 1]} : vector<16x16xf32> to vector<8x16xf32>
    %564 = vector.extract_strided_slice %476 {offsets = [8, 0], sizes = [8, 16], strides = [1, 1]} : vector<16x16xf32> to vector<8x16xf32>
    %565 = vector.extract_strided_slice %477 {offsets = [8, 0], sizes = [8, 64], strides = [1, 1]} : vector<16x64xf32> to vector<8x64xf32>
    %566 = vector.shape_cast %562 : vector<8x64xf32> to vector<8x1x64xf32>
    %567 = vector.shape_cast %403 : vector<16x64xf32> to vector<1x16x64xf32>
    %568 = vector.broadcast %566 : vector<8x1x64xf32> to vector<8x16x64xf32>
    %569 = vector.broadcast %567 : vector<1x16x64xf32> to vector<8x16x64xf32>
    %570 = arith.mulf %568, %569 : vector<8x16x64xf32>
    %571 = math.exp %570 : vector<8x16x64xf32>
    %cst_172 = arith.constant 0.000000e+00 : f32
    %572 = vector.broadcast %cst_172 : f32 to vector<16x64xf32>
    %573 = vector.extract_strided_slice %563 {offsets = [0, 0], sizes = [1, 16], strides = [1, 1]} : vector<8x16xf32> to vector<1x16xf32>
    %574 = vector.extract_strided_slice %565 {offsets = [0, 0], sizes = [1, 64], strides = [1, 1]} : vector<8x64xf32> to vector<1x64xf32>
    %cst_173 = arith.constant dense<0.000000e+00> : vector<16x64xf32>
    %575 = tpu.matmul %573, %574, %cst_173 {dimension_numbers = #tpu.dot_dimension_numbers<[0], [0], [1], [1], [0, 1, 1, 1], [], []>} : vector<1x16xf32>, vector<1x64xf32>, vector<16x64xf32> -> vector<16x64xf32>
    %576 = vector.extract_strided_slice %571 {offsets = [0, 0, 0], sizes = [1, 16, 64], strides = [1, 1, 1]} : vector<8x16x64xf32> to vector<1x16x64xf32>
    %577 = vector.shape_cast %576 : vector<1x16x64xf32> to vector<16x64xf32>
    %578 = arith.mulf %572, %577 : vector<16x64xf32>
    %579 = arith.addf %578, %575 : vector<16x64xf32>
    %580 = vector.extract_strided_slice %564 {offsets = [0, 0], sizes = [1, 16], strides = [1, 1]} : vector<8x16xf32> to vector<1x16xf32>
    %cst_174 = arith.constant dense<0.000000e+00> : vector<1x64xf32>
    %581 = tpu.matmul %580, %579, %cst_174 {dimension_numbers = #tpu.dot_dimension_numbers<[1], [0], [0], [1], [0, 0, 1, 1], [], []>} : vector<1x16xf32>, vector<16x64xf32>, vector<1x64xf32> -> vector<1x64xf32>
    %582 = vector.extract_strided_slice %563 {offsets = [1, 0], sizes = [1, 16], strides = [1, 1]} : vector<8x16xf32> to vector<1x16xf32>
    %583 = vector.extract_strided_slice %565 {offsets = [1, 0], sizes = [1, 64], strides = [1, 1]} : vector<8x64xf32> to vector<1x64xf32>
    %cst_175 = arith.constant dense<0.000000e+00> : vector<16x64xf32>
    %584 = tpu.matmul %582, %583, %cst_175 {dimension_numbers = #tpu.dot_dimension_numbers<[0], [0], [1], [1], [0, 1, 1, 1], [], []>} : vector<1x16xf32>, vector<1x64xf32>, vector<16x64xf32> -> vector<16x64xf32>
    %585 = vector.extract_strided_slice %571 {offsets = [1, 0, 0], sizes = [1, 16, 64], strides = [1, 1, 1]} : vector<8x16x64xf32> to vector<1x16x64xf32>
    %586 = vector.shape_cast %585 : vector<1x16x64xf32> to vector<16x64xf32>
    %587 = arith.mulf %579, %586 : vector<16x64xf32>
    %588 = arith.addf %587, %584 : vector<16x64xf32>
    %589 = vector.extract_strided_slice %564 {offsets = [1, 0], sizes = [1, 16], strides = [1, 1]} : vector<8x16xf32> to vector<1x16xf32>
    %cst_176 = arith.constant dense<0.000000e+00> : vector<1x64xf32>
    %590 = tpu.matmul %589, %588, %cst_176 {dimension_numbers = #tpu.dot_dimension_numbers<[1], [0], [0], [1], [0, 0, 1, 1], [], []>} : vector<1x16xf32>, vector<16x64xf32>, vector<1x64xf32> -> vector<1x64xf32>
    %591 = vector.extract_strided_slice %563 {offsets = [2, 0], sizes = [1, 16], strides = [1, 1]} : vector<8x16xf32> to vector<1x16xf32>
    %592 = vector.extract_strided_slice %565 {offsets = [2, 0], sizes = [1, 64], strides = [1, 1]} : vector<8x64xf32> to vector<1x64xf32>
    %cst_177 = arith.constant dense<0.000000e+00> : vector<16x64xf32>
    %593 = tpu.matmul %591, %592, %cst_177 {dimension_numbers = #tpu.dot_dimension_numbers<[0], [0], [1], [1], [0, 1, 1, 1], [], []>} : vector<1x16xf32>, vector<1x64xf32>, vector<16x64xf32> -> vector<16x64xf32>
    %594 = vector.extract_strided_slice %571 {offsets = [2, 0, 0], sizes = [1, 16, 64], strides = [1, 1, 1]} : vector<8x16x64xf32> to vector<1x16x64xf32>
    %595 = vector.shape_cast %594 : vector<1x16x64xf32> to vector<16x64xf32>
    %596 = arith.mulf %588, %595 : vector<16x64xf32>
    %597 = arith.addf %596, %593 : vector<16x64xf32>
    %598 = vector.extract_strided_slice %564 {offsets = [2, 0], sizes = [1, 16], strides = [1, 1]} : vector<8x16xf32> to vector<1x16xf32>
    %cst_178 = arith.constant dense<0.000000e+00> : vector<1x64xf32>
    %599 = tpu.matmul %598, %597, %cst_178 {dimension_numbers = #tpu.dot_dimension_numbers<[1], [0], [0], [1], [0, 0, 1, 1], [], []>} : vector<1x16xf32>, vector<16x64xf32>, vector<1x64xf32> -> vector<1x64xf32>
    %600 = vector.extract_strided_slice %563 {offsets = [3, 0], sizes = [1, 16], strides = [1, 1]} : vector<8x16xf32> to vector<1x16xf32>
    %601 = vector.extract_strided_slice %565 {offsets = [3, 0], sizes = [1, 64], strides = [1, 1]} : vector<8x64xf32> to vector<1x64xf32>
    %cst_179 = arith.constant dense<0.000000e+00> : vector<16x64xf32>
    %602 = tpu.matmul %600, %601, %cst_179 {dimension_numbers = #tpu.dot_dimension_numbers<[0], [0], [1], [1], [0, 1, 1, 1], [], []>} : vector<1x16xf32>, vector<1x64xf32>, vector<16x64xf32> -> vector<16x64xf32>
    %603 = vector.extract_strided_slice %571 {offsets = [3, 0, 0], sizes = [1, 16, 64], strides = [1, 1, 1]} : vector<8x16x64xf32> to vector<1x16x64xf32>
    %604 = vector.shape_cast %603 : vector<1x16x64xf32> to vector<16x64xf32>
    %605 = arith.mulf %597, %604 : vector<16x64xf32>
    %606 = arith.addf %605, %602 : vector<16x64xf32>
    %607 = vector.extract_strided_slice %564 {offsets = [3, 0], sizes = [1, 16], strides = [1, 1]} : vector<8x16xf32> to vector<1x16xf32>
    %cst_180 = arith.constant dense<0.000000e+00> : vector<1x64xf32>
    %608 = tpu.matmul %607, %606, %cst_180 {dimension_numbers = #tpu.dot_dimension_numbers<[1], [0], [0], [1], [0, 0, 1, 1], [], []>} : vector<1x16xf32>, vector<16x64xf32>, vector<1x64xf32> -> vector<1x64xf32>
    %609 = vector.extract_strided_slice %563 {offsets = [4, 0], sizes = [1, 16], strides = [1, 1]} : vector<8x16xf32> to vector<1x16xf32>
    %610 = vector.extract_strided_slice %565 {offsets = [4, 0], sizes = [1, 64], strides = [1, 1]} : vector<8x64xf32> to vector<1x64xf32>
    %cst_181 = arith.constant dense<0.000000e+00> : vector<16x64xf32>
    %611 = tpu.matmul %609, %610, %cst_181 {dimension_numbers = #tpu.dot_dimension_numbers<[0], [0], [1], [1], [0, 1, 1, 1], [], []>} : vector<1x16xf32>, vector<1x64xf32>, vector<16x64xf32> -> vector<16x64xf32>
    %612 = vector.extract_strided_slice %571 {offsets = [4, 0, 0], sizes = [1, 16, 64], strides = [1, 1, 1]} : vector<8x16x64xf32> to vector<1x16x64xf32>
    %613 = vector.shape_cast %612 : vector<1x16x64xf32> to vector<16x64xf32>
    %614 = arith.mulf %606, %613 : vector<16x64xf32>
    %615 = arith.addf %614, %611 : vector<16x64xf32>
    %616 = vector.extract_strided_slice %564 {offsets = [4, 0], sizes = [1, 16], strides = [1, 1]} : vector<8x16xf32> to vector<1x16xf32>
    %cst_182 = arith.constant dense<0.000000e+00> : vector<1x64xf32>
    %617 = tpu.matmul %616, %615, %cst_182 {dimension_numbers = #tpu.dot_dimension_numbers<[1], [0], [0], [1], [0, 0, 1, 1], [], []>} : vector<1x16xf32>, vector<16x64xf32>, vector<1x64xf32> -> vector<1x64xf32>
    %618 = vector.extract_strided_slice %563 {offsets = [5, 0], sizes = [1, 16], strides = [1, 1]} : vector<8x16xf32> to vector<1x16xf32>
    %619 = vector.extract_strided_slice %565 {offsets = [5, 0], sizes = [1, 64], strides = [1, 1]} : vector<8x64xf32> to vector<1x64xf32>
    %cst_183 = arith.constant dense<0.000000e+00> : vector<16x64xf32>
    %620 = tpu.matmul %618, %619, %cst_183 {dimension_numbers = #tpu.dot_dimension_numbers<[0], [0], [1], [1], [0, 1, 1, 1], [], []>} : vector<1x16xf32>, vector<1x64xf32>, vector<16x64xf32> -> vector<16x64xf32>
    %621 = vector.extract_strided_slice %571 {offsets = [5, 0, 0], sizes = [1, 16, 64], strides = [1, 1, 1]} : vector<8x16x64xf32> to vector<1x16x64xf32>
    %622 = vector.shape_cast %621 : vector<1x16x64xf32> to vector<16x64xf32>
    %623 = arith.mulf %615, %622 : vector<16x64xf32>
    %624 = arith.addf %623, %620 : vector<16x64xf32>
    %625 = vector.extract_strided_slice %564 {offsets = [5, 0], sizes = [1, 16], strides = [1, 1]} : vector<8x16xf32> to vector<1x16xf32>
    %cst_184 = arith.constant dense<0.000000e+00> : vector<1x64xf32>
    %626 = tpu.matmul %625, %624, %cst_184 {dimension_numbers = #tpu.dot_dimension_numbers<[1], [0], [0], [1], [0, 0, 1, 1], [], []>} : vector<1x16xf32>, vector<16x64xf32>, vector<1x64xf32> -> vector<1x64xf32>
    %627 = vector.extract_strided_slice %563 {offsets = [6, 0], sizes = [1, 16], strides = [1, 1]} : vector<8x16xf32> to vector<1x16xf32>
    %628 = vector.extract_strided_slice %565 {offsets = [6, 0], sizes = [1, 64], strides = [1, 1]} : vector<8x64xf32> to vector<1x64xf32>
    %cst_185 = arith.constant dense<0.000000e+00> : vector<16x64xf32>
    %629 = tpu.matmul %627, %628, %cst_185 {dimension_numbers = #tpu.dot_dimension_numbers<[0], [0], [1], [1], [0, 1, 1, 1], [], []>} : vector<1x16xf32>, vector<1x64xf32>, vector<16x64xf32> -> vector<16x64xf32>
    %630 = vector.extract_strided_slice %571 {offsets = [6, 0, 0], sizes = [1, 16, 64], strides = [1, 1, 1]} : vector<8x16x64xf32> to vector<1x16x64xf32>
    %631 = vector.shape_cast %630 : vector<1x16x64xf32> to vector<16x64xf32>
    %632 = arith.mulf %624, %631 : vector<16x64xf32>
    %633 = arith.addf %632, %629 : vector<16x64xf32>
    %634 = vector.extract_strided_slice %564 {offsets = [6, 0], sizes = [1, 16], strides = [1, 1]} : vector<8x16xf32> to vector<1x16xf32>
    %cst_186 = arith.constant dense<0.000000e+00> : vector<1x64xf32>
    %635 = tpu.matmul %634, %633, %cst_186 {dimension_numbers = #tpu.dot_dimension_numbers<[1], [0], [0], [1], [0, 0, 1, 1], [], []>} : vector<1x16xf32>, vector<16x64xf32>, vector<1x64xf32> -> vector<1x64xf32>
    %636 = vector.extract_strided_slice %563 {offsets = [7, 0], sizes = [1, 16], strides = [1, 1]} : vector<8x16xf32> to vector<1x16xf32>
    %637 = vector.extract_strided_slice %565 {offsets = [7, 0], sizes = [1, 64], strides = [1, 1]} : vector<8x64xf32> to vector<1x64xf32>
    %cst_187 = arith.constant dense<0.000000e+00> : vector<16x64xf32>
    %638 = tpu.matmul %636, %637, %cst_187 {dimension_numbers = #tpu.dot_dimension_numbers<[0], [0], [1], [1], [0, 1, 1, 1], [], []>} : vector<1x16xf32>, vector<1x64xf32>, vector<16x64xf32> -> vector<16x64xf32>
    %639 = vector.extract_strided_slice %571 {offsets = [7, 0, 0], sizes = [1, 16, 64], strides = [1, 1, 1]} : vector<8x16x64xf32> to vector<1x16x64xf32>
    %640 = vector.shape_cast %639 : vector<1x16x64xf32> to vector<16x64xf32>
    %641 = arith.mulf %633, %640 : vector<16x64xf32>
    %642 = arith.addf %641, %638 : vector<16x64xf32>
    %643 = vector.extract_strided_slice %564 {offsets = [7, 0], sizes = [1, 16], strides = [1, 1]} : vector<8x16xf32> to vector<1x16xf32>
    %cst_188 = arith.constant dense<0.000000e+00> : vector<1x64xf32>
    %644 = tpu.matmul %643, %642, %cst_188 {dimension_numbers = #tpu.dot_dimension_numbers<[1], [0], [0], [1], [0, 0, 1, 1], [], []>} : vector<1x16xf32>, vector<16x64xf32>, vector<1x64xf32> -> vector<1x64xf32>
    %645 = tpu.concatenate %581, %590, %599, %608, %617, %626, %635, %644 in 0 : vector<1x64xf32>, vector<1x64xf32>, vector<1x64xf32>, vector<1x64xf32>, vector<1x64xf32>, vector<1x64xf32>, vector<1x64xf32>, vector<1x64xf32> -> vector<8x64xf32>
    %646 = tpu.concatenate %561, %645 in 0 : vector<8x64xf32>, vector<8x64xf32> -> vector<16x64xf32>
    %647 = vector.broadcast %402 : vector<1x64xf32> to vector<16x64xf32>
    %648 = arith.mulf %647, %460 : vector<16x64xf32>
    %649 = arith.addf %646, %648 : vector<16x64xf32>
    %650 = arith.negf %421 : vector<16x64xf32>
    %651 = math.exp %650 : vector<16x64xf32>
    %cst_189 = arith.constant 1.000000e+00 : f32
    %652 = vector.broadcast %cst_189 : f32 to vector<16x64xf32>
    %653 = arith.addf %652, %651 : vector<16x64xf32>
    %654 = arith.divf %652, %653 : vector<16x64xf32>
    %655 = arith.mulf %421, %654 : vector<16x64xf32>
    %656 = arith.mulf %649, %655 : vector<16x64xf32>
    %657 = arith.truncf %656 : vector<16x64xf32> to vector<16x64xbf16>
    %c1_190 = arith.constant 1 : index
    %c0_191 = arith.constant 0 : index
    %c0_192 = arith.constant 0 : index
    %658 = vector.load %arg9[%c1_190, %c0_191, %c0_192] : memref<2x64x32xbf16, #tpu.memory_space<vmem>>, vector<1x64x32xbf16>
    %659 = vector.shape_cast %658 : vector<1x64x32xbf16> to vector<64x32xbf16>
    %cst_193 = arith.constant dense<0.000000e+00> : vector<16x32xf32>
    %660 = tpu.matmul %657, %659, %cst_193 {dimension_numbers = #tpu.dot_dimension_numbers<[1], [0], [0], [1], [0, 0, 1, 1], [], []>} : vector<16x64xbf16>, vector<64x32xbf16>, vector<16x32xf32> -> vector<16x32xf32>
    %661 = arith.addf %395, %660 : vector<16x32xf32>
    %c1_194 = arith.constant 1 : index
    %c0_195 = arith.constant 0 : index
    %662 = vector.load %arg5[%c1_194, %c0_195] : memref<2x32xf32, #tpu.memory_space<vmem>>, vector<1x32xf32>
    %663 = arith.mulf %661, %661 : vector<16x32xf32>
    %cst_196 = arith.constant dense<0.000000e+00> : vector<16xf32>
    %664 = vector.multi_reduction <add>, %663, %cst_196 [1] : vector<16x32xf32> to vector<16xf32>
    %665 = vector.shape_cast %664 : vector<16xf32> to vector<16x1xf32>
    %cst_197 = arith.constant 3.200000e+01 : f32
    %666 = vector.broadcast %cst_197 : f32 to vector<16x1xf32>
    %667 = arith.divf %665, %666 : vector<16x1xf32>
    %cst_198 = arith.constant 9.99999974E-6 : f32
    %668 = vector.broadcast %cst_198 : f32 to vector<16x1xf32>
    %669 = arith.addf %667, %668 : vector<16x1xf32>
    %670 = math.rsqrt %669 : vector<16x1xf32>
    %671 = vector.broadcast %670 : vector<16x1xf32> to vector<16x32xf32>
    %672 = arith.mulf %661, %671 : vector<16x32xf32>
    %673 = vector.broadcast %662 : vector<1x32xf32> to vector<16x32xf32>
    %674 = arith.mulf %672, %673 : vector<16x32xf32>
    %675 = arith.truncf %674 : vector<16x32xf32> to vector<16x32xbf16>
    %c0_199 = arith.constant 0 : index
    %c0_200 = arith.constant 0 : index
    %676 = vector.load %arg10[%c0_199, %c0_200] : memref<32x128xbf16, #tpu.memory_space<vmem>>, vector<32x128xbf16>
    %cst_201 = arith.constant dense<0.000000e+00> : vector<16x128xf32>
    %677 = tpu.matmul %675, %676, %cst_201 {dimension_numbers = #tpu.dot_dimension_numbers<[1], [0], [0], [1], [0, 0, 1, 1], [], []>} : vector<16x32xbf16>, vector<32x128xbf16>, vector<16x128xf32> -> vector<16x128xf32>
    %678 = vector.extract_strided_slice %677 {offsets = [0, 0], sizes = [8, 128], strides = [1, 1]} : vector<16x128xf32> to vector<8x128xf32>
    %c0_202 = arith.constant 0 : index
    %c0_203 = arith.constant 0 : index
    %c0_204 = arith.constant 0 : index
    %679 = vector.load %arg11[%c0_202, %c0_203, %c0_204] : memref<2x8x128xf32, #tpu.memory_space<vmem>>, vector<1x8x128xf32>
    %680 = vector.shape_cast %679 : vector<1x8x128xf32> to vector<8x128xf32>
    %681 = vector.shape_cast %678 : vector<8x128xf32> to vector<1x8x128xf32>
    tpu.vector_store %arg11[%c0_202, %c0_203, %c0_204], %681 {strides = array<i32>} : memref<2x8x128xf32, #tpu.memory_space<vmem>>, vector<1x8x128xf32>,
    %682 = vector.extract_strided_slice %677 {offsets = [8, 0], sizes = [8, 128], strides = [1, 1]} : vector<16x128xf32> to vector<8x128xf32>
    %c1_205 = arith.constant 1 : index
    %c0_206 = arith.constant 0 : index
    %c0_207 = arith.constant 0 : index
    %683 = vector.load %arg11[%c1_205, %c0_206, %c0_207] : memref<2x8x128xf32, #tpu.memory_space<vmem>>, vector<1x8x128xf32>
    %684 = vector.shape_cast %683 : vector<1x8x128xf32> to vector<8x128xf32>
    %685 = vector.shape_cast %682 : vector<8x128xf32> to vector<1x8x128xf32>
    tpu.vector_store %arg11[%c1_205, %c0_206, %c0_207], %685 {strides = array<i32>} : memref<2x8x128xf32, #tpu.memory_space<vmem>>, vector<1x8x128xf32>,
    return
  }
  func.func @transform_0(%arg0: i32, %arg1: memref<2x9xi32, #tpu.memory_space<smem>>) -> (i32, i32) {
    %c0_i32 = arith.constant 0 : i32
    %c0_i32_0 = arith.constant 0 : i32
    %c0_i32_1 = arith.constant 0 : i32
    return %c0_i32, %c0_i32_0 : i32, i32
  }
  func.func @transform_1(%arg0: i32, %arg1: memref<2x9xi32, #tpu.memory_space<smem>>) -> (i32, i32, i32) {
    %c0_i32 = arith.constant 0 : i32
    %c0_i32_0 = arith.constant 0 : i32
    %c0_i32_1 = arith.constant 0 : i32
    return %arg0, %c0_i32, %c0_i32_0 : i32, i32, i32
  }
  func.func @transform_2(%arg0: i32, %arg1: memref<2x9xi32, #tpu.memory_space<smem>>) -> (i32, i32) {
    %c0_i32 = arith.constant 0 : i32
    %c0_i32_0 = arith.constant 0 : i32
    %c0_i32_1 = arith.constant 0 : i32
    return %c0_i32, %c0_i32_0 : i32, i32
  }
  func.func @transform_3(%arg0: i32, %arg1: memref<2x9xi32, #tpu.memory_space<smem>>) -> (i32, i32) {
    %c0_i32 = arith.constant 0 : i32
    %c0_i32_0 = arith.constant 0 : i32
    %c0_i32_1 = arith.constant 0 : i32
    return %c0_i32, %c0_i32_0 : i32, i32
  }
  func.func @transform_4(%arg0: i32, %arg1: memref<2x9xi32, #tpu.memory_space<smem>>) -> (i32, i32, i32) {
    %c0_i32 = arith.constant 0 : i32
    %c0_i32_0 = arith.constant 0 : i32
    %c0_i32_1 = arith.constant 0 : i32
    %c0_i32_2 = arith.constant 0 : i32
    return %c0_i32, %c0_i32_0, %c0_i32_1 : i32, i32, i32
  }
  func.func @transform_5(%arg0: i32, %arg1: memref<2x9xi32, #tpu.memory_space<smem>>) -> (i32, i32, i32) {
    %c0_i32 = arith.constant 0 : i32
    %c0_i32_0 = arith.constant 0 : i32
    %c0_i32_1 = arith.constant 0 : i32
    %c0_i32_2 = arith.constant 0 : i32
    return %c0_i32, %c0_i32_0, %c0_i32_1 : i32, i32, i32
  }
  func.func @transform_6(%arg0: i32, %arg1: memref<2x9xi32, #tpu.memory_space<smem>>) -> (i32, i32, i32) {
    %c0_i32 = arith.constant 0 : i32
    %c0_i32_0 = arith.constant 0 : i32
    %c0_i32_1 = arith.constant 0 : i32
    %c0_i32_2 = arith.constant 0 : i32
    return %c0_i32, %c0_i32_0, %c0_i32_1 : i32, i32, i32
  }
  func.func @transform_7(%arg0: i32, %arg1: memref<2x9xi32, #tpu.memory_space<smem>>) -> (i32, i32, i32) {
    %c0_i32 = arith.constant 0 : i32
    %c0_i32_0 = arith.constant 0 : i32
    %c0_i32_1 = arith.constant 0 : i32
    %c0_i32_2 = arith.constant 0 : i32
    return %c0_i32, %c0_i32_0, %c0_i32_1 : i32, i32, i32
  }
  func.func @transform_8(%arg0: i32, %arg1: memref<2x9xi32, #tpu.memory_space<smem>>) -> (i32, i32) {
    %c0_i32 = arith.constant 0 : i32
    %c0_i32_0 = arith.constant 0 : i32
    %c0_i32_1 = arith.constant 0 : i32
    return %c0_i32, %c0_i32_0 : i32, i32
  }
  func.func @transform_9(%arg0: i32, %arg1: memref<2x9xi32, #tpu.memory_space<smem>>) -> (i32, i32, i32) {
    %c0_i32 = arith.constant 0 : i32
    %c0_i32_0 = arith.constant 0 : i32
    %c0_i32_1 = arith.constant 0 : i32
    return %arg0, %c0_i32, %c0_i32_0 : i32, i32, i32
  }
}

</mosaic_0001>

<llo_original>
// kernel: aim_forward.1
$region0: #{aim_forward.1}
  #allocation0 [shape = 'u32[]', space=smem, size = 0x4, offset = 0x4, fixed_abs, tag = 'smem constant byte address 0x4 - core index']
  #allocation1 [shape = 'u32[72,128]{1,0:T(1,128)}', space=vmem, size = 0x9000, scoped, tag = 'internal scratch']
  #allocation2 [shape = 's32[1]{0}', space=sflag, size = 0x4, scoped, tag = 'scoped memory for aim_forward.1']
  #allocation3 [shape = 'u8[1024]{0}', space=smem, size = 0x400, scoped, tag = 'prefetched SMEM operand 0']
  %s0 = inlined_call_operand.vmem [shape: s32[2,9], index: 0, kind: input, shape index: {}]
  %s1 = inlined_call_operand.hbm [shape: f32[128,32], index: 1, kind: input, shape index: {}]
  %s2 = inlined_call_operand.vmem [shape: f32[2,1,512], index: 2, kind: input, shape index: {}]
  %s3 = inlined_call_operand.hbm [shape: bf16[512,32], index: 3, kind: input, shape index: {}]
  %s4 = inlined_call_operand.vmem [shape: f32[2,32], index: 4, kind: input, shape index: {}]
  %s5 = inlined_call_operand.hbm [shape: f32[2,24,64], index: 5, kind: input, shape index: {}]
  %s6 = inlined_call_operand.hbm [shape: bf16[2,32,128], index: 6, kind: input, shape index: {}]
  %s7 = inlined_call_operand.hbm [shape: bf16[2,64,96], index: 7, kind: input, shape index: {}]
  %s8 = inlined_call_operand.hbm [shape: bf16[2,64,32], index: 8, kind: input, shape index: {}]
  %s9 = inlined_call_operand.vmem [shape: bf16[32,128], index: 9, kind: input, shape index: {}]
  %s10 = inlined_call_operand.hbm [shape: f32[2,8,128], index: 10, kind: output, shape index: {}]
  %s11 = sld [smem:[#allocation0]]
  $region70: #{aim_forward.1} parent=0
    _
  %s13 = ssub.s32 1, %s11
  %s14 = scalar_select 0, %s13, %s11
  %s16 = sshll.u32 %s0, 4
  %s17 = int_to_ptr.vmem [resolvable:$true] %s16
  %19 = dma.vmem_to_smem %s17, 32, [#allocation3], [#allocation2]
  %21 = dma.done [#allocation2], 32
  %22 = sfence
  $region1: #{aim_forward.1} parent=0
    #allocation4 [shape = 'u8[65536]{0}', space=vmem, size = 0x10000, scoped, tag = 'input window, operand 1, single buffered']
    #allocation5 [shape = 's32[1]{0}', space=sflag, size = 0x4, scoped, tag = 'scoped memory for aim_forward.1']
    #allocation6 [shape = 's32[1]{0}', space=sflag, size = 0x4, scoped, tag = 'scoped memory for aim_forward.1']
    #allocation7 [shape = 'u8[131072]{0}', space=vmem, size = 0x20000, scoped, tag = 'input window, operand 3, single buffered']
    #allocation8 [shape = 's32[1]{0}', space=sflag, size = 0x4, scoped, tag = 'scoped memory for aim_forward.1']
    #allocation9 [shape = 'u8[24576]{0}', space=vmem, size = 0x6000, scoped, tag = 'input window, operand 5, single buffered']
    #allocation10 [shape = 'u8[16384]{0}', space=vmem, size = 0x4000, scoped, tag = 'input window, operand 6, single buffered']
    #allocation11 [shape = 's32[1]{0}', space=sflag, size = 0x4, scoped, tag = 'scoped memory for aim_forward.1']
    #allocation12 [shape = 'u8[32768]{0}', space=vmem, size = 0x8000, scoped, tag = 'input window, operand 7, single buffered']
    #allocation13 [shape = 'u8[32768]{0}', space=vmem, size = 0x8000, scoped, tag = 'input window, operand 8, single buffered']
    #allocation14 [shape = 's32[1]{0}', space=sflag, size = 0x4, scoped, tag = 'scoped memory for aim_forward.1']
    #allocation15 [shape = 'u8[8192]{0}', space=vmem, size = 0x2000, scoped, tag = 'output window, operand 0, single buffered']
    %23 = vsyncpa [#allocation5], 0
    %24 = vsyncpa [#allocation8], 0
    %25 = vsyncpa [#allocation11], 0
    %26 = vsyncpa [#allocation14], 0
    %27 = vsyncpa [#allocation6], 0
    // Predicated region
    $region2: #{aim_forward.1} parent=1 // pred_check
      _
    $region3: #{aim_forward.1} parent=1 // pred_check_branch
      %29 = sbr.rel (0) target = $region5
    $region4: #{aim_forward.1} parent=1 // pred_region
      %31 = vsyncadd [#allocation5], 0
      %s32 = sshll.u32 %s1, 4
      %s33 = int_to_ptr.hbm [resolvable:$true] %s32
      %s34 = sshll.u32 [#allocation4], 4
      %s35 = int_to_ptr.vmem [resolvable:$true] %s34
      %40 = dma.hbm_to_vmem [thread:$0]  %s33, 2048, %s35, [#allocation5], 128, 128, 8
    $region5: #{aim_forward.1} parent=1 // pred_fallthru
      _
    // Predicated region
    $region6: #{aim_forward.1} parent=1 // pred_check
      _
    $region7: #{aim_forward.1} parent=1 // pred_check_branch
      %42 = sbr.rel (0) target = $region9
    $region8: #{aim_forward.1} parent=1 // pred_region
      _
    $region9: #{aim_forward.1} parent=1 // pred_fallthru
      _
    // Predicated region
    $region10: #{aim_forward.1} parent=1 // pred_check
      _
    $region11: #{aim_forward.1} parent=1 // pred_check_branch
      %44 = sbr.rel (0) target = $region13
    $region12: #{aim_forward.1} parent=1 // pred_region
      %46 = vsyncadd [#allocation8], 0
      %s47 = sshll.u32 %s3, 4
      %s48 = int_to_ptr.hbm [resolvable:$true] %s47
      %s49 = sshll.u32 [#allocation7], 4
      %s50 = int_to_ptr.vmem [resolvable:$true] %s49
      %55 = dma.hbm_to_vmem [thread:$0]  %s48, 4096, %s50, [#allocation8], 64, 64, 4
    $region13: #{aim_forward.1} parent=1 // pred_fallthru
      _
    // Predicated region
    $region14: #{aim_forward.1} parent=1 // pred_check
      _
    $region15: #{aim_forward.1} parent=1 // pred_check_branch
      %57 = sbr.rel (0) target = $region17
    $region16: #{aim_forward.1} parent=1 // pred_region
      _
    $region17: #{aim_forward.1} parent=1 // pred_fallthru
      _
    // Predicated region
    $region18: #{aim_forward.1} parent=1 // pred_check
      _
    $region19: #{aim_forward.1} parent=1 // pred_check_branch
      %59 = sbr.rel (0) target = $region21
    $region20: #{aim_forward.1} parent=1 // pred_region
      %61 = vsyncadd [#allocation8], 0
      %s62 = sshll.u32 %s5, 4
      %s63 = int_to_ptr.hbm [resolvable:$true] %s62
      %s64 = sshll.u32 [#allocation9], 4
      %s65 = int_to_ptr.vmem [resolvable:$true] %s64
      %70 = dma.hbm_to_vmem [thread:$0]  %s63, 768, %s65, [#allocation8], 128, 128, 8
    $region21: #{aim_forward.1} parent=1 // pred_fallthru
      _
    // Predicated region
    $region22: #{aim_forward.1} parent=1 // pred_check
      _
    $region23: #{aim_forward.1} parent=1 // pred_check_branch
      %72 = sbr.rel (0) target = $region25
    $region24: #{aim_forward.1} parent=1 // pred_region
      %74 = vsyncadd [#allocation11], 0
      %s75 = sshll.u32 %s6, 4
      %s76 = int_to_ptr.hbm [resolvable:$true] %s75
      %s77 = sshll.u32 [#allocation10], 4
      %s78 = int_to_ptr.vmem [resolvable:$true] %s77
      %83 = dma.hbm_to_vmem [thread:$0]  %s76, 512, %s78, [#allocation11], 64, 64, 4
    $region25: #{aim_forward.1} parent=1 // pred_fallthru
      _
    // Predicated region
    $region26: #{aim_forward.1} parent=1 // pred_check
      _
    $region27: #{aim_forward.1} parent=1 // pred_check_branch
      %85 = sbr.rel (0) target = $region29
    $region28: #{aim_forward.1} parent=1 // pred_region
      %87 = vsyncadd [#allocation11], 0
      %s88 = sshll.u32 %s7, 4
      %s89 = int_to_ptr.hbm [resolvable:$true] %s88
      %s90 = sshll.u32 [#allocation12], 4
      %s91 = int_to_ptr.vmem [resolvable:$true] %s90
      %96 = dma.hbm_to_vmem [thread:$0]  %s89, 1024, %s91, [#allocation11], 64, 64, 4
    $region29: #{aim_forward.1} parent=1 // pred_fallthru
      _
    // Predicated region
    $region30: #{aim_forward.1} parent=1 // pred_check
      _
    $region31: #{aim_forward.1} parent=1 // pred_check_branch
      %98 = sbr.rel (0) target = $region33
    $region32: #{aim_forward.1} parent=1 // pred_region
      %100 = vsyncadd [#allocation14], 0
      %s101 = sshll.u32 %s8, 4
      %s102 = int_to_ptr.hbm [resolvable:$true] %s101
      %s103 = sshll.u32 [#allocation13], 4
      %s104 = int_to_ptr.vmem [resolvable:$true] %s103
      %109 = dma.hbm_to_vmem [thread:$0]  %s102, 1024, %s104, [#allocation14], 64, 64, 4
    $region33: #{aim_forward.1} parent=1 // pred_fallthru
      _
    // Predicated region
    $region34: #{aim_forward.1} parent=1 // pred_check
      _
    $region35: #{aim_forward.1} parent=1 // pred_check_branch
      %111 = sbr.rel (0) target = $region37
    $region36: #{aim_forward.1} parent=1 // pred_region
      _
    $region37: #{aim_forward.1} parent=1 // pred_fallthru
      _
    // Predicated region
    $region38: #{aim_forward.1} parent=1 // pred_check
      _
    $region39: #{aim_forward.1} parent=1 // pred_check_branch
      %113 = sbr.rel (0) target = $region41
    $region40: #{aim_forward.1} parent=1 // pred_region
      %115 = dma.done [#allocation5], 2048
    $region41: #{aim_forward.1} parent=1 // pred_fallthru
      _
    // Predicated region
    $region42: #{aim_forward.1} parent=1 // pred_check
      _
    $region43: #{aim_forward.1} parent=1 // pred_check_branch
      %117 = sbr.rel (0) target = $region45
    $region44: #{aim_forward.1} parent=1 // pred_region
      %119 = dma.done [#allocation8], 4096
    $region45: #{aim_forward.1} parent=1 // pred_fallthru
      _
    // Predicated region
    $region46: #{aim_forward.1} parent=1 // pred_check
      _
    $region47: #{aim_forward.1} parent=1 // pred_check_branch
      %121 = sbr.rel (0) target = $region49
    $region48: #{aim_forward.1} parent=1 // pred_region
      %123 = dma.done [#allocation8], 768
    $region49: #{aim_forward.1} parent=1 // pred_fallthru
      _
    // Predicated region
    $region50: #{aim_forward.1} parent=1 // pred_check
      _
    $region51: #{aim_forward.1} parent=1 // pred_check_branch
      %125 = sbr.rel (0) target = $region53
    $region52: #{aim_forward.1} parent=1 // pred_region
      %127 = dma.done [#allocation11], 512
    $region53: #{aim_forward.1} parent=1 // pred_fallthru
      _
    // Predicated region
    $region54: #{aim_forward.1} parent=1 // pred_check
      _
    $region55: #{aim_forward.1} parent=1 // pred_check_branch
      %129 = sbr.rel (0) target = $region57
    $region56: #{aim_forward.1} parent=1 // pred_region
      %131 = dma.done [#allocation11], 1024
    $region57: #{aim_forward.1} parent=1 // pred_fallthru
      _
    // Predicated region
    $region58: #{aim_forward.1} parent=1 // pred_check
      _
    $region59: #{aim_forward.1} parent=1 // pred_check_branch
      %133 = sbr.rel (0) target = $region61
    $region60: #{aim_forward.1} parent=1 // pred_region
      %135 = dma.done [#allocation14], 1024
    $region61: #{aim_forward.1} parent=1 // pred_fallthru
      _
    %s137 = smul.u32 0, 2
    %s138 = smul.u32 %s137, 128
    %s139 = sld [smem:[#allocation3 + %s138]]
    %s140 = scalar_lea.vmem [#allocation4], %s139
    %v141 = vld [vmem:[%s140] sm:$0x1]
    %s142 = sadd.s32 %s138, 1
    %s143 = sld [smem:[#allocation3 + %s142]]
    %s144 = scalar_lea.vmem [#allocation4], %s143
    %v145 = vld [vmem:[%s144] sm:$0x1]
    %s146 = sadd.s32 %s138, 2
    %s147 = sld [smem:[#allocation3 + %s146]]
    %s148 = scalar_lea.vmem [#allocation4], %s147
    %v149 = vld [vmem:[%s148] sm:$0x1]
    %s150 = sadd.s32 %s138, 3
    %s151 = sld [smem:[#allocation3 + %s150]]
    %s152 = scalar_lea.vmem [#allocation4], %s151
    %v153 = vld [vmem:[%s152] sm:$0x1]
    %s154 = sadd.s32 %s138, 4
    %s155 = sld [smem:[#allocation3 + %s154]]
    %s156 = scalar_lea.vmem [#allocation4], %s155
    %v157 = vld [vmem:[%s156] sm:$0x1]
    %s158 = sadd.s32 %s138, 5
    %s159 = sld [smem:[#allocation3 + %s158]]
    %s160 = scalar_lea.vmem [#allocation4], %s159
    %v161 = vld [vmem:[%s160] sm:$0x1]
    %s162 = sadd.s32 %s138, 6
    %s163 = sld [smem:[#allocation3 + %s162]]
    %s164 = scalar_lea.vmem [#allocation4], %s163
    %v165 = vld [vmem:[%s164] sm:$0x1]
    %s166 = sadd.s32 %s138, 7
    %s167 = sld [smem:[#allocation3 + %s166]]
    %s168 = scalar_lea.vmem [#allocation4], %s167
    %v169 = vld [vmem:[%s168] sm:$0x1]
    %s170 = sadd.s32 %s137, 1
    %s171 = smul.u32 %s170, 128
    %s172 = sld [smem:[#allocation3 + %s171]]
    %s173 = scalar_lea.vmem [#allocation4], %s172
    %v174 = vld [vmem:[%s173] sm:$0x1]
    %s175 = sadd.s32 %s171, 1
    %s176 = sld [smem:[#allocation3 + %s175]]
    %s177 = scalar_lea.vmem [#allocation4], %s176
    %v178 = vld [vmem:[%s177] sm:$0x1]
    %s179 = sadd.s32 %s171, 2
    %s180 = sld [smem:[#allocation3 + %s179]]
    %s181 = scalar_lea.vmem [#allocation4], %s180
    %v182 = vld [vmem:[%s181] sm:$0x1]
    %s183 = sadd.s32 %s171, 3
    %s184 = sld [smem:[#allocation3 + %s183]]
    %s185 = scalar_lea.vmem [#allocation4], %s184
    %v186 = vld [vmem:[%s185] sm:$0x1]
    %s187 = sadd.s32 %s171, 4
    %s188 = sld [smem:[#allocation3 + %s187]]
    %s189 = scalar_lea.vmem [#allocation4], %s188
    %v190 = vld [vmem:[%s189] sm:$0x1]
    %s191 = sadd.s32 %s171, 5
    %s192 = sld [smem:[#allocation3 + %s191]]
    %s193 = scalar_lea.vmem [#allocation4], %s192
    %v194 = vld [vmem:[%s193] sm:$0x1]
    %s195 = sadd.s32 %s171, 6
    %s196 = sld [smem:[#allocation3 + %s195]]
    %s197 = scalar_lea.vmem [#allocation4], %s196
    %v198 = vld [vmem:[%s197] sm:$0x1]
    %s199 = sadd.s32 %s171, 7
    %s200 = sld [smem:[#allocation3 + %s199]]
    %s201 = scalar_lea.vmem [#allocation4], %s200
    %v202 = vld [vmem:[%s201] sm:$0x1]
    %v204 = vrot.slane %v145, 7
    %v207 = vrot.slane %v149, 6
    %v210 = vrot.slane %v153, 5
    %v213 = vrot.slane %v157, 4
    %v216 = vrot.slane %v161, 3
    %v219 = vrot.slane %v165, 2
    %v222 = vrot.slane %v169, 1
    %v225 = vrot.slane %v178, 7
    %v228 = vrot.slane %v182, 6
    %v231 = vrot.slane %v186, 5
    %v234 = vrot.slane %v190, 4
    %v237 = vrot.slane %v194, 3
    %v240 = vrot.slane %v198, 2
    %v243 = vrot.slane %v202, 1
    %vm245 = vcmask 1040384
    %v246 = vsel %vm245, %v141, %v204
    %vm247 = vcmask 1041408
    %v248 = vsel %vm247, %v246, %v207
    %vm249 = vcmask 1042432
    %v250 = vsel %vm249, %v248, %v210
    %vm251 = vcmask 1043456
    %v252 = vsel %vm251, %v250, %v213
    %vm253 = vcmask 1044480
    %v254 = vsel %vm253, %v252, %v216
    %vm255 = vcmask 1045504
    %v256 = vsel %vm255, %v254, %v219
    %vm257 = vcmask 1046528
    %v258 = vsel %vm257, %v256, %v222
    %v259 = vsel %vm245, %v174, %v225
    %v260 = vsel %vm247, %v259, %v228
    %v261 = vsel %vm249, %v260, %v231
    %v262 = vsel %vm251, %v261, %v234
    %v263 = vsel %vm253, %v262, %v237
    %v264 = vsel %vm255, %v263, %v240
    %v265 = vsel %vm257, %v264, %v243
    %v266 = vld [vmem:[%s2] sm:$0xf]
    %v267 = vld [vmem:[%s2 + $0x4] sm:$0xf]
    %v270 = vperm.slane %v266, 0
    %v271 = vperm.slane %v266, 1
    %v272 = vperm.slane %v266, 2
    %v273 = vperm.slane %v266, 3
    %v274 = vperm.slane %v267, 0
    %v275 = vperm.slane %v267, 1
    %v276 = vperm.slane %v267, 2
    %v277 = vperm.slane %v267, 3
    %v286 = vpack.c.bf16 %v270, %v270
    %v287 = vpack.c.bf16 %v271, %v271
    %v288 = vpack.c.bf16 %v272, %v272
    %v289 = vpack.c.bf16 %v273, %v273
    %v290 = vpack.c.bf16 %v274, %v274
    %v291 = vpack.c.bf16 %v275, %v275
    %v292 = vpack.c.bf16 %v276, %v276
    %v293 = vpack.c.bf16 %v277, %v277
    %v294 = vld [vmem:[#allocation7] sm:$0xf]
    %v295 = vld [vmem:[#allocation7 + $0x4] sm:$0xf]
    %v296 = vld [vmem:[#allocation7 + $0x8] sm:$0xf]
    %v297 = vld [vmem:[#allocation7 + $0xc] sm:$0xf]
    %v298 = vld [vmem:[#allocation7 + $0x10] sm:$0xf]
    %v299 = vld [vmem:[#allocation7 + $0x14] sm:$0xf]
    %v300 = vld [vmem:[#allocation7 + $0x18] sm:$0xf]
    %v301 = vld [vmem:[#allocation7 + $0x1c] sm:$0xf]
    %v302 = vld [vmem:[#allocation7 + $0x20] sm:$0xf]
    %v303 = vld [vmem:[#allocation7 + $0x24] sm:$0xf]
    %v304 = vld [vmem:[#allocation7 + $0x28] sm:$0xf]
    %v305 = vld [vmem:[#allocation7 + $0x2c] sm:$0xf]
    %v306 = vld [vmem:[#allocation7 + $0x30] sm:$0xf]
    %v307 = vld [vmem:[#allocation7 + $0x34] sm:$0xf]
    %v308 = vld [vmem:[#allocation7 + $0x38] sm:$0xf]
    %v309 = vld [vmem:[#allocation7 + $0x3c] sm:$0xf]
    %v310 = vld [vmem:[#allocation7 + $0x40] sm:$0xf]
    %v311 = vld [vmem:[#allocation7 + $0x44] sm:$0xf]
    %v312 = vld [vmem:[#allocation7 + $0x48] sm:$0xf]
    %v313 = vld [vmem:[#allocation7 + $0x4c] sm:$0xf]
    %v314 = vld [vmem:[#allocation7 + $0x50] sm:$0xf]
    %v315 = vld [vmem:[#allocation7 + $0x54] sm:$0xf]
    %v316 = vld [vmem:[#allocation7 + $0x58] sm:$0xf]
    %v317 = vld [vmem:[#allocation7 + $0x5c] sm:$0xf]
    %v318 = vld [vmem:[#allocation7 + $0x60] sm:$0xf]
    %v319 = vld [vmem:[#allocation7 + $0x64] sm:$0xf]
    %v320 = vld [vmem:[#allocation7 + $0x68] sm:$0xf]
    %v321 = vld [vmem:[#allocation7 + $0x6c] sm:$0xf]
    %v322 = vld [vmem:[#allocation7 + $0x70] sm:$0xf]
    %v323 = vld [vmem:[#allocation7 + $0x74] sm:$0xf]
    %v324 = vld [vmem:[#allocation7 + $0x78] sm:$0xf]
    %v325 = vld [vmem:[#allocation7 + $0x7c] sm:$0xf]
    %v326 = vld [vmem:[#allocation7 + $0x80] sm:$0xf]
    %v327 = vld [vmem:[#allocation7 + $0x84] sm:$0xf]
    %v328 = vld [vmem:[#allocation7 + $0x88] sm:$0xf]
    %v329 = vld [vmem:[#allocation7 + $0x8c] sm:$0xf]
    %v330 = vld [vmem:[#allocation7 + $0x90] sm:$0xf]
    %v331 = vld [vmem:[#allocation7 + $0x94] sm:$0xf]
    %v332 = vld [vmem:[#allocation7 + $0x98] sm:$0xf]
    %v333 = vld [vmem:[#allocation7 + $0x9c] sm:$0xf]
    %v334 = vld [vmem:[#allocation7 + $0xa0] sm:$0xf]
    %v335 = vld [vmem:[#allocation7 + $0xa4] sm:$0xf]
    %v336 = vld [vmem:[#allocation7 + $0xa8] sm:$0xf]
    %v337 = vld [vmem:[#allocation7 + $0xac] sm:$0xf]
    %v338 = vld [vmem:[#allocation7 + $0xb0] sm:$0xf]
    %v339 = vld [vmem:[#allocation7 + $0xb4] sm:$0xf]
    %v340 = vld [vmem:[#allocation7 + $0xb8] sm:$0xf]
    %v341 = vld [vmem:[#allocation7 + $0xbc] sm:$0xf]
    %v342 = vld [vmem:[#allocation7 + $0xc0] sm:$0xf]
    %v343 = vld [vmem:[#allocation7 + $0xc4] sm:$0xf]
    %v344 = vld [vmem:[#allocation7 + $0xc8] sm:$0xf]
    %v345 = vld [vmem:[#allocation7 + $0xcc] sm:$0xf]
    %v346 = vld [vmem:[#allocation7 + $0xd0] sm:$0xf]
    %v347 = vld [vmem:[#allocation7 + $0xd4] sm:$0xf]
    %v348 = vld [vmem:[#allocation7 + $0xd8] sm:$0xf]
    %v349 = vld [vmem:[#allocation7 + $0xdc] sm:$0xf]
    %v350 = vld [vmem:[#allocation7 + $0xe0] sm:$0xf]
    %v351 = vld [vmem:[#allocation7 + $0xe4] sm:$0xf]
    %v352 = vld [vmem:[#allocation7 + $0xe8] sm:$0xf]
    %v353 = vld [vmem:[#allocation7 + $0xec] sm:$0xf]
    %v354 = vld [vmem:[#allocation7 + $0xf0] sm:$0xf]
    %v355 = vld [vmem:[#allocation7 + $0xf4] sm:$0xf]
    %v356 = vld [vmem:[#allocation7 + $0xf8] sm:$0xf]
    %v357 = vld [vmem:[#allocation7 + $0xfc] sm:$0xf]
    %v358 = vld [vmem:[%s4] sm:$0x1]
    %v359 = vperm.slane %v358, 0
    %v368 = vunpack.c.l.b16 %v286
    %v369 = vunpack.c.l.b16 %v287
    %v370 = vunpack.c.l.b16 %v288
    %v371 = vunpack.c.l.b16 %v289
    %v372 = vunpack.c.l.b16 %v290
    %v373 = vunpack.c.l.b16 %v291
    %v374 = vunpack.c.l.b16 %v292
    %v375 = vunpack.c.l.b16 %v293
    %v376 = vrot.slane %v372, 7
    %vm377 = vcmask 1041409
    %v378 = vsel %vm377, %v376, %v368
    %v379 = vrot.slane %v373, 7
    %v380 = vsel %vm377, %v379, %v369
    %v381 = vrot.slane %v374, 7
    %v382 = vsel %vm377, %v381, %v370
    %v383 = vrot.slane %v375, 7
    %v384 = vsel %vm377, %v383, %v371
    %v385 = vpack.c.b16 %v378, %v378
    %v386 = vpack.c.b16 %v380, %v380
    %v387 = vpack.c.b16 %v382, %v382
    %v388 = vpack.c.b16 %v384, %v384
    %v457 = vunpack.c.l.b16 %v294
    %v458 = vunpack.c.l.b16 %v295
    %v459 = vunpack.c.l.b16 %v296
    %v460 = vunpack.c.l.b16 %v297
    %v461 = vunpack.c.l.b16 %v298
    %v462 = vunpack.c.l.b16 %v299
    %v463 = vunpack.c.l.b16 %v300
    %v464 = vunpack.c.l.b16 %v301
    %v465 = vunpack.c.l.b16 %v302
    %v466 = vunpack.c.l.b16 %v303
    %v467 = vunpack.c.l.b16 %v304
    %v468 = vunpack.c.l.b16 %v305
    %v469 = vunpack.c.l.b16 %v306
    %v470 = vunpack.c.l.b16 %v307
    %v471 = vunpack.c.l.b16 %v308
    %v472 = vunpack.c.l.b16 %v309
    %v473 = vunpack.c.l.b16 %v310
    %v474 = vunpack.c.l.b16 %v311
    %v475 = vunpack.c.l.b16 %v312
    %v476 = vunpack.c.l.b16 %v313
    %v477 = vunpack.c.l.b16 %v314
    %v478 = vunpack.c.l.b16 %v315
    %v479 = vunpack.c.l.b16 %v316
    %v480 = vunpack.c.l.b16 %v317
    %v481 = vunpack.c.l.b16 %v318
    %v482 = vunpack.c.l.b16 %v319
    %v483 = vunpack.c.l.b16 %v320
    %v484 = vunpack.c.l.b16 %v321
    %v485 = vunpack.c.l.b16 %v322
    %v486 = vunpack.c.l.b16 %v323
    %v487 = vunpack.c.l.b16 %v324
    %v488 = vunpack.c.l.b16 %v325
    %v489 = vunpack.c.l.b16 %v326
    %v490 = vunpack.c.l.b16 %v327
    %v491 = vunpack.c.l.b16 %v328
    %v492 = vunpack.c.l.b16 %v329
    %v493 = vunpack.c.l.b16 %v330
    %v494 = vunpack.c.l.b16 %v331
    %v495 = vunpack.c.l.b16 %v332
    %v496 = vunpack.c.l.b16 %v333
    %v497 = vunpack.c.l.b16 %v334
    %v498 = vunpack.c.l.b16 %v335
    %v499 = vunpack.c.l.b16 %v336
    %v500 = vunpack.c.l.b16 %v337
    %v501 = vunpack.c.l.b16 %v338
    %v502 = vunpack.c.l.b16 %v339
    %v503 = vunpack.c.l.b16 %v340
    %v504 = vunpack.c.l.b16 %v341
    %v505 = vunpack.c.l.b16 %v342
    %v506 = vunpack.c.l.b16 %v343
    %v507 = vunpack.c.l.b16 %v344
    %v508 = vunpack.c.l.b16 %v345
    %v509 = vunpack.c.l.b16 %v346
    %v510 = vunpack.c.l.b16 %v347
    %v511 = vunpack.c.l.b16 %v348
    %v512 = vunpack.c.l.b16 %v349
    %v513 = vunpack.c.l.b16 %v350
    %v514 = vunpack.c.l.b16 %v351
    %v515 = vunpack.c.l.b16 %v352
    %v516 = vunpack.c.l.b16 %v353
    %v517 = vunpack.c.l.b16 %v354
    %v518 = vunpack.c.l.b16 %v355
    %v519 = vunpack.c.l.b16 %v356
    %v520 = vunpack.c.l.b16 %v357
    %v521 = vpack.c.b16 %v458, %v457
    %v522 = vpack.c.b16 %v460, %v459
    %v523 = vpack.c.b16 %v462, %v461
    %v524 = vpack.c.b16 %v464, %v463
    %v525 = vpack.c.b16 %v466, %v465
    %v526 = vpack.c.b16 %v468, %v467
    %v527 = vpack.c.b16 %v470, %v469
    %v528 = vpack.c.b16 %v472, %v471
    %v529 = vpack.c.b16 %v474, %v473
    %v530 = vpack.c.b16 %v476, %v475
    %v531 = vpack.c.b16 %v478, %v477
    %v532 = vpack.c.b16 %v480, %v479
    %v533 = vpack.c.b16 %v482, %v481
    %v534 = vpack.c.b16 %v484, %v483
    %v535 = vpack.c.b16 %v486, %v485
    %v536 = vpack.c.b16 %v488, %v487
    %v537 = vpack.c.b16 %v490, %v489
    %v538 = vpack.c.b16 %v492, %v491
    %v539 = vpack.c.b16 %v494, %v493
    %v540 = vpack.c.b16 %v496, %v495
    %v541 = vpack.c.b16 %v498, %v497
    %v542 = vpack.c.b16 %v500, %v499
    %v543 = vpack.c.b16 %v502, %v501
    %v544 = vpack.c.b16 %v504, %v503
    %v545 = vpack.c.b16 %v506, %v505
    %v546 = vpack.c.b16 %v508, %v507
    %v547 = vpack.c.b16 %v510, %v509
    %v548 = vpack.c.b16 %v512, %v511
    %v549 = vpack.c.b16 %v514, %v513
    %v550 = vpack.c.b16 %v516, %v515
    %v551 = vpack.c.b16 %v518, %v517
    %v552 = vpack.c.b16 %v520, %v519
    %585 = vmatpush.bf16.msra.mxu0 %v528
    %586 = vmatpush.bf16.msra.mxu0 %v527
    %587 = vmatpush.bf16.msra.mxu0 %v526
    %588 = vmatpush.bf16.msra.mxu0 %v525
    %589 = vmatpush.bf16.msra.mxu0 %v524
    %590 = vmatpush.bf16.msra.mxu0 %v523
    %591 = vmatpush.bf16.msra.mxu0 %v522
    %592 = vmatpush.bf16.msra.mxu0 %v521
    %593 = vmatmul.bf16.gmra.mxu0 %v385
    %v594 = vpop.f32.mrf.mxu0
    %v595 = vadd.f32 %v359, %v594
    %v596 = vpop.f32.mrf.mxu0
    %597 = vdwg.mxu0
    %598 = vmatpush.bf16.msra.mxu0 %v536
    %599 = vmatpush.bf16.msra.mxu0 %v535
    %600 = vmatpush.bf16.msra.mxu0 %v534
    %601 = vmatpush.bf16.msra.mxu0 %v533
    %602 = vmatpush.bf16.msra.mxu0 %v532
    %603 = vmatpush.bf16.msra.mxu0 %v531
    %604 = vmatpush.bf16.msra.mxu0 %v530
    %605 = vmatpush.bf16.msra.mxu0 %v529
    %606 = vmatmul.bf16.gmra.mxu0 %v386
    %v607 = vpop.f32.mrf.mxu0
    %v608 = vadd.f32 %v595, %v607
    %v609 = vpop.f32.mrf.mxu0
    %610 = vdwg.mxu0
    %611 = vmatpush.bf16.msra.mxu0 %v544
    %612 = vmatpush.bf16.msra.mxu0 %v543
    %613 = vmatpush.bf16.msra.mxu0 %v542
    %614 = vmatpush.bf16.msra.mxu0 %v541
    %615 = vmatpush.bf16.msra.mxu0 %v540
    %616 = vmatpush.bf16.msra.mxu0 %v539
    %617 = vmatpush.bf16.msra.mxu0 %v538
    %618 = vmatpush.bf16.msra.mxu0 %v537
    %619 = vmatmul.bf16.gmra.mxu0 %v387
    %v620 = vpop.f32.mrf.mxu0
    %v621 = vadd.f32 %v608, %v620
    %v622 = vpop.f32.mrf.mxu0
    %623 = vdwg.mxu0
    %624 = vmatpush.bf16.msra.mxu0 %v552
    %625 = vmatpush.bf16.msra.mxu0 %v551
    %626 = vmatpush.bf16.msra.mxu0 %v550
    %627 = vmatpush.bf16.msra.mxu0 %v549
    %628 = vmatpush.bf16.msra.mxu0 %v548
    %629 = vmatpush.bf16.msra.mxu0 %v547
    %630 = vmatpush.bf16.msra.mxu0 %v546
    %631 = vmatpush.bf16.msra.mxu0 %v545
    %632 = vmatmul.bf16.gmra.mxu0 %v388
    %v633 = vpop.f32.mrf.mxu0
    %v634 = vadd.f32 %v621, %v633
    %v635 = vpop.f32.mrf.mxu0
    %636 = vdwg.mxu0
    %v637 = vperm.slane %v634, 0
    %v638 = vperm.slane %v634, 1
    %v639 = vadd.f32 %v258, %v637
    %v640 = vadd.f32 %v265, %v638
    %v641 = vlaneseq
    %v642 = vshrl.u32 %v641, 7
    %v643 = vadd.s32 %v642, 8
    %vm644 = vcmp.lt.s32.totalorder %v642, 0
    %v645 = vsub.s32 0, %v642
    %v646 = vsel %vm644, %v645, %v642
    %v647 = vshrl.u32 %v646, 3
    %v648 = vand.u32 %v646, 7
    %v649 = vsub.s32 0, %v648
    %v650 = vsel %vm644, %v649, %v648
    %vm651 = vcmp.lt.s32.totalorder %v643, 0
    %v652 = vsub.s32 0, %v643
    %v653 = vsel %vm651, %v652, %v643
    %v654 = vshrl.u32 %v653, 3
    %v655 = vand.u32 %v653, 7
    %v656 = vsub.s32 0, %v655
    %v657 = vsel %vm651, %v656, %v655
    %vm658 = vcmp.ne.s32.totalorder %v650, 0
    %vm659 = vcmp.ne.s32.totalorder %v657, 0
    %vm660 = vcmp.lt.s32.totalorder %v650, 0
    %vm661 = vcmp.lt.s32.totalorder %v657, 0
    %vm662 = vmand %vm660, %vm658
    %vm663 = vmand %vm661, %vm659
    %v664 = vadd.s32 %v650, 8
    %v665 = vadd.s32 %v657, 8
    %v666 = vsel %vm662, %v664, %v650
    %v667 = vsel %vm663, %v665, %v657
    %v668 = vld [vmem:[#allocation9] sm:$0xff]
    %v669 = vld [vmem:[#allocation9 + $0x8] sm:$0xff]
    %v670 = vld [vmem:[#allocation9 + $0x10] sm:$0xff]
    %v671 = vmul.f32 %v639, %v639
    %v672 = vmul.f32 %v640, %v640
    %vm673 = vcmask 261120
    %v674 = vsel %vm673, %v671, 0.0
    %675 = vadd.xlane.f32.xlu0 %v674
    %v676 = vpop.xlane.xlu0 %675
    %v677 = vsel %vm673, %v672, 0.0
    %678 = vadd.xlane.f32.xlu0 %v677
    %v679 = vpop.xlane.xlu0 %678
    %v680 = vrcp.pop 32.0
    %v681 = vmul.f32 32.0, %v680
    %v682 = vsub.f32 1.0, %v681
    %v683 = vmul.f32 %v680, %v682
    %v684 = vadd.f32 %v680, %v683
    %vm685 = vweird.f32 %v680
    %v686 = vsel %vm685, %v680, %v684
    %v687 = vmul.f32 %v676, %v686
    %v688 = vmul.f32 %v679, %v686
    %v689 = vadd.f32 %v687, 1e-05
    %v690 = vadd.f32 %v688, 1e-05
    %v691 = vrsqrt.pop %v689
    %v692 = vmul.f32 %v691, %v689
    %v693 = vmul.f32 %v692, %v691
    %v694 = vmul.f32 0.5, %v693
    %v695 = vsub.f32 1.5, %v694
    %v696 = vmul.f32 %v691, %v695
    %vm697 = vweird.f32 %v689
    %vm698 = vweird.f32 %v691
    %vm699 = vmor %vm697, %vm698
    %v700 = vsel %vm699, %v691, %v696
    %v701 = vrsqrt.pop %v690
    %v702 = vmul.f32 %v701, %v690
    %v703 = vmul.f32 %v702, %v701
    %v704 = vmul.f32 0.5, %v703
    %v705 = vsub.f32 1.5, %v704
    %v706 = vmul.f32 %v701, %v705
    %vm707 = vweird.f32 %v690
    %vm708 = vweird.f32 %v701
    %vm709 = vmor %vm707, %vm708
    %v710 = vsel %vm709, %v701, %v706
    %v711 = vmul.f32 %v639, %v700
    %v712 = vmul.f32 %v640, %v710
    %v713 = vperm.slane %v668, 4
    %v714 = vmul.f32 %v711, %v713
    %v715 = vmul.f32 %v712, %v713
    %v716 = vpack.c.bf16 %v715, %v714
    %v717 = vld [vmem:[#allocation10] sm:$0xf]
    %v718 = vld [vmem:[#allocation10 + $0x4] sm:$0xf]
    %v719 = vld [vmem:[#allocation10 + $0x8] sm:$0xf]
    %v720 = vld [vmem:[#allocation10 + $0xc] sm:$0xf]
    %v725 = vunpack.c.l.b16 %v717
    %v726 = vunpack.c.l.b16 %v718
    %v727 = vunpack.c.l.b16 %v719
    %v728 = vunpack.c.l.b16 %v720
    %v729 = vpack.c.b16 %v726, %v725
    %v730 = vpack.c.b16 %v728, %v727
    %v734 = vsel %vm673, %v716, 0
    %736 = vmatpush.bf16.msra.mxu0 0
    %737 = vmatpush.bf16.msra.mxu0 0
    %738 = vmatpush.bf16.msra.mxu0 0
    %739 = vmatpush.bf16.msra.mxu0 0
    %740 = vmatpush.bf16.msra.mxu0 0
    %741 = vmatpush.bf16.msra.mxu0 0
    %742 = vmatpush.bf16.msra.mxu0 %v730
    %743 = vmatpush.bf16.msra.mxu0 %v729
    %744 = vmatmul.bf16.gmra.mxu0 %v734
    %v745 = vpop.f32.mrf.mxu0
    %v746 = vadd.f32 0.0, %v745
    %v747 = vpop.f32.mrf.mxu0
    %v748 = vadd.f32 0.0, %v747
    %749 = vdwg.mxu0
    %v750 = vperm.slane %v668, 5
    %vm751 = vcmp.ge.s32.totalorder %v666, 3
    %vm752 = vcmp.ge.s32.totalorder %v667, 3
    %v753 = vrot.slane %v746, 5
    %v754 = vrot.slane %v748, 5
    %vm755 = vcmp.lt.s32.totalorder %v642, 3
    %v756 = vsel %vm755, %v753, %v754
    %v757 = vsel %vm755, %v754, %v753
    %v758 = vsel %vm751, %v757, 0.0
    %v759 = vsel %vm752, %v756, 0.0
    %v760 = vperm.slane %v668, 0
    %v761 = vmul.f32 %v758, %v760
    %v762 = vmul.f32 %v759, %v760
    %v763 = vadd.f32 %v750, %v761
    %v764 = vadd.f32 %v750, %v762
    %vm765 = vcmp.ge.s32.totalorder %v666, 2
    %vm766 = vcmp.ge.s32.totalorder %v667, 2
    %v767 = vrot.slane %v746, 6
    %v768 = vrot.slane %v748, 6
    %vm769 = vcmp.lt.s32.totalorder %v642, 2
    %v770 = vsel %vm769, %v767, %v768
    %v771 = vsel %vm769, %v768, %v767
    %v772 = vsel %vm765, %v771, 0.0
    %v773 = vsel %vm766, %v770, 0.0
    %v774 = vperm.slane %v668, 1
    %v775 = vmul.f32 %v772, %v774
    %v776 = vmul.f32 %v773, %v774
    %v777 = vadd.f32 %v763, %v775
    %v778 = vadd.f32 %v764, %v776
    %vm779 = vcmp.ge.s32.totalorder %v666, 1
    %vm780 = vcmp.ge.s32.totalorder %v667, 1
    %v781 = vrot.slane %v746, 7
    %v782 = vrot.slane %v748, 7
    %vm783 = vcmp.lt.s32.totalorder %v642, 1
    %v784 = vsel %vm783, %v781, %v782
    %v785 = vsel %vm783, %v782, %v781
    %v786 = vsel %vm779, %v785, 0.0
    %v787 = vsel %vm780, %v784, 0.0
    %v788 = vperm.slane %v668, 2
    %v789 = vmul.f32 %v786, %v788
    %v790 = vmul.f32 %v787, %v788
    %v791 = vadd.f32 %v777, %v789
    %v792 = vadd.f32 %v778, %v790
    %v793 = vperm.slane %v668, 3
    %v794 = vmul.f32 %v746, %v793
    %v795 = vmul.f32 %v748, %v793
    %v796 = vadd.f32 %v791, %v794
    %v797 = vadd.f32 %v792, %v795
    %v798 = vxor.u32 %v796, 2147483648
    %v799 = vxor.u32 %v797, 2147483648
    %v800 = vmul.f32 %v798, 1.442695
    %v801 = vpow.pop %v800
    %v802 = vmul.f32 %v799, 1.442695
    %v803 = vpow.pop %v802
    %v804 = vadd.f32 %v801, 1.0
    %v805 = vadd.f32 %v803, 1.0
    %v806 = vrcp.pop %v804
    %v807 = vmul.f32 %v804, %v806
    %v808 = vsub.f32 1.0, %v807
    %v809 = vmul.f32 %v806, %v808
    %v810 = vadd.f32 %v806, %v809
    %vm811 = vweird.f32 %v804
    %vm812 = vweird.f32 %v806
    %vm813 = vmor %vm811, %vm812
    %v814 = vsel %vm813, %v806, %v810
    %v815 = vand.u32 2147483647, %v804
    %vm816 = vcmp.eq.f32.partialorder %v815, 8.507059e+37
    %v817 = vand.u32 %v804, 2147483648
    %v818 = vor.u32 1.1754944e-38, %v817
    %v819 = vsel %vm816, %v818, %v814
    %v820 = vmul.f32 1.0, %v819
    %v821 = vrcp.pop %v805
    %v822 = vmul.f32 %v805, %v821
    %v823 = vsub.f32 1.0, %v822
    %v824 = vmul.f32 %v821, %v823
    %v825 = vadd.f32 %v821, %v824
    %vm826 = vweird.f32 %v805
    %vm827 = vweird.f32 %v821
    %vm828 = vmor %vm826, %vm827
    %v829 = vsel %vm828, %v821, %v825
    %v830 = vand.u32 2147483647, %v805
    %vm831 = vcmp.eq.f32.partialorder %v830, 8.507059e+37
    %v832 = vand.u32 %v805, 2147483648
    %v833 = vor.u32 1.1754944e-38, %v832
    %v834 = vsel %vm831, %v833, %v829
    %v835 = vmul.f32 1.0, %v834
    %v836 = vmul.f32 %v796, %v820
    %v837 = vmul.f32 %v797, %v835
    %v838 = vpack.c.bf16 %v837, %v836
    %v839 = vld [vmem:[#allocation12] sm:$0xf]
    %v840 = vld [vmem:[#allocation12 + $0x4] sm:$0xf]
    %v841 = vld [vmem:[#allocation12 + $0x8] sm:$0xf]
    %v842 = vld [vmem:[#allocation12 + $0xc] sm:$0xf]
    %v843 = vld [vmem:[#allocation12 + $0x10] sm:$0xf]
    %v844 = vld [vmem:[#allocation12 + $0x14] sm:$0xf]
    %v845 = vld [vmem:[#allocation12 + $0x18] sm:$0xf]
    %v846 = vld [vmem:[#allocation12 + $0x1c] sm:$0xf]
    %v855 = vunpack.c.l.b16 %v839
    %v856 = vunpack.c.l.b16 %v840
    %v857 = vunpack.c.l.b16 %v841
    %v858 = vunpack.c.l.b16 %v842
    %v859 = vunpack.c.l.b16 %v843
    %v860 = vunpack.c.l.b16 %v844
    %v861 = vunpack.c.l.b16 %v845
    %v862 = vunpack.c.l.b16 %v846
    %v863 = vpack.c.b16 %v856, %v855
    %v864 = vpack.c.b16 %v858, %v857
    %v865 = vpack.c.b16 %v860, %v859
    %v866 = vpack.c.b16 %v862, %v861
    %vm871 = vcmask 523264
    %v873 = vsel %vm871, %v838, 0
    %875 = vmatpush.bf16.msra.mxu0 0
    %876 = vmatpush.bf16.msra.mxu0 0
    %877 = vmatpush.bf16.msra.mxu0 0
    %878 = vmatpush.bf16.msra.mxu0 0
    %879 = vmatpush.bf16.msra.mxu0 %v866
    %880 = vmatpush.bf16.msra.mxu0 %v865
    %881 = vmatpush.bf16.msra.mxu0 %v864
    %882 = vmatpush.bf16.msra.mxu0 %v863
    %883 = vmatmul.bf16.gmra.mxu0 %v873
    %v884 = vpop.f32.mrf.mxu0
    %v885 = vadd.f32 0.0, %v884
    %v886 = vpop.f32.mrf.mxu0
    %v887 = vadd.f32 0.0, %v886
    %888 = vdwg.mxu0
    %v889 = vperm.slane %v668, 6
    %v890 = vadd.f32 %v885, %v889
    %v891 = vadd.f32 %v887, %v889
    %vm892 = vcmp.gt.f32.partialorder %v890, 20.0
    %vm893 = vcmp.gt.f32.partialorder %v891, 20.0
    %v894 = vmin.f32 %v890, 20.0
    %v895 = vmin.f32 %v891, 20.0
    %v896 = vmul.f32 %v894, 1.442695
    %v897 = vpow.pop %v896
    %v898 = vmul.f32 %v895, 1.442695
    %v899 = vpow.pop %v898
    %v900 = vadd.f32 %v897, 1.0
    %v901 = vlog2.pop %v900
    %v902 = vmul.f32 %v901, 0.6931472
    %v903 = vmul.f32 -0.5, %v897
    %v904 = vadd.f32 %v903, 1.0
    %v905 = vmul.f32 %v904, %v897
    %v906 = vand.u32 2147483647, %v897
    %vm907 = vcmp.lt.f32.partialorder %v906, 0.0004427343
    %v908 = vsel %vm907, %v905, %v902
    %v909 = vadd.f32 %v899, 1.0
    %v910 = vlog2.pop %v909
    %v911 = vmul.f32 %v910, 0.6931472
    %v912 = vmul.f32 -0.5, %v899
    %v913 = vadd.f32 %v912, 1.0
    %v914 = vmul.f32 %v913, %v899
    %v915 = vand.u32 2147483647, %v899
    %vm916 = vcmp.lt.f32.partialorder %v915, 0.0004427343
    %v917 = vsel %vm916, %v914, %v911
    %v918 = vsel %vm892, %v890, %v908
    %v919 = vsel %vm893, %v891, %v917
    %v920 = vmul.f32 %v918, %v836
    %v921 = vmul.f32 %v919, %v837
    %v923 = vrot.slane %v918, 1
    %v924 = vrot.slane %v918, 2
    %v925 = vrot.slane %v918, 3
    %v926 = vrot.slane %v918, 4
    %v927 = vrot.slane %v918, 5
    %v928 = vrot.slane %v918, 6
    %v929 = vrot.slane %v918, 7
    %v930 = vperm.slane %v918, 0
    %v931 = vperm.slane %v923, 0
    %v932 = vperm.slane %v924, 0
    %v933 = vperm.slane %v925, 0
    %v934 = vperm.slane %v926, 0
    %v935 = vperm.slane %v927, 0
    %v936 = vperm.slane %v928, 0
    %v937 = vperm.slane %v929, 0
    %v946 = vmul.f32 %v930, %v669
    %v947 = vmul.f32 %v930, %v670
    %v948 = vmul.f32 %v931, %v669
    %v949 = vmul.f32 %v931, %v670
    %v950 = vmul.f32 %v932, %v669
    %v951 = vmul.f32 %v932, %v670
    %v952 = vmul.f32 %v933, %v669
    %v953 = vmul.f32 %v933, %v670
    %v954 = vmul.f32 %v934, %v669
    %v955 = vmul.f32 %v934, %v670
    %v956 = vmul.f32 %v935, %v669
    %v957 = vmul.f32 %v935, %v670
    %v958 = vmul.f32 %v936, %v669
    %v959 = vmul.f32 %v936, %v670
    %v960 = vmul.f32 %v937, %v669
    %v961 = vmul.f32 %v937, %v670
    %v962 = vmul.f32 %v946, 1.442695
    %v963 = vpow.pop %v962
    %v964 = vmul.f32 %v947, 1.442695
    %v965 = vpow.pop %v964
    %v966 = vmul.f32 %v948, 1.442695
    %v967 = vpow.pop %v966
    %v968 = vmul.f32 %v949, 1.442695
    %v969 = vpow.pop %v968
    %v970 = vmul.f32 %v950, 1.442695
    %v971 = vpow.pop %v970
    %v972 = vmul.f32 %v951, 1.442695
    %v973 = vpow.pop %v972
    %v974 = vmul.f32 %v952, 1.442695
    %v975 = vpow.pop %v974
    %v976 = vmul.f32 %v953, 1.442695
    %v977 = vpow.pop %v976
    %v978 = vmul.f32 %v954, 1.442695
    %v979 = vpow.pop %v978
    %v980 = vmul.f32 %v955, 1.442695
    %v981 = vpow.pop %v980
    %v982 = vmul.f32 %v956, 1.442695
    %v983 = vpow.pop %v982
    %v984 = vmul.f32 %v957, 1.442695
    %v985 = vpow.pop %v984
    %v986 = vmul.f32 %v958, 1.442695
    %v987 = vpow.pop %v986
    %v988 = vmul.f32 %v959, 1.442695
    %v989 = vpow.pop %v988
    %v990 = vmul.f32 %v960, 1.442695
    %v991 = vpow.pop %v990
    %v992 = vmul.f32 %v961, 1.442695
    %v993 = vpow.pop %v992
    %995 = vrot.lane.b32.xlu0 %v885, 64
    %v996 = vpop.permute.xlu0 %995
    %998 = vxpose.xlu0.b32.start [1/16] %v996, 128
    %999 = vxpose.xlu0.b32.cont [2/16] 0.0, 128
    %1000 = vxpose.xlu0.b32.cont [3/16] 0.0, 128
    %1001 = vxpose.xlu0.b32.cont [4/16] 0.0, 128
    %1002 = vxpose.xlu0.b32.cont [5/16] 0.0, 128
    %1003 = vxpose.xlu0.b32.cont [6/16] 0.0, 128
    %1004 = vxpose.xlu0.b32.cont [7/16] 0.0, 128
    %1005 = vxpose.xlu0.b32.cont [8/16] 0.0, 128
    %1006 = vxpose.xlu0.b32.cont [9/16] 0.0, 128
    %1007 = vxpose.xlu0.b32.cont [10/16] 0.0, 128
    %1008 = vxpose.xlu0.b32.cont [11/16] 0.0, 128
    %1009 = vxpose.xlu0.b32.cont [12/16] 0.0, 128
    %1010 = vxpose.xlu0.b32.cont [13/16] 0.0, 128
    %1011 = vxpose.xlu0.b32.cont [14/16] 0.0, 128
    %1012 = vxpose.xlu0.b32.cont [15/16] 0.0, 128
    %1013 = vxpose.xlu0.b32.end [16/16] 0.0, 128
    %v1014 = vpop.trf.xlu0
    %v1015 = vpop.trf.xlu0
    %v1016 = vpop.trf.xlu0
    %v1017 = vpop.trf.xlu0
    %v1018 = vpop.trf.xlu0
    %v1019 = vpop.trf.xlu0
    %v1020 = vpop.trf.xlu0
    %v1021 = vpop.trf.xlu0
    %v1022 = vpop.trf.xlu0
    %v1023 = vpop.trf.xlu0
    %v1024 = vpop.trf.xlu0
    %v1025 = vpop.trf.xlu0
    %v1026 = vpop.trf.xlu0
    %v1027 = vpop.trf.xlu0
    %v1028 = vpop.trf.xlu0
    %v1029 = vpop.trf.xlu0
    %vm1030 = vcmask 7168
    %v1032 = vsel %vm1030, %v1014, 0
    %v1035 = vsel %vm1030, %v1015, 0
    %v1038 = vsel %vm245, %v920, 0
    %1040 = vmatpush.msra.mxu0 0.0
    %1041 = vmatpush.msra.mxu0 0.0
    %1042 = vmatpush.msra.mxu0 0.0
    %1043 = vmatpush.msra.mxu0 0.0
    %1044 = vmatpush.msra.mxu0 0.0
    %1045 = vmatpush.msra.mxu0 0.0
    %1046 = vmatpush.msra.mxu0 0.0
    %1047 = vmatpush.msra.mxu0 0.0
    %1048 = vmatpush.msra.mxu0 0.0
    %1049 = vmatpush.msra.mxu0 0.0
    %1050 = vmatpush.msra.mxu0 0.0
    %1051 = vmatpush.msra.mxu0 0.0
    %1052 = vmatpush.msra.mxu0 0.0
    %1053 = vmatpush.msra.mxu0 0.0
    %1054 = vmatpush.msra.mxu0 0.0
    %1055 = vmatpush.msra.mxu0 %v1038
    %1056 = vmatmul.f32.gmra.mxu0 %v1032
    %v1057 = vpop.f32.mrf.mxu0
    %v1058 = vadd.f32 0.0, %v1057
    %1059 = vmatmul.f32.gmra.mxu0 %v1035
    %v1060 = vpop.f32.mrf.mxu0
    %v1061 = vadd.f32 0.0, %v1060
    %1062 = vdwg.mxu0
    %v1063 = vmul.f32 %v963, 0.0
    %v1064 = vmul.f32 %v965, 0.0
    %v1065 = vadd.f32 %v1063, %v1058
    %v1066 = vadd.f32 %v1064, %v1061
    %1067 = vrot.lane.b32.xlu0 %v885, 48
    %v1068 = vpop.permute.xlu0 %1067
    %vm1069 = vcmask 130048
    %v1070 = vsel %vm1069, %v1068, 0
    %1072 = vmatpush.msra.mxu0 0.0
    %1073 = vmatpush.msra.mxu0 0.0
    %1074 = vmatpush.msra.mxu0 0.0
    %1075 = vmatpush.msra.mxu0 0.0
    %1076 = vmatpush.msra.mxu0 0.0
    %1077 = vmatpush.msra.mxu0 0.0
    %1078 = vmatpush.msra.mxu0 0.0
    %1079 = vmatpush.msra.mxu0 0.0
    %1080 = vmatpush.msra.mxu0 0.0
    %1081 = vmatpush.msra.mxu0 0.0
    %1082 = vmatpush.msra.mxu0 0.0
    %1083 = vmatpush.msra.mxu0 0.0
    %1084 = vmatpush.msra.mxu0 0.0
    %1085 = vmatpush.msra.mxu0 0.0
    %1086 = vmatpush.msra.mxu0 %v1066
    %1087 = vmatpush.msra.mxu0 %v1065
    %1088 = vmatmul.f32.gmra.mxu0 %v1070
    %v1089 = vpop.f32.mrf.mxu0
    %v1090 = vadd.f32 0.0, %v1089
    %1091 = vdwg.mxu0
    %v1092 = vrot.slane %v885, 1
    %1093 = vrot.lane.b32.xlu0 %v1092, 64
    %v1094 = vpop.permute.xlu0 %1093
    %1096 = vxpose.xlu0.b32.start [1/16] %v1094, 128
    %1097 = vxpose.xlu0.b32.cont [2/16] 0.0, 128
    %1098 = vxpose.xlu0.b32.cont [3/16] 0.0, 128
    %1099 = vxpose.xlu0.b32.cont [4/16] 0.0, 128
    %1100 = vxpose.xlu0.b32.cont [5/16] 0.0, 128
    %1101 = vxpose.xlu0.b32.cont [6/16] 0.0, 128
    %1102 = vxpose.xlu0.b32.cont [7/16] 0.0, 128
    %1103 = vxpose.xlu0.b32.cont [8/16] 0.0, 128
    %1104 = vxpose.xlu0.b32.cont [9/16] 0.0, 128
    %1105 = vxpose.xlu0.b32.cont [10/16] 0.0, 128
    %1106 = vxpose.xlu0.b32.cont [11/16] 0.0, 128
    %1107 = vxpose.xlu0.b32.cont [12/16] 0.0, 128
    %1108 = vxpose.xlu0.b32.cont [13/16] 0.0, 128
    %1109 = vxpose.xlu0.b32.cont [14/16] 0.0, 128
    %1110 = vxpose.xlu0.b32.cont [15/16] 0.0, 128
    %1111 = vxpose.xlu0.b32.end [16/16] 0.0, 128
    %v1112 = vpop.trf.xlu0
    %v1113 = vpop.trf.xlu0
    %v1114 = vpop.trf.xlu0
    %v1115 = vpop.trf.xlu0
    %v1116 = vpop.trf.xlu0
    %v1117 = vpop.trf.xlu0
    %v1118 = vpop.trf.xlu0
    %v1119 = vpop.trf.xlu0
    %v1120 = vpop.trf.xlu0
    %v1121 = vpop.trf.xlu0
    %v1122 = vpop.trf.xlu0
    %v1123 = vpop.trf.xlu0
    %v1124 = vpop.trf.xlu0
    %v1125 = vpop.trf.xlu0
    %v1126 = vpop.trf.xlu0
    %v1127 = vpop.trf.xlu0
    %v1128 = vrot.slane %v920, 1
    %v1130 = vsel %vm1030, %v1112, 0
    %v1133 = vsel %vm1030, %v1113, 0
    %v1135 = vsel %vm245, %v1128, 0
    %1137 = vmatpush.msra.mxu0 0.0
    %1138 = vmatpush.msra.mxu0 0.0
    %1139 = vmatpush.msra.mxu0 0.0
    %1140 = vmatpush.msra.mxu0 0.0
    %1141 = vmatpush.msra.mxu0 0.0
    %1142 = vmatpush.msra.mxu0 0.0
    %1143 = vmatpush.msra.mxu0 0.0
    %1144 = vmatpush.msra.mxu0 0.0
    %1145 = vmatpush.msra.mxu0 0.0
    %1146 = vmatpush.msra.mxu0 0.0
    %1147 = vmatpush.msra.mxu0 0.0
    %1148 = vmatpush.msra.mxu0 0.0
    %1149 = vmatpush.msra.mxu0 0.0
    %1150 = vmatpush.msra.mxu0 0.0
    %1151 = vmatpush.msra.mxu0 0.0
    %1152 = vmatpush.msra.mxu0 %v1135
    %1153 = vmatmul.f32.gmra.mxu0 %v1130
    %v1154 = vpop.f32.mrf.mxu0
    %v1155 = vadd.f32 0.0, %v1154
    %1156 = vmatmul.f32.gmra.mxu0 %v1133
    %v1157 = vpop.f32.mrf.mxu0
    %v1158 = vadd.f32 0.0, %v1157
    %1159 = vdwg.mxu0
    %v1160 = vmul.f32 %v1065, %v967
    %v1161 = vmul.f32 %v1066, %v969
    %v1162 = vadd.f32 %v1160, %v1155
    %v1163 = vadd.f32 %v1161, %v1158
    %1164 = vrot.lane.b32.xlu0 %v1092, 48
    %v1165 = vpop.permute.xlu0 %1164
    %v1166 = vsel %vm1069, %v1165, 0
    %1168 = vmatpush.msra.mxu0 0.0
    %1169 = vmatpush.msra.mxu0 0.0
    %1170 = vmatpush.msra.mxu0 0.0
    %1171 = vmatpush.msra.mxu0 0.0
    %1172 = vmatpush.msra.mxu0 0.0
    %1173 = vmatpush.msra.mxu0 0.0
    %1174 = vmatpush.msra.mxu0 0.0
    %1175 = vmatpush.msra.mxu0 0.0
    %1176 = vmatpush.msra.mxu0 0.0
    %1177 = vmatpush.msra.mxu0 0.0
    %1178 = vmatpush.msra.mxu0 0.0
    %1179 = vmatpush.msra.mxu0 0.0
    %1180 = vmatpush.msra.mxu0 0.0
    %1181 = vmatpush.msra.mxu0 0.0
    %1182 = vmatpush.msra.mxu0 %v1163
    %1183 = vmatpush.msra.mxu0 %v1162
    %1184 = vmatmul.f32.gmra.mxu0 %v1166
    %v1185 = vpop.f32.mrf.mxu0
    %v1186 = vadd.f32 0.0, %v1185
    %1187 = vdwg.mxu0
    %v1188 = vrot.slane %v885, 2
    %1189 = vrot.lane.b32.xlu0 %v1188, 64
    %v1190 = vpop.permute.xlu0 %1189
    %1192 = vxpose.xlu0.b32.start [1/16] %v1190, 128
    %1193 = vxpose.xlu0.b32.cont [2/16] 0.0, 128
    %1194 = vxpose.xlu0.b32.cont [3/16] 0.0, 128
    %1195 = vxpose.xlu0.b32.cont [4/16] 0.0, 128
    %1196 = vxpose.xlu0.b32.cont [5/16] 0.0, 128
    %1197 = vxpose.xlu0.b32.cont [6/16] 0.0, 128
    %1198 = vxpose.xlu0.b32.cont [7/16] 0.0, 128
    %1199 = vxpose.xlu0.b32.cont [8/16] 0.0, 128
    %1200 = vxpose.xlu0.b32.cont [9/16] 0.0, 128
    %1201 = vxpose.xlu0.b32.cont [10/16] 0.0, 128
    %1202 = vxpose.xlu0.b32.cont [11/16] 0.0, 128
    %1203 = vxpose.xlu0.b32.cont [12/16] 0.0, 128
    %1204 = vxpose.xlu0.b32.cont [13/16] 0.0, 128
    %1205 = vxpose.xlu0.b32.cont [14/16] 0.0, 128
    %1206 = vxpose.xlu0.b32.cont [15/16] 0.0, 128
    %1207 = vxpose.xlu0.b32.end [16/16] 0.0, 128
    %v1208 = vpop.trf.xlu0
    %v1209 = vpop.trf.xlu0
    %v1210 = vpop.trf.xlu0
    %v1211 = vpop.trf.xlu0
    %v1212 = vpop.trf.xlu0
    %v1213 = vpop.trf.xlu0
    %v1214 = vpop.trf.xlu0
    %v1215 = vpop.trf.xlu0
    %v1216 = vpop.trf.xlu0
    %v1217 = vpop.trf.xlu0
    %v1218 = vpop.trf.xlu0
    %v1219 = vpop.trf.xlu0
    %v1220 = vpop.trf.xlu0
    %v1221 = vpop.trf.xlu0
    %v1222 = vpop.trf.xlu0
    %v1223 = vpop.trf.xlu0
    %v1224 = vrot.slane %v920, 2
    %v1226 = vsel %vm1030, %v1208, 0
    %v1229 = vsel %vm1030, %v1209, 0
    %v1231 = vsel %vm245, %v1224, 0
    %1233 = vmatpush.msra.mxu0 0.0
    %1234 = vmatpush.msra.mxu0 0.0
    %1235 = vmatpush.msra.mxu0 0.0
    %1236 = vmatpush.msra.mxu0 0.0
    %1237 = vmatpush.msra.mxu0 0.0
    %1238 = vmatpush.msra.mxu0 0.0
    %1239 = vmatpush.msra.mxu0 0.0
    %1240 = vmatpush.msra.mxu0 0.0
    %1241 = vmatpush.msra.mxu0 0.0
    %1242 = vmatpush.msra.mxu0 0.0
    %1243 = vmatpush.msra.mxu0 0.0
    %1244 = vmatpush.msra.mxu0 0.0
    %1245 = vmatpush.msra.mxu0 0.0
    %1246 = vmatpush.msra.mxu0 0.0
    %1247 = vmatpush.msra.mxu0 0.0
    %1248 = vmatpush.msra.mxu0 %v1231
    %1249 = vmatmul.f32.gmra.mxu0 %v1226
    %v1250 = vpop.f32.mrf.mxu0
    %v1251 = vadd.f32 0.0, %v1250
    %1252 = vmatmul.f32.gmra.mxu0 %v1229
    %v1253 = vpop.f32.mrf.mxu0
    %v1254 = vadd.f32 0.0, %v1253
    %1255 = vdwg.mxu0
    %v1256 = vmul.f32 %v1162, %v971
    %v1257 = vmul.f32 %v1163, %v973
    %v1258 = vadd.f32 %v1256, %v1251
    %v1259 = vadd.f32 %v1257, %v1254
    %1260 = vrot.lane.b32.xlu0 %v1188, 48
    %v1261 = vpop.permute.xlu0 %1260
    %v1262 = vsel %vm1069, %v1261, 0
    %1264 = vmatpush.msra.mxu0 0.0
    %1265 = vmatpush.msra.mxu0 0.0
    %1266 = vmatpush.msra.mxu0 0.0
    %1267 = vmatpush.msra.mxu0 0.0
    %1268 = vmatpush.msra.mxu0 0.0
    %1269 = vmatpush.msra.mxu0 0.0
    %1270 = vmatpush.msra.mxu0 0.0
    %1271 = vmatpush.msra.mxu0 0.0
    %1272 = vmatpush.msra.mxu0 0.0
    %1273 = vmatpush.msra.mxu0 0.0
    %1274 = vmatpush.msra.mxu0 0.0
    %1275 = vmatpush.msra.mxu0 0.0
    %1276 = vmatpush.msra.mxu0 0.0
    %1277 = vmatpush.msra.mxu0 0.0
    %1278 = vmatpush.msra.mxu0 %v1259
    %1279 = vmatpush.msra.mxu0 %v1258
    %1280 = vmatmul.f32.gmra.mxu0 %v1262
    %v1281 = vpop.f32.mrf.mxu0
    %v1282 = vadd.f32 0.0, %v1281
    %1283 = vdwg.mxu0
    %v1284 = vrot.slane %v885, 3
    %1285 = vrot.lane.b32.xlu0 %v1284, 64
    %v1286 = vpop.permute.xlu0 %1285
    %1288 = vxpose.xlu0.b32.start [1/16] %v1286, 128
    %1289 = vxpose.xlu0.b32.cont [2/16] 0.0, 128
    %1290 = vxpose.xlu0.b32.cont [3/16] 0.0, 128
    %1291 = vxpose.xlu0.b32.cont [4/16] 0.0, 128
    %1292 = vxpose.xlu0.b32.cont [5/16] 0.0, 128
    %1293 = vxpose.xlu0.b32.cont [6/16] 0.0, 128
    %1294 = vxpose.xlu0.b32.cont [7/16] 0.0, 128
    %1295 = vxpose.xlu0.b32.cont [8/16] 0.0, 128
    %1296 = vxpose.xlu0.b32.cont [9/16] 0.0, 128
    %1297 = vxpose.xlu0.b32.cont [10/16] 0.0, 128
    %1298 = vxpose.xlu0.b32.cont [11/16] 0.0, 128
    %1299 = vxpose.xlu0.b32.cont [12/16] 0.0, 128
    %1300 = vxpose.xlu0.b32.cont [13/16] 0.0, 128
    %1301 = vxpose.xlu0.b32.cont [14/16] 0.0, 128
    %1302 = vxpose.xlu0.b32.cont [15/16] 0.0, 128
    %1303 = vxpose.xlu0.b32.end [16/16] 0.0, 128
    %v1304 = vpop.trf.xlu0
    %v1305 = vpop.trf.xlu0
    %v1306 = vpop.trf.xlu0
    %v1307 = vpop.trf.xlu0
    %v1308 = vpop.trf.xlu0
    %v1309 = vpop.trf.xlu0
    %v1310 = vpop.trf.xlu0
    %v1311 = vpop.trf.xlu0
    %v1312 = vpop.trf.xlu0
    %v1313 = vpop.trf.xlu0
    %v1314 = vpop.trf.xlu0
    %v1315 = vpop.trf.xlu0
    %v1316 = vpop.trf.xlu0
    %v1317 = vpop.trf.xlu0
    %v1318 = vpop.trf.xlu0
    %v1319 = vpop.trf.xlu0
    %v1320 = vrot.slane %v920, 3
    %v1322 = vsel %vm1030, %v1304, 0
    %v1325 = vsel %vm1030, %v1305, 0
    %v1327 = vsel %vm245, %v1320, 0
    %1329 = vmatpush.msra.mxu0 0.0
    %1330 = vmatpush.msra.mxu0 0.0
    %1331 = vmatpush.msra.mxu0 0.0
    %1332 = vmatpush.msra.mxu0 0.0
    %1333 = vmatpush.msra.mxu0 0.0
    %1334 = vmatpush.msra.mxu0 0.0
    %1335 = vmatpush.msra.mxu0 0.0
    %1336 = vmatpush.msra.mxu0 0.0
    %1337 = vmatpush.msra.mxu0 0.0
    %1338 = vmatpush.msra.mxu0 0.0
    %1339 = vmatpush.msra.mxu0 0.0
    %1340 = vmatpush.msra.mxu0 0.0
    %1341 = vmatpush.msra.mxu0 0.0
    %1342 = vmatpush.msra.mxu0 0.0
    %1343 = vmatpush.msra.mxu0 0.0
    %1344 = vmatpush.msra.mxu0 %v1327
    %1345 = vmatmul.f32.gmra.mxu0 %v1322
    %v1346 = vpop.f32.mrf.mxu0
    %v1347 = vadd.f32 0.0, %v1346
    %1348 = vmatmul.f32.gmra.mxu0 %v1325
    %v1349 = vpop.f32.mrf.mxu0
    %v1350 = vadd.f32 0.0, %v1349
    %1351 = vdwg.mxu0
    %v1352 = vmul.f32 %v1258, %v975
    %v1353 = vmul.f32 %v1259, %v977
    %v1354 = vadd.f32 %v1352, %v1347
    %v1355 = vadd.f32 %v1353, %v1350
    %1356 = vrot.lane.b32.xlu0 %v1284, 48
    %v1357 = vpop.permute.xlu0 %1356
    %v1358 = vsel %vm1069, %v1357, 0
    %1360 = vmatpush.msra.mxu0 0.0
    %1361 = vmatpush.msra.mxu0 0.0
    %1362 = vmatpush.msra.mxu0 0.0
    %1363 = vmatpush.msra.mxu0 0.0
    %1364 = vmatpush.msra.mxu0 0.0
    %1365 = vmatpush.msra.mxu0 0.0
    %1366 = vmatpush.msra.mxu0 0.0
    %1367 = vmatpush.msra.mxu0 0.0
    %1368 = vmatpush.msra.mxu0 0.0
    %1369 = vmatpush.msra.mxu0 0.0
    %1370 = vmatpush.msra.mxu0 0.0
    %1371 = vmatpush.msra.mxu0 0.0
    %1372 = vmatpush.msra.mxu0 0.0
    %1373 = vmatpush.msra.mxu0 0.0
    %1374 = vmatpush.msra.mxu0 %v1355
    %1375 = vmatpush.msra.mxu0 %v1354
    %1376 = vmatmul.f32.gmra.mxu0 %v1358
    %v1377 = vpop.f32.mrf.mxu0
    %v1378 = vadd.f32 0.0, %v1377
    %1379 = vdwg.mxu0
    %v1380 = vrot.slane %v885, 4
    %1381 = vrot.lane.b32.xlu0 %v1380, 64
    %v1382 = vpop.permute.xlu0 %1381
    %1384 = vxpose.xlu0.b32.start [1/16] %v1382, 128
    %1385 = vxpose.xlu0.b32.cont [2/16] 0.0, 128
    %1386 = vxpose.xlu0.b32.cont [3/16] 0.0, 128
    %1387 = vxpose.xlu0.b32.cont [4/16] 0.0, 128
    %1388 = vxpose.xlu0.b32.cont [5/16] 0.0, 128
    %1389 = vxpose.xlu0.b32.cont [6/16] 0.0, 128
    %1390 = vxpose.xlu0.b32.cont [7/16] 0.0, 128
    %1391 = vxpose.xlu0.b32.cont [8/16] 0.0, 128
    %1392 = vxpose.xlu0.b32.cont [9/16] 0.0, 128
    %1393 = vxpose.xlu0.b32.cont [10/16] 0.0, 128
    %1394 = vxpose.xlu0.b32.cont [11/16] 0.0, 128
    %1395 = vxpose.xlu0.b32.cont [12/16] 0.0, 128
    %1396 = vxpose.xlu0.b32.cont [13/16] 0.0, 128
    %1397 = vxpose.xlu0.b32.cont [14/16] 0.0, 128
    %1398 = vxpose.xlu0.b32.cont [15/16] 0.0, 128
    %1399 = vxpose.xlu0.b32.end [16/16] 0.0, 128
    %v1400 = vpop.trf.xlu0
    %v1401 = vpop.trf.xlu0
    %v1402 = vpop.trf.xlu0
    %v1403 = vpop.trf.xlu0
    %v1404 = vpop.trf.xlu0
    %v1405 = vpop.trf.xlu0
    %v1406 = vpop.trf.xlu0
    %v1407 = vpop.trf.xlu0
    %v1408 = vpop.trf.xlu0
    %v1409 = vpop.trf.xlu0
    %v1410 = vpop.trf.xlu0
    %v1411 = vpop.trf.xlu0
    %v1412 = vpop.trf.xlu0
    %v1413 = vpop.trf.xlu0
    %v1414 = vpop.trf.xlu0
    %v1415 = vpop.trf.xlu0
    %v1416 = vrot.slane %v920, 4
    %v1418 = vsel %vm1030, %v1400, 0
    %v1421 = vsel %vm1030, %v1401, 0
    %v1423 = vsel %vm245, %v1416, 0
    %1425 = vmatpush.msra.mxu0 0.0
    %1426 = vmatpush.msra.mxu0 0.0
    %1427 = vmatpush.msra.mxu0 0.0
    %1428 = vmatpush.msra.mxu0 0.0
    %1429 = vmatpush.msra.mxu0 0.0
    %1430 = vmatpush.msra.mxu0 0.0
    %1431 = vmatpush.msra.mxu0 0.0
    %1432 = vmatpush.msra.mxu0 0.0
    %1433 = vmatpush.msra.mxu0 0.0
    %1434 = vmatpush.msra.mxu0 0.0
    %1435 = vmatpush.msra.mxu0 0.0
    %1436 = vmatpush.msra.mxu0 0.0
    %1437 = vmatpush.msra.mxu0 0.0
    %1438 = vmatpush.msra.mxu0 0.0
    %1439 = vmatpush.msra.mxu0 0.0
    %1440 = vmatpush.msra.mxu0 %v1423
    %1441 = vmatmul.f32.gmra.mxu0 %v1418
    %v1442 = vpop.f32.mrf.mxu0
    %v1443 = vadd.f32 0.0, %v1442
    %1444 = vmatmul.f32.gmra.mxu0 %v1421
    %v1445 = vpop.f32.mrf.mxu0
    %v1446 = vadd.f32 0.0, %v1445
    %1447 = vdwg.mxu0
    %v1448 = vmul.f32 %v1354, %v979
    %v1449 = vmul.f32 %v1355, %v981
    %v1450 = vadd.f32 %v1448, %v1443
    %v1451 = vadd.f32 %v1449, %v1446
    %1452 = vrot.lane.b32.xlu0 %v1380, 48
    %v1453 = vpop.permute.xlu0 %1452
    %v1454 = vsel %vm1069, %v1453, 0
    %1456 = vmatpush.msra.mxu0 0.0
    %1457 = vmatpush.msra.mxu0 0.0
    %1458 = vmatpush.msra.mxu0 0.0
    %1459 = vmatpush.msra.mxu0 0.0
    %1460 = vmatpush.msra.mxu0 0.0
    %1461 = vmatpush.msra.mxu0 0.0
    %1462 = vmatpush.msra.mxu0 0.0
    %1463 = vmatpush.msra.mxu0 0.0
    %1464 = vmatpush.msra.mxu0 0.0
    %1465 = vmatpush.msra.mxu0 0.0
    %1466 = vmatpush.msra.mxu0 0.0
    %1467 = vmatpush.msra.mxu0 0.0
    %1468 = vmatpush.msra.mxu0 0.0
    %1469 = vmatpush.msra.mxu0 0.0
    %1470 = vmatpush.msra.mxu0 %v1451
    %1471 = vmatpush.msra.mxu0 %v1450
    %1472 = vmatmul.f32.gmra.mxu0 %v1454
    %v1473 = vpop.f32.mrf.mxu0
    %v1474 = vadd.f32 0.0, %v1473
    %1475 = vdwg.mxu0
    %v1476 = vrot.slane %v885, 5
    %1477 = vrot.lane.b32.xlu0 %v1476, 64
    %v1478 = vpop.permute.xlu0 %1477
    %1480 = vxpose.xlu0.b32.start [1/16] %v1478, 128
    %1481 = vxpose.xlu0.b32.cont [2/16] 0.0, 128
    %1482 = vxpose.xlu0.b32.cont [3/16] 0.0, 128
    %1483 = vxpose.xlu0.b32.cont [4/16] 0.0, 128
    %1484 = vxpose.xlu0.b32.cont [5/16] 0.0, 128
    %1485 = vxpose.xlu0.b32.cont [6/16] 0.0, 128
    %1486 = vxpose.xlu0.b32.cont [7/16] 0.0, 128
    %1487 = vxpose.xlu0.b32.cont [8/16] 0.0, 128
    %1488 = vxpose.xlu0.b32.cont [9/16] 0.0, 128
    %1489 = vxpose.xlu0.b32.cont [10/16] 0.0, 128
    %1490 = vxpose.xlu0.b32.cont [11/16] 0.0, 128
    %1491 = vxpose.xlu0.b32.cont [12/16] 0.0, 128
    %1492 = vxpose.xlu0.b32.cont [13/16] 0.0, 128
    %1493 = vxpose.xlu0.b32.cont [14/16] 0.0, 128
    %1494 = vxpose.xlu0.b32.cont [15/16] 0.0, 128
    %1495 = vxpose.xlu0.b32.end [16/16] 0.0, 128
    %v1496 = vpop.trf.xlu0
    %v1497 = vpop.trf.xlu0
    %v1498 = vpop.trf.xlu0
    %v1499 = vpop.trf.xlu0
    %v1500 = vpop.trf.xlu0
    %v1501 = vpop.trf.xlu0
    %v1502 = vpop.trf.xlu0
    %v1503 = vpop.trf.xlu0
    %v1504 = vpop.trf.xlu0
    %v1505 = vpop.trf.xlu0
    %v1506 = vpop.trf.xlu0
    %v1507 = vpop.trf.xlu0
    %v1508 = vpop.trf.xlu0
    %v1509 = vpop.trf.xlu0
    %v1510 = vpop.trf.xlu0
    %v1511 = vpop.trf.xlu0
    %v1512 = vrot.slane %v920, 5
    %v1514 = vsel %vm1030, %v1496, 0
    %v1517 = vsel %vm1030, %v1497, 0
    %v1519 = vsel %vm245, %v1512, 0
    %1521 = vmatpush.msra.mxu0 0.0
    %1522 = vmatpush.msra.mxu0 0.0
    %1523 = vmatpush.msra.mxu0 0.0
    %1524 = vmatpush.msra.mxu0 0.0
    %1525 = vmatpush.msra.mxu0 0.0
    %1526 = vmatpush.msra.mxu0 0.0
    %1527 = vmatpush.msra.mxu0 0.0
    %1528 = vmatpush.msra.mxu0 0.0
    %1529 = vmatpush.msra.mxu0 0.0
    %1530 = vmatpush.msra.mxu0 0.0
    %1531 = vmatpush.msra.mxu0 0.0
    %1532 = vmatpush.msra.mxu0 0.0
    %1533 = vmatpush.msra.mxu0 0.0
    %1534 = vmatpush.msra.mxu0 0.0
    %1535 = vmatpush.msra.mxu0 0.0
    %1536 = vmatpush.msra.mxu0 %v1519
    %1537 = vmatmul.f32.gmra.mxu0 %v1514
    %v1538 = vpop.f32.mrf.mxu0
    %v1539 = vadd.f32 0.0, %v1538
    %1540 = vmatmul.f32.gmra.mxu0 %v1517
    %v1541 = vpop.f32.mrf.mxu0
    %v1542 = vadd.f32 0.0, %v1541
    %1543 = vdwg.mxu0
    %v1544 = vmul.f32 %v1450, %v983
    %v1545 = vmul.f32 %v1451, %v985
    %v1546 = vadd.f32 %v1544, %v1539
    %v1547 = vadd.f32 %v1545, %v1542
    %1548 = vrot.lane.b32.xlu0 %v1476, 48
    %v1549 = vpop.permute.xlu0 %1548
    %v1550 = vsel %vm1069, %v1549, 0
    %1552 = vmatpush.msra.mxu0 0.0
    %1553 = vmatpush.msra.mxu0 0.0
    %1554 = vmatpush.msra.mxu0 0.0
    %1555 = vmatpush.msra.mxu0 0.0
    %1556 = vmatpush.msra.mxu0 0.0
    %1557 = vmatpush.msra.mxu0 0.0
    %1558 = vmatpush.msra.mxu0 0.0
    %1559 = vmatpush.msra.mxu0 0.0
    %1560 = vmatpush.msra.mxu0 0.0
    %1561 = vmatpush.msra.mxu0 0.0
    %1562 = vmatpush.msra.mxu0 0.0
    %1563 = vmatpush.msra.mxu0 0.0
    %1564 = vmatpush.msra.mxu0 0.0
    %1565 = vmatpush.msra.mxu0 0.0
    %1566 = vmatpush.msra.mxu0 %v1547
    %1567 = vmatpush.msra.mxu0 %v1546
    %1568 = vmatmul.f32.gmra.mxu0 %v1550
    %v1569 = vpop.f32.mrf.mxu0
    %v1570 = vadd.f32 0.0, %v1569
    %1571 = vdwg.mxu0
    %v1572 = vrot.slane %v885, 6
    %1573 = vrot.lane.b32.xlu0 %v1572, 64
    %v1574 = vpop.permute.xlu0 %1573
    %1576 = vxpose.xlu0.b32.start [1/16] %v1574, 128
    %1577 = vxpose.xlu0.b32.cont [2/16] 0.0, 128
    %1578 = vxpose.xlu0.b32.cont [3/16] 0.0, 128
    %1579 = vxpose.xlu0.b32.cont [4/16] 0.0, 128
    %1580 = vxpose.xlu0.b32.cont [5/16] 0.0, 128
    %1581 = vxpose.xlu0.b32.cont [6/16] 0.0, 128
    %1582 = vxpose.xlu0.b32.cont [7/16] 0.0, 128
    %1583 = vxpose.xlu0.b32.cont [8/16] 0.0, 128
    %1584 = vxpose.xlu0.b32.cont [9/16] 0.0, 128
    %1585 = vxpose.xlu0.b32.cont [10/16] 0.0, 128
    %1586 = vxpose.xlu0.b32.cont [11/16] 0.0, 128
    %1587 = vxpose.xlu0.b32.cont [12/16] 0.0, 128
    %1588 = vxpose.xlu0.b32.cont [13/16] 0.0, 128
    %1589 = vxpose.xlu0.b32.cont [14/16] 0.0, 128
    %1590 = vxpose.xlu0.b32.cont [15/16] 0.0, 128
    %1591 = vxpose.xlu0.b32.end [16/16] 0.0, 128
    %v1592 = vpop.trf.xlu0
    %v1593 = vpop.trf.xlu0
    %v1594 = vpop.trf.xlu0
    %v1595 = vpop.trf.xlu0
    %v1596 = vpop.trf.xlu0
    %v1597 = vpop.trf.xlu0
    %v1598 = vpop.trf.xlu0
    %v1599 = vpop.trf.xlu0
    %v1600 = vpop.trf.xlu0
    %v1601 = vpop.trf.xlu0
    %v1602 = vpop.trf.xlu0
    %v1603 = vpop.trf.xlu0
    %v1604 = vpop.trf.xlu0
    %v1605 = vpop.trf.xlu0
    %v1606 = vpop.trf.xlu0
    %v1607 = vpop.trf.xlu0
    %v1608 = vrot.slane %v920, 6
    %v1610 = vsel %vm1030, %v1592, 0
    %v1613 = vsel %vm1030, %v1593, 0
    %v1615 = vsel %vm245, %v1608, 0
    %1617 = vmatpush.msra.mxu0 0.0
    %1618 = vmatpush.msra.mxu0 0.0
    %1619 = vmatpush.msra.mxu0 0.0
    %1620 = vmatpush.msra.mxu0 0.0
    %1621 = vmatpush.msra.mxu0 0.0
    %1622 = vmatpush.msra.mxu0 0.0
    %1623 = vmatpush.msra.mxu0 0.0
    %1624 = vmatpush.msra.mxu0 0.0
    %1625 = vmatpush.msra.mxu0 0.0
    %1626 = vmatpush.msra.mxu0 0.0
    %1627 = vmatpush.msra.mxu0 0.0
    %1628 = vmatpush.msra.mxu0 0.0
    %1629 = vmatpush.msra.mxu0 0.0
    %1630 = vmatpush.msra.mxu0 0.0
    %1631 = vmatpush.msra.mxu0 0.0
    %1632 = vmatpush.msra.mxu0 %v1615
    %1633 = vmatmul.f32.gmra.mxu0 %v1610
    %v1634 = vpop.f32.mrf.mxu0
    %v1635 = vadd.f32 0.0, %v1634
    %1636 = vmatmul.f32.gmra.mxu0 %v1613
    %v1637 = vpop.f32.mrf.mxu0
    %v1638 = vadd.f32 0.0, %v1637
    %1639 = vdwg.mxu0
    %v1640 = vmul.f32 %v1546, %v987
    %v1641 = vmul.f32 %v1547, %v989
    %v1642 = vadd.f32 %v1640, %v1635
    %v1643 = vadd.f32 %v1641, %v1638
    %1644 = vrot.lane.b32.xlu0 %v1572, 48
    %v1645 = vpop.permute.xlu0 %1644
    %v1646 = vsel %vm1069, %v1645, 0
    %1648 = vmatpush.msra.mxu0 0.0
    %1649 = vmatpush.msra.mxu0 0.0
    %1650 = vmatpush.msra.mxu0 0.0
    %1651 = vmatpush.msra.mxu0 0.0
    %1652 = vmatpush.msra.mxu0 0.0
    %1653 = vmatpush.msra.mxu0 0.0
    %1654 = vmatpush.msra.mxu0 0.0
    %1655 = vmatpush.msra.mxu0 0.0
    %1656 = vmatpush.msra.mxu0 0.0
    %1657 = vmatpush.msra.mxu0 0.0
    %1658 = vmatpush.msra.mxu0 0.0
    %1659 = vmatpush.msra.mxu0 0.0
    %1660 = vmatpush.msra.mxu0 0.0
    %1661 = vmatpush.msra.mxu0 0.0
    %1662 = vmatpush.msra.mxu0 %v1643
    %1663 = vmatpush.msra.mxu0 %v1642
    %1664 = vmatmul.f32.gmra.mxu0 %v1646
    %v1665 = vpop.f32.mrf.mxu0
    %v1666 = vadd.f32 0.0, %v1665
    %1667 = vdwg.mxu0
    %v1668 = vrot.slane %v885, 7
    %1669 = vrot.lane.b32.xlu0 %v1668, 64
    %v1670 = vpop.permute.xlu0 %1669
    %1672 = vxpose.xlu0.b32.start [1/16] %v1670, 128
    %1673 = vxpose.xlu0.b32.cont [2/16] 0.0, 128
    %1674 = vxpose.xlu0.b32.cont [3/16] 0.0, 128
    %1675 = vxpose.xlu0.b32.cont [4/16] 0.0, 128
    %1676 = vxpose.xlu0.b32.cont [5/16] 0.0, 128
    %1677 = vxpose.xlu0.b32.cont [6/16] 0.0, 128
    %1678 = vxpose.xlu0.b32.cont [7/16] 0.0, 128
    %1679 = vxpose.xlu0.b32.cont [8/16] 0.0, 128
    %1680 = vxpose.xlu0.b32.cont [9/16] 0.0, 128
    %1681 = vxpose.xlu0.b32.cont [10/16] 0.0, 128
    %1682 = vxpose.xlu0.b32.cont [11/16] 0.0, 128
    %1683 = vxpose.xlu0.b32.cont [12/16] 0.0, 128
    %1684 = vxpose.xlu0.b32.cont [13/16] 0.0, 128
    %1685 = vxpose.xlu0.b32.cont [14/16] 0.0, 128
    %1686 = vxpose.xlu0.b32.cont [15/16] 0.0, 128
    %1687 = vxpose.xlu0.b32.end [16/16] 0.0, 128
    %v1688 = vpop.trf.xlu0
    %v1689 = vpop.trf.xlu0
    %v1690 = vpop.trf.xlu0
    %v1691 = vpop.trf.xlu0
    %v1692 = vpop.trf.xlu0
    %v1693 = vpop.trf.xlu0
    %v1694 = vpop.trf.xlu0
    %v1695 = vpop.trf.xlu0
    %v1696 = vpop.trf.xlu0
    %v1697 = vpop.trf.xlu0
    %v1698 = vpop.trf.xlu0
    %v1699 = vpop.trf.xlu0
    %v1700 = vpop.trf.xlu0
    %v1701 = vpop.trf.xlu0
    %v1702 = vpop.trf.xlu0
    %v1703 = vpop.trf.xlu0
    %v1704 = vrot.slane %v920, 7
    %v1706 = vsel %vm1030, %v1688, 0
    %v1709 = vsel %vm1030, %v1689, 0
    %v1711 = vsel %vm245, %v1704, 0
    %1713 = vmatpush.msra.mxu0 0.0
    %1714 = vmatpush.msra.mxu0 0.0
    %1715 = vmatpush.msra.mxu0 0.0
    %1716 = vmatpush.msra.mxu0 0.0
    %1717 = vmatpush.msra.mxu0 0.0
    %1718 = vmatpush.msra.mxu0 0.0
    %1719 = vmatpush.msra.mxu0 0.0
    %1720 = vmatpush.msra.mxu0 0.0
    %1721 = vmatpush.msra.mxu0 0.0
    %1722 = vmatpush.msra.mxu0 0.0
    %1723 = vmatpush.msra.mxu0 0.0
    %1724 = vmatpush.msra.mxu0 0.0
    %1725 = vmatpush.msra.mxu0 0.0
    %1726 = vmatpush.msra.mxu0 0.0
    %1727 = vmatpush.msra.mxu0 0.0
    %1728 = vmatpush.msra.mxu0 %v1711
    %1729 = vmatmul.f32.gmra.mxu0 %v1706
    %v1730 = vpop.f32.mrf.mxu0
    %v1731 = vadd.f32 0.0, %v1730
    %1732 = vmatmul.f32.gmra.mxu0 %v1709
    %v1733 = vpop.f32.mrf.mxu0
    %v1734 = vadd.f32 0.0, %v1733
    %1735 = vdwg.mxu0
    %v1736 = vmul.f32 %v1642, %v991
    %v1737 = vmul.f32 %v1643, %v993
    %v1738 = vadd.f32 %v1736, %v1731
    %v1739 = vadd.f32 %v1737, %v1734
    %1740 = vrot.lane.b32.xlu0 %v1668, 48
    %v1741 = vpop.permute.xlu0 %1740
    %v1742 = vsel %vm1069, %v1741, 0
    %1744 = vmatpush.msra.mxu0 0.0
    %1745 = vmatpush.msra.mxu0 0.0
    %1746 = vmatpush.msra.mxu0 0.0
    %1747 = vmatpush.msra.mxu0 0.0
    %1748 = vmatpush.msra.mxu0 0.0
    %1749 = vmatpush.msra.mxu0 0.0
    %1750 = vmatpush.msra.mxu0 0.0
    %1751 = vmatpush.msra.mxu0 0.0
    %1752 = vmatpush.msra.mxu0 0.0
    %1753 = vmatpush.msra.mxu0 0.0
    %1754 = vmatpush.msra.mxu0 0.0
    %1755 = vmatpush.msra.mxu0 0.0
    %1756 = vmatpush.msra.mxu0 0.0
    %1757 = vmatpush.msra.mxu0 0.0
    %1758 = vmatpush.msra.mxu0 %v1739
    %1759 = vmatpush.msra.mxu0 %v1738
    %1760 = vmatmul.f32.gmra.mxu0 %v1742
    %v1761 = vpop.f32.mrf.mxu0
    %v1762 = vadd.f32 0.0, %v1761
    %1763 = vdwg.mxu0
    %v1765 = vrot.slane %v1186, 7
    %v1768 = vrot.slane %v1282, 6
    %v1771 = vrot.slane %v1378, 5
    %v1774 = vrot.slane %v1474, 4
    %v1777 = vrot.slane %v1570, 3
    %v1780 = vrot.slane %v1666, 2
    %v1783 = vrot.slane %v1762, 1
    %v1785 = vsel %vm245, %v1090, %v1765
    %v1786 = vsel %vm247, %v1785, %v1768
    %v1787 = vsel %vm249, %v1786, %v1771
    %v1788 = vsel %vm251, %v1787, %v1774
    %v1789 = vsel %vm253, %v1788, %v1777
    %v1790 = vsel %vm255, %v1789, %v1780
    %v1791 = vsel %vm257, %v1790, %v1783
    %v1793 = vrot.slane %v919, 1
    %v1794 = vrot.slane %v919, 2
    %v1795 = vrot.slane %v919, 3
    %v1796 = vrot.slane %v919, 4
    %v1797 = vrot.slane %v919, 5
    %v1798 = vrot.slane %v919, 6
    %v1799 = vrot.slane %v919, 7
    %v1800 = vperm.slane %v919, 0
    %v1801 = vperm.slane %v1793, 0
    %v1802 = vperm.slane %v1794, 0
    %v1803 = vperm.slane %v1795, 0
    %v1804 = vperm.slane %v1796, 0
    %v1805 = vperm.slane %v1797, 0
    %v1806 = vperm.slane %v1798, 0
    %v1807 = vperm.slane %v1799, 0
    %v1816 = vmul.f32 %v1800, %v669
    %v1817 = vmul.f32 %v1800, %v670
    %v1818 = vmul.f32 %v1801, %v669
    %v1819 = vmul.f32 %v1801, %v670
    %v1820 = vmul.f32 %v1802, %v669
    %v1821 = vmul.f32 %v1802, %v670
    %v1822 = vmul.f32 %v1803, %v669
    %v1823 = vmul.f32 %v1803, %v670
    %v1824 = vmul.f32 %v1804, %v669
    %v1825 = vmul.f32 %v1804, %v670
    %v1826 = vmul.f32 %v1805, %v669
    %v1827 = vmul.f32 %v1805, %v670
    %v1828 = vmul.f32 %v1806, %v669
    %v1829 = vmul.f32 %v1806, %v670
    %v1830 = vmul.f32 %v1807, %v669
    %v1831 = vmul.f32 %v1807, %v670
    %v1832 = vmul.f32 %v1816, 1.442695
    %v1833 = vpow.pop %v1832
    %v1834 = vmul.f32 %v1817, 1.442695
    %v1835 = vpow.pop %v1834
    %v1836 = vmul.f32 %v1818, 1.442695
    %v1837 = vpow.pop %v1836
    %v1838 = vmul.f32 %v1819, 1.442695
    %v1839 = vpow.pop %v1838
    %v1840 = vmul.f32 %v1820, 1.442695
    %v1841 = vpow.pop %v1840
    %v1842 = vmul.f32 %v1821, 1.442695
    %v1843 = vpow.pop %v1842
    %v1844 = vmul.f32 %v1822, 1.442695
    %v1845 = vpow.pop %v1844
    %v1846 = vmul.f32 %v1823, 1.442695
    %v1847 = vpow.pop %v1846
    %v1848 = vmul.f32 %v1824, 1.442695
    %v1849 = vpow.pop %v1848
    %v1850 = vmul.f32 %v1825, 1.442695
    %v1851 = vpow.pop %v1850
    %v1852 = vmul.f32 %v1826, 1.442695
    %v1853 = vpow.pop %v1852
    %v1854 = vmul.f32 %v1827, 1.442695
    %v1855 = vpow.pop %v1854
    %v1856 = vmul.f32 %v1828, 1.442695
    %v1857 = vpow.pop %v1856
    %v1858 = vmul.f32 %v1829, 1.442695
    %v1859 = vpow.pop %v1858
    %v1860 = vmul.f32 %v1830, 1.442695
    %v1861 = vpow.pop %v1860
    %v1862 = vmul.f32 %v1831, 1.442695
    %v1863 = vpow.pop %v1862
    %1865 = vrot.lane.b32.xlu0 %v887, 64
    %v1866 = vpop.permute.xlu0 %1865
    %1868 = vxpose.xlu0.b32.start [1/16] %v1866, 128
    %1869 = vxpose.xlu0.b32.cont [2/16] 0.0, 128
    %1870 = vxpose.xlu0.b32.cont [3/16] 0.0, 128
    %1871 = vxpose.xlu0.b32.cont [4/16] 0.0, 128
    %1872 = vxpose.xlu0.b32.cont [5/16] 0.0, 128
    %1873 = vxpose.xlu0.b32.cont [6/16] 0.0, 128
    %1874 = vxpose.xlu0.b32.cont [7/16] 0.0, 128
    %1875 = vxpose.xlu0.b32.cont [8/16] 0.0, 128
    %1876 = vxpose.xlu0.b32.cont [9/16] 0.0, 128
    %1877 = vxpose.xlu0.b32.cont [10/16] 0.0, 128
    %1878 = vxpose.xlu0.b32.cont [11/16] 0.0, 128
    %1879 = vxpose.xlu0.b32.cont [12/16] 0.0, 128
    %1880 = vxpose.xlu0.b32.cont [13/16] 0.0, 128
    %1881 = vxpose.xlu0.b32.cont [14/16] 0.0, 128
    %1882 = vxpose.xlu0.b32.cont [15/16] 0.0, 128
    %1883 = vxpose.xlu0.b32.end [16/16] 0.0, 128
    %v1884 = vpop.trf.xlu0
    %v1885 = vpop.trf.xlu0
    %v1886 = vpop.trf.xlu0
    %v1887 = vpop.trf.xlu0
    %v1888 = vpop.trf.xlu0
    %v1889 = vpop.trf.xlu0
    %v1890 = vpop.trf.xlu0
    %v1891 = vpop.trf.xlu0
    %v1892 = vpop.trf.xlu0
    %v1893 = vpop.trf.xlu0
    %v1894 = vpop.trf.xlu0
    %v1895 = vpop.trf.xlu0
    %v1896 = vpop.trf.xlu0
    %v1897 = vpop.trf.xlu0
    %v1898 = vpop.trf.xlu0
    %v1899 = vpop.trf.xlu0
    %v1901 = vsel %vm1030, %v1884, 0
    %v1904 = vsel %vm1030, %v1885, 0
    %v1907 = vsel %vm245, %v921, 0
    %1909 = vmatpush.msra.mxu0 0.0
    %1910 = vmatpush.msra.mxu0 0.0
    %1911 = vmatpush.msra.mxu0 0.0
    %1912 = vmatpush.msra.mxu0 0.0
    %1913 = vmatpush.msra.mxu0 0.0
    %1914 = vmatpush.msra.mxu0 0.0
    %1915 = vmatpush.msra.mxu0 0.0
    %1916 = vmatpush.msra.mxu0 0.0
    %1917 = vmatpush.msra.mxu0 0.0
    %1918 = vmatpush.msra.mxu0 0.0
    %1919 = vmatpush.msra.mxu0 0.0
    %1920 = vmatpush.msra.mxu0 0.0
    %1921 = vmatpush.msra.mxu0 0.0
    %1922 = vmatpush.msra.mxu0 0.0
    %1923 = vmatpush.msra.mxu0 0.0
    %1924 = vmatpush.msra.mxu0 %v1907
    %1925 = vmatmul.f32.gmra.mxu0 %v1901
    %v1926 = vpop.f32.mrf.mxu0
    %v1927 = vadd.f32 0.0, %v1926
    %1928 = vmatmul.f32.gmra.mxu0 %v1904
    %v1929 = vpop.f32.mrf.mxu0
    %v1930 = vadd.f32 0.0, %v1929
    %1931 = vdwg.mxu0
    %v1932 = vmul.f32 %v1833, 0.0
    %v1933 = vmul.f32 %v1835, 0.0
    %v1934 = vadd.f32 %v1932, %v1927
    %v1935 = vadd.f32 %v1933, %v1930
    %1936 = vrot.lane.b32.xlu0 %v887, 48
    %v1937 = vpop.permute.xlu0 %1936
    %v1938 = vsel %vm1069, %v1937, 0
    %1940 = vmatpush.msra.mxu0 0.0
    %1941 = vmatpush.msra.mxu0 0.0
    %1942 = vmatpush.msra.mxu0 0.0
    %1943 = vmatpush.msra.mxu0 0.0
    %1944 = vmatpush.msra.mxu0 0.0
    %1945 = vmatpush.msra.mxu0 0.0
    %1946 = vmatpush.msra.mxu0 0.0
    %1947 = vmatpush.msra.mxu0 0.0
    %1948 = vmatpush.msra.mxu0 0.0
    %1949 = vmatpush.msra.mxu0 0.0
    %1950 = vmatpush.msra.mxu0 0.0
    %1951 = vmatpush.msra.mxu0 0.0
    %1952 = vmatpush.msra.mxu0 0.0
    %1953 = vmatpush.msra.mxu0 0.0
    %1954 = vmatpush.msra.mxu0 %v1935
    %1955 = vmatpush.msra.mxu0 %v1934
    %1956 = vmatmul.f32.gmra.mxu0 %v1938
    %v1957 = vpop.f32.mrf.mxu0
    %v1958 = vadd.f32 0.0, %v1957
    %1959 = vdwg.mxu0
    %v1960 = vrot.slane %v887, 1
    %1961 = vrot.lane.b32.xlu0 %v1960, 64
    %v1962 = vpop.permute.xlu0 %1961
    %1964 = vxpose.xlu0.b32.start [1/16] %v1962, 128
    %1965 = vxpose.xlu0.b32.cont [2/16] 0.0, 128
    %1966 = vxpose.xlu0.b32.cont [3/16] 0.0, 128
    %1967 = vxpose.xlu0.b32.cont [4/16] 0.0, 128
    %1968 = vxpose.xlu0.b32.cont [5/16] 0.0, 128
    %1969 = vxpose.xlu0.b32.cont [6/16] 0.0, 128
    %1970 = vxpose.xlu0.b32.cont [7/16] 0.0, 128
    %1971 = vxpose.xlu0.b32.cont [8/16] 0.0, 128
    %1972 = vxpose.xlu0.b32.cont [9/16] 0.0, 128
    %1973 = vxpose.xlu0.b32.cont [10/16] 0.0, 128
    %1974 = vxpose.xlu0.b32.cont [11/16] 0.0, 128
    %1975 = vxpose.xlu0.b32.cont [12/16] 0.0, 128
    %1976 = vxpose.xlu0.b32.cont [13/16] 0.0, 128
    %1977 = vxpose.xlu0.b32.cont [14/16] 0.0, 128
    %1978 = vxpose.xlu0.b32.cont [15/16] 0.0, 128
    %1979 = vxpose.xlu0.b32.end [16/16] 0.0, 128
    %v1980 = vpop.trf.xlu0
    %v1981 = vpop.trf.xlu0
    %v1982 = vpop.trf.xlu0
    %v1983 = vpop.trf.xlu0
    %v1984 = vpop.trf.xlu0
    %v1985 = vpop.trf.xlu0
    %v1986 = vpop.trf.xlu0
    %v1987 = vpop.trf.xlu0
    %v1988 = vpop.trf.xlu0
    %v1989 = vpop.trf.xlu0
    %v1990 = vpop.trf.xlu0
    %v1991 = vpop.trf.xlu0
    %v1992 = vpop.trf.xlu0
    %v1993 = vpop.trf.xlu0
    %v1994 = vpop.trf.xlu0
    %v1995 = vpop.trf.xlu0
    %v1996 = vrot.slane %v921, 1
    %v1998 = vsel %vm1030, %v1980, 0
    %v2001 = vsel %vm1030, %v1981, 0
    %v2003 = vsel %vm245, %v1996, 0
    %2005 = vmatpush.msra.mxu0 0.0
    %2006 = vmatpush.msra.mxu0 0.0
    %2007 = vmatpush.msra.mxu0 0.0
    %2008 = vmatpush.msra.mxu0 0.0
    %2009 = vmatpush.msra.mxu0 0.0
    %2010 = vmatpush.msra.mxu0 0.0
    %2011 = vmatpush.msra.mxu0 0.0
    %2012 = vmatpush.msra.mxu0 0.0
    %2013 = vmatpush.msra.mxu0 0.0
    %2014 = vmatpush.msra.mxu0 0.0
    %2015 = vmatpush.msra.mxu0 0.0
    %2016 = vmatpush.msra.mxu0 0.0
    %2017 = vmatpush.msra.mxu0 0.0
    %2018 = vmatpush.msra.mxu0 0.0
    %2019 = vmatpush.msra.mxu0 0.0
    %2020 = vmatpush.msra.mxu0 %v2003
    %2021 = vmatmul.f32.gmra.mxu0 %v1998
    %v2022 = vpop.f32.mrf.mxu0
    %v2023 = vadd.f32 0.0, %v2022
    %2024 = vmatmul.f32.gmra.mxu0 %v2001
    %v2025 = vpop.f32.mrf.mxu0
    %v2026 = vadd.f32 0.0, %v2025
    %2027 = vdwg.mxu0
    %v2028 = vmul.f32 %v1934, %v1837
    %v2029 = vmul.f32 %v1935, %v1839
    %v2030 = vadd.f32 %v2028, %v2023
    %v2031 = vadd.f32 %v2029, %v2026
    %2032 = vrot.lane.b32.xlu0 %v1960, 48
    %v2033 = vpop.permute.xlu0 %2032
    %v2034 = vsel %vm1069, %v2033, 0
    %2036 = vmatpush.msra.mxu0 0.0
    %2037 = vmatpush.msra.mxu0 0.0
    %2038 = vmatpush.msra.mxu0 0.0
    %2039 = vmatpush.msra.mxu0 0.0
    %2040 = vmatpush.msra.mxu0 0.0
    %2041 = vmatpush.msra.mxu0 0.0
    %2042 = vmatpush.msra.mxu0 0.0
    %2043 = vmatpush.msra.mxu0 0.0
    %2044 = vmatpush.msra.mxu0 0.0
    %2045 = vmatpush.msra.mxu0 0.0
    %2046 = vmatpush.msra.mxu0 0.0
    %2047 = vmatpush.msra.mxu0 0.0
    %2048 = vmatpush.msra.mxu0 0.0
    %2049 = vmatpush.msra.mxu0 0.0
    %2050 = vmatpush.msra.mxu0 %v2031
    %2051 = vmatpush.msra.mxu0 %v2030
    %2052 = vmatmul.f32.gmra.mxu0 %v2034
    %v2053 = vpop.f32.mrf.mxu0
    %v2054 = vadd.f32 0.0, %v2053
    %2055 = vdwg.mxu0
    %v2056 = vrot.slane %v887, 2
    %2057 = vrot.lane.b32.xlu0 %v2056, 64
    %v2058 = vpop.permute.xlu0 %2057
    %2060 = vxpose.xlu0.b32.start [1/16] %v2058, 128
    %2061 = vxpose.xlu0.b32.cont [2/16] 0.0, 128
    %2062 = vxpose.xlu0.b32.cont [3/16] 0.0, 128
    %2063 = vxpose.xlu0.b32.cont [4/16] 0.0, 128
    %2064 = vxpose.xlu0.b32.cont [5/16] 0.0, 128
    %2065 = vxpose.xlu0.b32.cont [6/16] 0.0, 128
    %2066 = vxpose.xlu0.b32.cont [7/16] 0.0, 128
    %2067 = vxpose.xlu0.b32.cont [8/16] 0.0, 128
    %2068 = vxpose.xlu0.b32.cont [9/16] 0.0, 128
    %2069 = vxpose.xlu0.b32.cont [10/16] 0.0, 128
    %2070 = vxpose.xlu0.b32.cont [11/16] 0.0, 128
    %2071 = vxpose.xlu0.b32.cont [12/16] 0.0, 128
    %2072 = vxpose.xlu0.b32.cont [13/16] 0.0, 128
    %2073 = vxpose.xlu0.b32.cont [14/16] 0.0, 128
    %2074 = vxpose.xlu0.b32.cont [15/16] 0.0, 128
    %2075 = vxpose.xlu0.b32.end [16/16] 0.0, 128
    %v2076 = vpop.trf.xlu0
    %v2077 = vpop.trf.xlu0
    %v2078 = vpop.trf.xlu0
    %v2079 = vpop.trf.xlu0
    %v2080 = vpop.trf.xlu0
    %v2081 = vpop.trf.xlu0
    %v2082 = vpop.trf.xlu0
    %v2083 = vpop.trf.xlu0
    %v2084 = vpop.trf.xlu0
    %v2085 = vpop.trf.xlu0
    %v2086 = vpop.trf.xlu0
    %v2087 = vpop.trf.xlu0
    %v2088 = vpop.trf.xlu0
    %v2089 = vpop.trf.xlu0
    %v2090 = vpop.trf.xlu0
    %v2091 = vpop.trf.xlu0
    %v2092 = vrot.slane %v921, 2
    %v2094 = vsel %vm1030, %v2076, 0
    %v2097 = vsel %vm1030, %v2077, 0
    %v2099 = vsel %vm245, %v2092, 0
    %2101 = vmatpush.msra.mxu0 0.0
    %2102 = vmatpush.msra.mxu0 0.0
    %2103 = vmatpush.msra.mxu0 0.0
    %2104 = vmatpush.msra.mxu0 0.0
    %2105 = vmatpush.msra.mxu0 0.0
    %2106 = vmatpush.msra.mxu0 0.0
    %2107 = vmatpush.msra.mxu0 0.0
    %2108 = vmatpush.msra.mxu0 0.0
    %2109 = vmatpush.msra.mxu0 0.0
    %2110 = vmatpush.msra.mxu0 0.0
    %2111 = vmatpush.msra.mxu0 0.0
    %2112 = vmatpush.msra.mxu0 0.0
    %2113 = vmatpush.msra.mxu0 0.0
    %2114 = vmatpush.msra.mxu0 0.0
    %2115 = vmatpush.msra.mxu0 0.0
    %2116 = vmatpush.msra.mxu0 %v2099
    %2117 = vmatmul.f32.gmra.mxu0 %v2094
    %v2118 = vpop.f32.mrf.mxu0
    %v2119 = vadd.f32 0.0, %v2118
    %2120 = vmatmul.f32.gmra.mxu0 %v2097
    %v2121 = vpop.f32.mrf.mxu0
    %v2122 = vadd.f32 0.0, %v2121
    %2123 = vdwg.mxu0
    %v2124 = vmul.f32 %v2030, %v1841
    %v2125 = vmul.f32 %v2031, %v1843
    %v2126 = vadd.f32 %v2124, %v2119
    %v2127 = vadd.f32 %v2125, %v2122
    %2128 = vrot.lane.b32.xlu0 %v2056, 48
    %v2129 = vpop.permute.xlu0 %2128
    %v2130 = vsel %vm1069, %v2129, 0
    %2132 = vmatpush.msra.mxu0 0.0
    %2133 = vmatpush.msra.mxu0 0.0
    %2134 = vmatpush.msra.mxu0 0.0
    %2135 = vmatpush.msra.mxu0 0.0
    %2136 = vmatpush.msra.mxu0 0.0
    %2137 = vmatpush.msra.mxu0 0.0
    %2138 = vmatpush.msra.mxu0 0.0
    %2139 = vmatpush.msra.mxu0 0.0
    %2140 = vmatpush.msra.mxu0 0.0
    %2141 = vmatpush.msra.mxu0 0.0
    %2142 = vmatpush.msra.mxu0 0.0
    %2143 = vmatpush.msra.mxu0 0.0
    %2144 = vmatpush.msra.mxu0 0.0
    %2145 = vmatpush.msra.mxu0 0.0
    %2146 = vmatpush.msra.mxu0 %v2127
    %2147 = vmatpush.msra.mxu0 %v2126
    %2148 = vmatmul.f32.gmra.mxu0 %v2130
    %v2149 = vpop.f32.mrf.mxu0
    %v2150 = vadd.f32 0.0, %v2149
    %2151 = vdwg.mxu0
    %v2152 = vrot.slane %v887, 3
    %2153 = vrot.lane.b32.xlu0 %v2152, 64
    %v2154 = vpop.permute.xlu0 %2153
    %2156 = vxpose.xlu0.b32.start [1/16] %v2154, 128
    %2157 = vxpose.xlu0.b32.cont [2/16] 0.0, 128
    %2158 = vxpose.xlu0.b32.cont [3/16] 0.0, 128
    %2159 = vxpose.xlu0.b32.cont [4/16] 0.0, 128
    %2160 = vxpose.xlu0.b32.cont [5/16] 0.0, 128
    %2161 = vxpose.xlu0.b32.cont [6/16] 0.0, 128
    %2162 = vxpose.xlu0.b32.cont [7/16] 0.0, 128
    %2163 = vxpose.xlu0.b32.cont [8/16] 0.0, 128
    %2164 = vxpose.xlu0.b32.cont [9/16] 0.0, 128
    %2165 = vxpose.xlu0.b32.cont [10/16] 0.0, 128
    %2166 = vxpose.xlu0.b32.cont [11/16] 0.0, 128
    %2167 = vxpose.xlu0.b32.cont [12/16] 0.0, 128
    %2168 = vxpose.xlu0.b32.cont [13/16] 0.0, 128
    %2169 = vxpose.xlu0.b32.cont [14/16] 0.0, 128
    %2170 = vxpose.xlu0.b32.cont [15/16] 0.0, 128
    %2171 = vxpose.xlu0.b32.end [16/16] 0.0, 128
    %v2172 = vpop.trf.xlu0
    %v2173 = vpop.trf.xlu0
    %v2174 = vpop.trf.xlu0
    %v2175 = vpop.trf.xlu0
    %v2176 = vpop.trf.xlu0
    %v2177 = vpop.trf.xlu0
    %v2178 = vpop.trf.xlu0
    %v2179 = vpop.trf.xlu0
    %v2180 = vpop.trf.xlu0
    %v2181 = vpop.trf.xlu0
    %v2182 = vpop.trf.xlu0
    %v2183 = vpop.trf.xlu0
    %v2184 = vpop.trf.xlu0
    %v2185 = vpop.trf.xlu0
    %v2186 = vpop.trf.xlu0
    %v2187 = vpop.trf.xlu0
    %v2188 = vrot.slane %v921, 3
    %v2190 = vsel %vm1030, %v2172, 0
    %v2193 = vsel %vm1030, %v2173, 0
    %v2195 = vsel %vm245, %v2188, 0
    %2197 = vmatpush.msra.mxu0 0.0
    %2198 = vmatpush.msra.mxu0 0.0
    %2199 = vmatpush.msra.mxu0 0.0
    %2200 = vmatpush.msra.mxu0 0.0
    %2201 = vmatpush.msra.mxu0 0.0
    %2202 = vmatpush.msra.mxu0 0.0
    %2203 = vmatpush.msra.mxu0 0.0
    %2204 = vmatpush.msra.mxu0 0.0
    %2205 = vmatpush.msra.mxu0 0.0
    %2206 = vmatpush.msra.mxu0 0.0
    %2207 = vmatpush.msra.mxu0 0.0
    %2208 = vmatpush.msra.mxu0 0.0
    %2209 = vmatpush.msra.mxu0 0.0
    %2210 = vmatpush.msra.mxu0 0.0
    %2211 = vmatpush.msra.mxu0 0.0
    %2212 = vmatpush.msra.mxu0 %v2195
    %2213 = vmatmul.f32.gmra.mxu0 %v2190
    %v2214 = vpop.f32.mrf.mxu0
    %v2215 = vadd.f32 0.0, %v2214
    %2216 = vmatmul.f32.gmra.mxu0 %v2193
    %v2217 = vpop.f32.mrf.mxu0
    %v2218 = vadd.f32 0.0, %v2217
    %2219 = vdwg.mxu0
    %v2220 = vmul.f32 %v2126, %v1845
    %v2221 = vmul.f32 %v2127, %v1847
    %v2222 = vadd.f32 %v2220, %v2215
    %v2223 = vadd.f32 %v2221, %v2218
    %2224 = vrot.lane.b32.xlu0 %v2152, 48
    %v2225 = vpop.permute.xlu0 %2224
    %v2226 = vsel %vm1069, %v2225, 0
    %2228 = vmatpush.msra.mxu0 0.0
    %2229 = vmatpush.msra.mxu0 0.0
    %2230 = vmatpush.msra.mxu0 0.0
    %2231 = vmatpush.msra.mxu0 0.0
    %2232 = vmatpush.msra.mxu0 0.0
    %2233 = vmatpush.msra.mxu0 0.0
    %2234 = vmatpush.msra.mxu0 0.0
    %2235 = vmatpush.msra.mxu0 0.0
    %2236 = vmatpush.msra.mxu0 0.0
    %2237 = vmatpush.msra.mxu0 0.0
    %2238 = vmatpush.msra.mxu0 0.0
    %2239 = vmatpush.msra.mxu0 0.0
    %2240 = vmatpush.msra.mxu0 0.0
    %2241 = vmatpush.msra.mxu0 0.0
    %2242 = vmatpush.msra.mxu0 %v2223
    %2243 = vmatpush.msra.mxu0 %v2222
    %2244 = vmatmul.f32.gmra.mxu0 %v2226
    %v2245 = vpop.f32.mrf.mxu0
    %v2246 = vadd.f32 0.0, %v2245
    %2247 = vdwg.mxu0
    %v2248 = vrot.slane %v887, 4
    %2249 = vrot.lane.b32.xlu0 %v2248, 64
    %v2250 = vpop.permute.xlu0 %2249
    %2252 = vxpose.xlu0.b32.start [1/16] %v2250, 128
    %2253 = vxpose.xlu0.b32.cont [2/16] 0.0, 128
    %2254 = vxpose.xlu0.b32.cont [3/16] 0.0, 128
    %2255 = vxpose.xlu0.b32.cont [4/16] 0.0, 128
    %2256 = vxpose.xlu0.b32.cont [5/16] 0.0, 128
    %2257 = vxpose.xlu0.b32.cont [6/16] 0.0, 128
    %2258 = vxpose.xlu0.b32.cont [7/16] 0.0, 128
    %2259 = vxpose.xlu0.b32.cont [8/16] 0.0, 128
    %2260 = vxpose.xlu0.b32.cont [9/16] 0.0, 128
    %2261 = vxpose.xlu0.b32.cont [10/16] 0.0, 128
    %2262 = vxpose.xlu0.b32.cont [11/16] 0.0, 128
    %2263 = vxpose.xlu0.b32.cont [12/16] 0.0, 128
    %2264 = vxpose.xlu0.b32.cont [13/16] 0.0, 128
    %2265 = vxpose.xlu0.b32.cont [14/16] 0.0, 128
    %2266 = vxpose.xlu0.b32.cont [15/16] 0.0, 128
    %2267 = vxpose.xlu0.b32.end [16/16] 0.0, 128
    %v2268 = vpop.trf.xlu0
    %v2269 = vpop.trf.xlu0
    %v2270 = vpop.trf.xlu0
    %v2271 = vpop.trf.xlu0
    %v2272 = vpop.trf.xlu0
    %v2273 = vpop.trf.xlu0
    %v2274 = vpop.trf.xlu0
    %v2275 = vpop.trf.xlu0
    %v2276 = vpop.trf.xlu0
    %v2277 = vpop.trf.xlu0
    %v2278 = vpop.trf.xlu0
    %v2279 = vpop.trf.xlu0
    %v2280 = vpop.trf.xlu0
    %v2281 = vpop.trf.xlu0
    %v2282 = vpop.trf.xlu0
    %v2283 = vpop.trf.xlu0
    %v2284 = vrot.slane %v921, 4
    %v2286 = vsel %vm1030, %v2268, 0
    %v2289 = vsel %vm1030, %v2269, 0
    %v2291 = vsel %vm245, %v2284, 0
    %2293 = vmatpush.msra.mxu0 0.0
    %2294 = vmatpush.msra.mxu0 0.0
    %2295 = vmatpush.msra.mxu0 0.0
    %2296 = vmatpush.msra.mxu0 0.0
    %2297 = vmatpush.msra.mxu0 0.0
    %2298 = vmatpush.msra.mxu0 0.0
    %2299 = vmatpush.msra.mxu0 0.0
    %2300 = vmatpush.msra.mxu0 0.0
    %2301 = vmatpush.msra.mxu0 0.0
    %2302 = vmatpush.msra.mxu0 0.0
    %2303 = vmatpush.msra.mxu0 0.0
    %2304 = vmatpush.msra.mxu0 0.0
    %2305 = vmatpush.msra.mxu0 0.0
    %2306 = vmatpush.msra.mxu0 0.0
    %2307 = vmatpush.msra.mxu0 0.0
    %2308 = vmatpush.msra.mxu0 %v2291
    %2309 = vmatmul.f32.gmra.mxu0 %v2286
    %v2310 = vpop.f32.mrf.mxu0
    %v2311 = vadd.f32 0.0, %v2310
    %2312 = vmatmul.f32.gmra.mxu0 %v2289
    %v2313 = vpop.f32.mrf.mxu0
    %v2314 = vadd.f32 0.0, %v2313
    %2315 = vdwg.mxu0
    %v2316 = vmul.f32 %v2222, %v1849
    %v2317 = vmul.f32 %v2223, %v1851
    %v2318 = vadd.f32 %v2316, %v2311
    %v2319 = vadd.f32 %v2317, %v2314
    %2320 = vrot.lane.b32.xlu0 %v2248, 48
    %v2321 = vpop.permute.xlu0 %2320
    %v2322 = vsel %vm1069, %v2321, 0
    %2324 = vmatpush.msra.mxu0 0.0
    %2325 = vmatpush.msra.mxu0 0.0
    %2326 = vmatpush.msra.mxu0 0.0
    %2327 = vmatpush.msra.mxu0 0.0
    %2328 = vmatpush.msra.mxu0 0.0
    %2329 = vmatpush.msra.mxu0 0.0
    %2330 = vmatpush.msra.mxu0 0.0
    %2331 = vmatpush.msra.mxu0 0.0
    %2332 = vmatpush.msra.mxu0 0.0
    %2333 = vmatpush.msra.mxu0 0.0
    %2334 = vmatpush.msra.mxu0 0.0
    %2335 = vmatpush.msra.mxu0 0.0
    %2336 = vmatpush.msra.mxu0 0.0
    %2337 = vmatpush.msra.mxu0 0.0
    %2338 = vmatpush.msra.mxu0 %v2319
    %2339 = vmatpush.msra.mxu0 %v2318
    %2340 = vmatmul.f32.gmra.mxu0 %v2322
    %v2341 = vpop.f32.mrf.mxu0
    %v2342 = vadd.f32 0.0, %v2341
    %2343 = vdwg.mxu0
    %v2344 = vrot.slane %v887, 5
    %2345 = vrot.lane.b32.xlu0 %v2344, 64
    %v2346 = vpop.permute.xlu0 %2345
    %2348 = vxpose.xlu0.b32.start [1/16] %v2346, 128
    %2349 = vxpose.xlu0.b32.cont [2/16] 0.0, 128
    %2350 = vxpose.xlu0.b32.cont [3/16] 0.0, 128
    %2351 = vxpose.xlu0.b32.cont [4/16] 0.0, 128
    %2352 = vxpose.xlu0.b32.cont [5/16] 0.0, 128
    %2353 = vxpose.xlu0.b32.cont [6/16] 0.0, 128
    %2354 = vxpose.xlu0.b32.cont [7/16] 0.0, 128
    %2355 = vxpose.xlu0.b32.cont [8/16] 0.0, 128
    %2356 = vxpose.xlu0.b32.cont [9/16] 0.0, 128
    %2357 = vxpose.xlu0.b32.cont [10/16] 0.0, 128
    %2358 = vxpose.xlu0.b32.cont [11/16] 0.0, 128
    %2359 = vxpose.xlu0.b32.cont [12/16] 0.0, 128
    %2360 = vxpose.xlu0.b32.cont [13/16] 0.0, 128
    %2361 = vxpose.xlu0.b32.cont [14/16] 0.0, 128
    %2362 = vxpose.xlu0.b32.cont [15/16] 0.0, 128
    %2363 = vxpose.xlu0.b32.end [16/16] 0.0, 128
    %v2364 = vpop.trf.xlu0
    %v2365 = vpop.trf.xlu0
    %v2366 = vpop.trf.xlu0
    %v2367 = vpop.trf.xlu0
    %v2368 = vpop.trf.xlu0
    %v2369 = vpop.trf.xlu0
    %v2370 = vpop.trf.xlu0
    %v2371 = vpop.trf.xlu0
    %v2372 = vpop.trf.xlu0
    %v2373 = vpop.trf.xlu0
    %v2374 = vpop.trf.xlu0
    %v2375 = vpop.trf.xlu0
    %v2376 = vpop.trf.xlu0
    %v2377 = vpop.trf.xlu0
    %v2378 = vpop.trf.xlu0
    %v2379 = vpop.trf.xlu0
    %v2380 = vrot.slane %v921, 5
    %v2382 = vsel %vm1030, %v2364, 0
    %v2385 = vsel %vm1030, %v2365, 0
    %v2387 = vsel %vm245, %v2380, 0
    %2389 = vmatpush.msra.mxu0 0.0
    %2390 = vmatpush.msra.mxu0 0.0
    %2391 = vmatpush.msra.mxu0 0.0
    %2392 = vmatpush.msra.mxu0 0.0
    %2393 = vmatpush.msra.mxu0 0.0
    %2394 = vmatpush.msra.mxu0 0.0
    %2395 = vmatpush.msra.mxu0 0.0
    %2396 = vmatpush.msra.mxu0 0.0
    %2397 = vmatpush.msra.mxu0 0.0
    %2398 = vmatpush.msra.mxu0 0.0
    %2399 = vmatpush.msra.mxu0 0.0
    %2400 = vmatpush.msra.mxu0 0.0
    %2401 = vmatpush.msra.mxu0 0.0
    %2402 = vmatpush.msra.mxu0 0.0
    %2403 = vmatpush.msra.mxu0 0.0
    %2404 = vmatpush.msra.mxu0 %v2387
    %2405 = vmatmul.f32.gmra.mxu0 %v2382
    %v2406 = vpop.f32.mrf.mxu0
    %v2407 = vadd.f32 0.0, %v2406
    %2408 = vmatmul.f32.gmra.mxu0 %v2385
    %v2409 = vpop.f32.mrf.mxu0
    %v2410 = vadd.f32 0.0, %v2409
    %2411 = vdwg.mxu0
    %v2412 = vmul.f32 %v2318, %v1853
    %v2413 = vmul.f32 %v2319, %v1855
    %v2414 = vadd.f32 %v2412, %v2407
    %v2415 = vadd.f32 %v2413, %v2410
    %2416 = vrot.lane.b32.xlu0 %v2344, 48
    %v2417 = vpop.permute.xlu0 %2416
    %v2418 = vsel %vm1069, %v2417, 0
    %2420 = vmatpush.msra.mxu0 0.0
    %2421 = vmatpush.msra.mxu0 0.0
    %2422 = vmatpush.msra.mxu0 0.0
    %2423 = vmatpush.msra.mxu0 0.0
    %2424 = vmatpush.msra.mxu0 0.0
    %2425 = vmatpush.msra.mxu0 0.0
    %2426 = vmatpush.msra.mxu0 0.0
    %2427 = vmatpush.msra.mxu0 0.0
    %2428 = vmatpush.msra.mxu0 0.0
    %2429 = vmatpush.msra.mxu0 0.0
    %2430 = vmatpush.msra.mxu0 0.0
    %2431 = vmatpush.msra.mxu0 0.0
    %2432 = vmatpush.msra.mxu0 0.0
    %2433 = vmatpush.msra.mxu0 0.0
    %2434 = vmatpush.msra.mxu0 %v2415
    %2435 = vmatpush.msra.mxu0 %v2414
    %2436 = vmatmul.f32.gmra.mxu0 %v2418
    %v2437 = vpop.f32.mrf.mxu0
    %v2438 = vadd.f32 0.0, %v2437
    %2439 = vdwg.mxu0
    %v2440 = vrot.slane %v887, 6
    %2441 = vrot.lane.b32.xlu0 %v2440, 64
    %v2442 = vpop.permute.xlu0 %2441
    %2444 = vxpose.xlu0.b32.start [1/16] %v2442, 128
    %2445 = vxpose.xlu0.b32.cont [2/16] 0.0, 128
    %2446 = vxpose.xlu0.b32.cont [3/16] 0.0, 128
    %2447 = vxpose.xlu0.b32.cont [4/16] 0.0, 128
    %2448 = vxpose.xlu0.b32.cont [5/16] 0.0, 128
    %2449 = vxpose.xlu0.b32.cont [6/16] 0.0, 128
    %2450 = vxpose.xlu0.b32.cont [7/16] 0.0, 128
    %2451 = vxpose.xlu0.b32.cont [8/16] 0.0, 128
    %2452 = vxpose.xlu0.b32.cont [9/16] 0.0, 128
    %2453 = vxpose.xlu0.b32.cont [10/16] 0.0, 128
    %2454 = vxpose.xlu0.b32.cont [11/16] 0.0, 128
    %2455 = vxpose.xlu0.b32.cont [12/16] 0.0, 128
    %2456 = vxpose.xlu0.b32.cont [13/16] 0.0, 128
    %2457 = vxpose.xlu0.b32.cont [14/16] 0.0, 128
    %2458 = vxpose.xlu0.b32.cont [15/16] 0.0, 128
    %2459 = vxpose.xlu0.b32.end [16/16] 0.0, 128
    %v2460 = vpop.trf.xlu0
    %v2461 = vpop.trf.xlu0
    %v2462 = vpop.trf.xlu0
    %v2463 = vpop.trf.xlu0
    %v2464 = vpop.trf.xlu0
    %v2465 = vpop.trf.xlu0
    %v2466 = vpop.trf.xlu0
    %v2467 = vpop.trf.xlu0
    %v2468 = vpop.trf.xlu0
    %v2469 = vpop.trf.xlu0
    %v2470 = vpop.trf.xlu0
    %v2471 = vpop.trf.xlu0
    %v2472 = vpop.trf.xlu0
    %v2473 = vpop.trf.xlu0
    %v2474 = vpop.trf.xlu0
    %v2475 = vpop.trf.xlu0
    %v2476 = vrot.slane %v921, 6
    %v2478 = vsel %vm1030, %v2460, 0
    %v2481 = vsel %vm1030, %v2461, 0
    %v2483 = vsel %vm245, %v2476, 0
    %2485 = vmatpush.msra.mxu0 0.0
    %2486 = vmatpush.msra.mxu0 0.0
    %2487 = vmatpush.msra.mxu0 0.0
    %2488 = vmatpush.msra.mxu0 0.0
    %2489 = vmatpush.msra.mxu0 0.0
    %2490 = vmatpush.msra.mxu0 0.0
    %2491 = vmatpush.msra.mxu0 0.0
    %2492 = vmatpush.msra.mxu0 0.0
    %2493 = vmatpush.msra.mxu0 0.0
    %2494 = vmatpush.msra.mxu0 0.0
    %2495 = vmatpush.msra.mxu0 0.0
    %2496 = vmatpush.msra.mxu0 0.0
    %2497 = vmatpush.msra.mxu0 0.0
    %2498 = vmatpush.msra.mxu0 0.0
    %2499 = vmatpush.msra.mxu0 0.0
    %2500 = vmatpush.msra.mxu0 %v2483
    %2501 = vmatmul.f32.gmra.mxu0 %v2478
    %v2502 = vpop.f32.mrf.mxu0
    %v2503 = vadd.f32 0.0, %v2502
    %2504 = vmatmul.f32.gmra.mxu0 %v2481
    %v2505 = vpop.f32.mrf.mxu0
    %v2506 = vadd.f32 0.0, %v2505
    %2507 = vdwg.mxu0
    %v2508 = vmul.f32 %v2414, %v1857
    %v2509 = vmul.f32 %v2415, %v1859
    %v2510 = vadd.f32 %v2508, %v2503
    %v2511 = vadd.f32 %v2509, %v2506
    %2512 = vrot.lane.b32.xlu0 %v2440, 48
    %v2513 = vpop.permute.xlu0 %2512
    %v2514 = vsel %vm1069, %v2513, 0
    %2516 = vmatpush.msra.mxu0 0.0
    %2517 = vmatpush.msra.mxu0 0.0
    %2518 = vmatpush.msra.mxu0 0.0
    %2519 = vmatpush.msra.mxu0 0.0
    %2520 = vmatpush.msra.mxu0 0.0
    %2521 = vmatpush.msra.mxu0 0.0
    %2522 = vmatpush.msra.mxu0 0.0
    %2523 = vmatpush.msra.mxu0 0.0
    %2524 = vmatpush.msra.mxu0 0.0
    %2525 = vmatpush.msra.mxu0 0.0
    %2526 = vmatpush.msra.mxu0 0.0
    %2527 = vmatpush.msra.mxu0 0.0
    %2528 = vmatpush.msra.mxu0 0.0
    %2529 = vmatpush.msra.mxu0 0.0
    %2530 = vmatpush.msra.mxu0 %v2511
    %2531 = vmatpush.msra.mxu0 %v2510
    %2532 = vmatmul.f32.gmra.mxu0 %v2514
    %v2533 = vpop.f32.mrf.mxu0
    %v2534 = vadd.f32 0.0, %v2533
    %2535 = vdwg.mxu0
    %v2536 = vrot.slane %v887, 7
    %2537 = vrot.lane.b32.xlu0 %v2536, 64
    %v2538 = vpop.permute.xlu0 %2537
    %2540 = vxpose.xlu0.b32.start [1/16] %v2538, 128
    %2541 = vxpose.xlu0.b32.cont [2/16] 0.0, 128
    %2542 = vxpose.xlu0.b32.cont [3/16] 0.0, 128
    %2543 = vxpose.xlu0.b32.cont [4/16] 0.0, 128
    %2544 = vxpose.xlu0.b32.cont [5/16] 0.0, 128
    %2545 = vxpose.xlu0.b32.cont [6/16] 0.0, 128
    %2546 = vxpose.xlu0.b32.cont [7/16] 0.0, 128
    %2547 = vxpose.xlu0.b32.cont [8/16] 0.0, 128
    %2548 = vxpose.xlu0.b32.cont [9/16] 0.0, 128
    %2549 = vxpose.xlu0.b32.cont [10/16] 0.0, 128
    %2550 = vxpose.xlu0.b32.cont [11/16] 0.0, 128
    %2551 = vxpose.xlu0.b32.cont [12/16] 0.0, 128
    %2552 = vxpose.xlu0.b32.cont [13/16] 0.0, 128
    %2553 = vxpose.xlu0.b32.cont [14/16] 0.0, 128
    %2554 = vxpose.xlu0.b32.cont [15/16] 0.0, 128
    %2555 = vxpose.xlu0.b32.end [16/16] 0.0, 128
    %v2556 = vpop.trf.xlu0
    %v2557 = vpop.trf.xlu0
    %v2558 = vpop.trf.xlu0
    %v2559 = vpop.trf.xlu0
    %v2560 = vpop.trf.xlu0
    %v2561 = vpop.trf.xlu0
    %v2562 = vpop.trf.xlu0
    %v2563 = vpop.trf.xlu0
    %v2564 = vpop.trf.xlu0
    %v2565 = vpop.trf.xlu0
    %v2566 = vpop.trf.xlu0
    %v2567 = vpop.trf.xlu0
    %v2568 = vpop.trf.xlu0
    %v2569 = vpop.trf.xlu0
    %v2570 = vpop.trf.xlu0
    %v2571 = vpop.trf.xlu0
    %v2572 = vrot.slane %v921, 7
    %v2574 = vsel %vm1030, %v2556, 0
    %v2577 = vsel %vm1030, %v2557, 0
    %v2579 = vsel %vm245, %v2572, 0
    %2581 = vmatpush.msra.mxu0 0.0
    %2582 = vmatpush.msra.mxu0 0.0
    %2583 = vmatpush.msra.mxu0 0.0
    %2584 = vmatpush.msra.mxu0 0.0
    %2585 = vmatpush.msra.mxu0 0.0
    %2586 = vmatpush.msra.mxu0 0.0
    %2587 = vmatpush.msra.mxu0 0.0
    %2588 = vmatpush.msra.mxu0 0.0
    %2589 = vmatpush.msra.mxu0 0.0
    %2590 = vmatpush.msra.mxu0 0.0
    %2591 = vmatpush.msra.mxu0 0.0
    %2592 = vmatpush.msra.mxu0 0.0
    %2593 = vmatpush.msra.mxu0 0.0
    %2594 = vmatpush.msra.mxu0 0.0
    %2595 = vmatpush.msra.mxu0 0.0
    %2596 = vmatpush.msra.mxu0 %v2579
    %2597 = vmatmul.f32.gmra.mxu0 %v2574
    %v2598 = vpop.f32.mrf.mxu0
    %v2599 = vadd.f32 0.0, %v2598
    %2600 = vmatmul.f32.gmra.mxu0 %v2577
    %v2601 = vpop.f32.mrf.mxu0
    %v2602 = vadd.f32 0.0, %v2601
    %2603 = vdwg.mxu0
    %v2604 = vmul.f32 %v2510, %v1861
    %v2605 = vmul.f32 %v2511, %v1863
    %v2606 = vadd.f32 %v2604, %v2599
    %v2607 = vadd.f32 %v2605, %v2602
    %2608 = vrot.lane.b32.xlu0 %v2536, 48
    %v2609 = vpop.permute.xlu0 %2608
    %v2610 = vsel %vm1069, %v2609, 0
    %2612 = vmatpush.msra.mxu0 0.0
    %2613 = vmatpush.msra.mxu0 0.0
    %2614 = vmatpush.msra.mxu0 0.0
    %2615 = vmatpush.msra.mxu0 0.0
    %2616 = vmatpush.msra.mxu0 0.0
    %2617 = vmatpush.msra.mxu0 0.0
    %2618 = vmatpush.msra.mxu0 0.0
    %2619 = vmatpush.msra.mxu0 0.0
    %2620 = vmatpush.msra.mxu0 0.0
    %2621 = vmatpush.msra.mxu0 0.0
    %2622 = vmatpush.msra.mxu0 0.0
    %2623 = vmatpush.msra.mxu0 0.0
    %2624 = vmatpush.msra.mxu0 0.0
    %2625 = vmatpush.msra.mxu0 0.0
    %2626 = vmatpush.msra.mxu0 %v2607
    %2627 = vmatpush.msra.mxu0 %v2606
    %2628 = vmatmul.f32.gmra.mxu0 %v2610
    %v2629 = vpop.f32.mrf.mxu0
    %v2630 = vadd.f32 0.0, %v2629
    %2631 = vdwg.mxu0
    %v2633 = vrot.slane %v2054, 7
    %v2636 = vrot.slane %v2150, 6
    %v2639 = vrot.slane %v2246, 5
    %v2642 = vrot.slane %v2342, 4
    %v2645 = vrot.slane %v2438, 3
    %v2648 = vrot.slane %v2534, 2
    %v2651 = vrot.slane %v2630, 1
    %v2653 = vsel %vm245, %v1958, %v2633
    %v2654 = vsel %vm247, %v2653, %v2636
    %v2655 = vsel %vm249, %v2654, %v2639
    %v2656 = vsel %vm251, %v2655, %v2642
    %v2657 = vsel %vm253, %v2656, %v2645
    %v2658 = vsel %vm255, %v2657, %v2648
    %v2659 = vsel %vm257, %v2658, %v2651
    %v2660 = vperm.slane %v668, 7
    %v2661 = vmul.f32 %v2660, %v836
    %v2662 = vmul.f32 %v2660, %v837
    %v2663 = vadd.f32 %v1791, %v2661
    %v2664 = vadd.f32 %v2659, %v2662
    %v2665 = vxor.u32 %v746, 2147483648
    %v2666 = vxor.u32 %v748, 2147483648
    %v2667 = vmul.f32 %v2665, 1.442695
    %v2668 = vpow.pop %v2667
    %v2669 = vmul.f32 %v2666, 1.442695
    %v2670 = vpow.pop %v2669
    %v2671 = vadd.f32 %v2668, 1.0
    %v2672 = vadd.f32 %v2670, 1.0
    %v2673 = vrcp.pop %v2671
    %v2674 = vmul.f32 %v2671, %v2673
    %v2675 = vsub.f32 1.0, %v2674
    %v2676 = vmul.f32 %v2673, %v2675
    %v2677 = vadd.f32 %v2673, %v2676
    %vm2678 = vweird.f32 %v2671
    %vm2679 = vweird.f32 %v2673
    %vm2680 = vmor %vm2678, %vm2679
    %v2681 = vsel %vm2680, %v2673, %v2677
    %v2682 = vand.u32 2147483647, %v2671
    %vm2683 = vcmp.eq.f32.partialorder %v2682, 8.507059e+37
    %v2684 = vand.u32 %v2671, 2147483648
    %v2685 = vor.u32 1.1754944e-38, %v2684
    %v2686 = vsel %vm2683, %v2685, %v2681
    %v2687 = vmul.f32 1.0, %v2686
    %v2688 = vrcp.pop %v2672
    %v2689 = vmul.f32 %v2672, %v2688
    %v2690 = vsub.f32 1.0, %v2689
    %v2691 = vmul.f32 %v2688, %v2690
    %v2692 = vadd.f32 %v2688, %v2691
    %vm2693 = vweird.f32 %v2672
    %vm2694 = vweird.f32 %v2688
    %vm2695 = vmor %vm2693, %vm2694
    %v2696 = vsel %vm2695, %v2688, %v2692
    %v2697 = vand.u32 2147483647, %v2672
    %vm2698 = vcmp.eq.f32.partialorder %v2697, 8.507059e+37
    %v2699 = vand.u32 %v2672, 2147483648
    %v2700 = vor.u32 1.1754944e-38, %v2699
    %v2701 = vsel %vm2698, %v2700, %v2696
    %v2702 = vmul.f32 1.0, %v2701
    %v2703 = vmul.f32 %v746, %v2687
    %v2704 = vmul.f32 %v748, %v2702
    %2707 = vrot.lane.b32.xlu0 %v2703, 64
    %v2708 = vpop.permute.xlu0 %2707
    %2709 = vrot.lane.b32.xlu0 %v2704, 64
    %v2710 = vpop.permute.xlu0 %2709
    %v2713 = vmul.f32 %v2663, %v2708
    %v2714 = vmul.f32 %v2664, %v2710
    %v2715 = vpack.c.bf16 %v2714, %v2713
    %v2716 = vld [vmem:[#allocation13] sm:$0xf]
    %v2717 = vld [vmem:[#allocation13 + $0x4] sm:$0xf]
    %v2718 = vld [vmem:[#allocation13 + $0x8] sm:$0xf]
    %v2719 = vld [vmem:[#allocation13 + $0xc] sm:$0xf]
    %v2720 = vld [vmem:[#allocation13 + $0x10] sm:$0xf]
    %v2721 = vld [vmem:[#allocation13 + $0x14] sm:$0xf]
    %v2722 = vld [vmem:[#allocation13 + $0x18] sm:$0xf]
    %v2723 = vld [vmem:[#allocation13 + $0x1c] sm:$0xf]
    %v2732 = vunpack.c.l.b16 %v2716
    %v2733 = vunpack.c.l.b16 %v2717
    %v2734 = vunpack.c.l.b16 %v2718
    %v2735 = vunpack.c.l.b16 %v2719
    %v2736 = vunpack.c.l.b16 %v2720
    %v2737 = vunpack.c.l.b16 %v2721
    %v2738 = vunpack.c.l.b16 %v2722
    %v2739 = vunpack.c.l.b16 %v2723
    %v2740 = vpack.c.b16 %v2733, %v2732
    %v2741 = vpack.c.b16 %v2735, %v2734
    %v2742 = vpack.c.b16 %v2737, %v2736
    %v2743 = vpack.c.b16 %v2739, %v2738
    %v2749 = vsel %vm871, %v2715, 0
    %2751 = vmatpush.bf16.msra.mxu0 0
    %2752 = vmatpush.bf16.msra.mxu0 0
    %2753 = vmatpush.bf16.msra.mxu0 0
    %2754 = vmatpush.bf16.msra.mxu0 0
    %2755 = vmatpush.bf16.msra.mxu0 %v2743
    %2756 = vmatpush.bf16.msra.mxu0 %v2742
    %2757 = vmatpush.bf16.msra.mxu0 %v2741
    %2758 = vmatpush.bf16.msra.mxu0 %v2740
    %2759 = vmatmul.bf16.gmra.mxu0 %v2749
    %v2760 = vpop.f32.mrf.mxu0
    %v2761 = vadd.f32 0.0, %v2760
    %v2762 = vpop.f32.mrf.mxu0
    %v2763 = vadd.f32 0.0, %v2762
    %2764 = vdwg.mxu0
    %v2765 = vadd.f32 %v639, %v2761
    %v2766 = vadd.f32 %v640, %v2763
    %s2767 = scalar_lea.vmem [#allocation9], 24
    %v2768 = vld [vmem:[%s2767] sm:$0xff]
    %v2769 = vld [vmem:[%s2767 + $0x8] sm:$0xff]
    %v2770 = vld [vmem:[%s2767 + $0x10] sm:$0xff]
    %v2771 = vmul.f32 %v2765, %v2765
    %v2772 = vmul.f32 %v2766, %v2766
    %v2773 = vsel %vm673, %v2771, 0.0
    %2774 = vadd.xlane.f32.xlu0 %v2773
    %v2775 = vpop.xlane.xlu0 %2774
    %v2776 = vsel %vm673, %v2772, 0.0
    %2777 = vadd.xlane.f32.xlu0 %v2776
    %v2778 = vpop.xlane.xlu0 %2777
    %v2779 = vmul.f32 %v2775, %v686
    %v2780 = vmul.f32 %v2778, %v686
    %v2781 = vadd.f32 %v2779, 1e-05
    %v2782 = vadd.f32 %v2780, 1e-05
    %v2783 = vrsqrt.pop %v2781
    %v2784 = vmul.f32 %v2783, %v2781
    %v2785 = vmul.f32 %v2784, %v2783
    %v2786 = vmul.f32 0.5, %v2785
    %v2787 = vsub.f32 1.5, %v2786
    %v2788 = vmul.f32 %v2783, %v2787
    %vm2789 = vweird.f32 %v2781
    %vm2790 = vweird.f32 %v2783
    %vm2791 = vmor %vm2789, %vm2790
    %v2792 = vsel %vm2791, %v2783, %v2788
    %v2793 = vrsqrt.pop %v2782
    %v2794 = vmul.f32 %v2793, %v2782
    %v2795 = vmul.f32 %v2794, %v2793
    %v2796 = vmul.f32 0.5, %v2795
    %v2797 = vsub.f32 1.5, %v2796
    %v2798 = vmul.f32 %v2793, %v2797
    %vm2799 = vweird.f32 %v2782
    %vm2800 = vweird.f32 %v2793
    %vm2801 = vmor %vm2799, %vm2800
    %v2802 = vsel %vm2801, %v2793, %v2798
    %v2803 = vmul.f32 %v2765, %v2792
    %v2804 = vmul.f32 %v2766, %v2802
    %v2805 = vperm.slane %v2768, 4
    %v2806 = vmul.f32 %v2803, %v2805
    %v2807 = vmul.f32 %v2804, %v2805
    %v2808 = vpack.c.bf16 %v2807, %v2806
    %s2809 = scalar_lea.vmem [#allocation10], 16
    %v2810 = vld [vmem:[%s2809] sm:$0xf]
    %v2811 = vld [vmem:[%s2809 + $0x4] sm:$0xf]
    %v2812 = vld [vmem:[%s2809 + $0x8] sm:$0xf]
    %v2813 = vld [vmem:[%s2809 + $0xc] sm:$0xf]
    %v2818 = vunpack.c.l.b16 %v2810
    %v2819 = vunpack.c.l.b16 %v2811
    %v2820 = vunpack.c.l.b16 %v2812
    %v2821 = vunpack.c.l.b16 %v2813
    %v2822 = vpack.c.b16 %v2819, %v2818
    %v2823 = vpack.c.b16 %v2821, %v2820
    %v2827 = vsel %vm673, %v2808, 0
    %2829 = vmatpush.bf16.msra.mxu0 0
    %2830 = vmatpush.bf16.msra.mxu0 0
    %2831 = vmatpush.bf16.msra.mxu0 0
    %2832 = vmatpush.bf16.msra.mxu0 0
    %2833 = vmatpush.bf16.msra.mxu0 0
    %2834 = vmatpush.bf16.msra.mxu0 0
    %2835 = vmatpush.bf16.msra.mxu0 %v2823
    %2836 = vmatpush.bf16.msra.mxu0 %v2822
    %2837 = vmatmul.bf16.gmra.mxu0 %v2827
    %v2838 = vpop.f32.mrf.mxu0
    %v2839 = vadd.f32 0.0, %v2838
    %v2840 = vpop.f32.mrf.mxu0
    %v2841 = vadd.f32 0.0, %v2840
    %2842 = vdwg.mxu0
    %v2843 = vperm.slane %v2768, 5
    %v2844 = vrot.slane %v2839, 5
    %v2845 = vrot.slane %v2841, 5
    %v2846 = vsel %vm755, %v2844, %v2845
    %v2847 = vsel %vm755, %v2845, %v2844
    %v2848 = vsel %vm751, %v2847, 0.0
    %v2849 = vsel %vm752, %v2846, 0.0
    %v2850 = vperm.slane %v2768, 0
    %v2851 = vmul.f32 %v2848, %v2850
    %v2852 = vmul.f32 %v2849, %v2850
    %v2853 = vadd.f32 %v2843, %v2851
    %v2854 = vadd.f32 %v2843, %v2852
    %v2855 = vrot.slane %v2839, 6
    %v2856 = vrot.slane %v2841, 6
    %v2857 = vsel %vm769, %v2855, %v2856
    %v2858 = vsel %vm769, %v2856, %v2855
    %v2859 = vsel %vm765, %v2858, 0.0
    %v2860 = vsel %vm766, %v2857, 0.0
    %v2861 = vperm.slane %v2768, 1
    %v2862 = vmul.f32 %v2859, %v2861
    %v2863 = vmul.f32 %v2860, %v2861
    %v2864 = vadd.f32 %v2853, %v2862
    %v2865 = vadd.f32 %v2854, %v2863
    %v2866 = vrot.slane %v2839, 7
    %v2867 = vrot.slane %v2841, 7
    %v2868 = vsel %vm783, %v2866, %v2867
    %v2869 = vsel %vm783, %v2867, %v2866
    %v2870 = vsel %vm779, %v2869, 0.0
    %v2871 = vsel %vm780, %v2868, 0.0
    %v2872 = vperm.slane %v2768, 2
    %v2873 = vmul.f32 %v2870, %v2872
    %v2874 = vmul.f32 %v2871, %v2872
    %v2875 = vadd.f32 %v2864, %v2873
    %v2876 = vadd.f32 %v2865, %v2874
    %v2877 = vperm.slane %v2768, 3
    %v2878 = vmul.f32 %v2839, %v2877
    %v2879 = vmul.f32 %v2841, %v2877
    %v2880 = vadd.f32 %v2875, %v2878
    %v2881 = vadd.f32 %v2876, %v2879
    %v2882 = vxor.u32 %v2880, 2147483648
    %v2883 = vxor.u32 %v2881, 2147483648
    %v2884 = vmul.f32 %v2882, 1.442695
    %v2885 = vpow.pop %v2884
    %v2886 = vmul.f32 %v2883, 1.442695
    %v2887 = vpow.pop %v2886
    %v2888 = vadd.f32 %v2885, 1.0
    %v2889 = vadd.f32 %v2887, 1.0
    %v2890 = vrcp.pop %v2888
    %v2891 = vmul.f32 %v2888, %v2890
    %v2892 = vsub.f32 1.0, %v2891
    %v2893 = vmul.f32 %v2890, %v2892
    %v2894 = vadd.f32 %v2890, %v2893
    %vm2895 = vweird.f32 %v2888
    %vm2896 = vweird.f32 %v2890
    %vm2897 = vmor %vm2895, %vm2896
    %v2898 = vsel %vm2897, %v2890, %v2894
    %v2899 = vand.u32 2147483647, %v2888
    %vm2900 = vcmp.eq.f32.partialorder %v2899, 8.507059e+37
    %v2901 = vand.u32 %v2888, 2147483648
    %v2902 = vor.u32 1.1754944e-38, %v2901
    %v2903 = vsel %vm2900, %v2902, %v2898
    %v2904 = vmul.f32 1.0, %v2903
    %v2905 = vrcp.pop %v2889
    %v2906 = vmul.f32 %v2889, %v2905
    %v2907 = vsub.f32 1.0, %v2906
    %v2908 = vmul.f32 %v2905, %v2907
    %v2909 = vadd.f32 %v2905, %v2908
    %vm2910 = vweird.f32 %v2889
    %vm2911 = vweird.f32 %v2905
    %vm2912 = vmor %vm2910, %vm2911
    %v2913 = vsel %vm2912, %v2905, %v2909
    %v2914 = vand.u32 2147483647, %v2889
    %vm2915 = vcmp.eq.f32.partialorder %v2914, 8.507059e+37
    %v2916 = vand.u32 %v2889, 2147483648
    %v2917 = vor.u32 1.1754944e-38, %v2916
    %v2918 = vsel %vm2915, %v2917, %v2913
    %v2919 = vmul.f32 1.0, %v2918
    %v2920 = vmul.f32 %v2880, %v2904
    %v2921 = vmul.f32 %v2881, %v2919
    %v2922 = vpack.c.bf16 %v2921, %v2920
    %s2923 = scalar_lea.vmem [#allocation12], 32
    %v2924 = vld [vmem:[%s2923] sm:$0xf]
    %v2925 = vld [vmem:[%s2923 + $0x4] sm:$0xf]
    %v2926 = vld [vmem:[%s2923 + $0x8] sm:$0xf]
    %v2927 = vld [vmem:[%s2923 + $0xc] sm:$0xf]
    %v2928 = vld [vmem:[%s2923 + $0x10] sm:$0xf]
    %v2929 = vld [vmem:[%s2923 + $0x14] sm:$0xf]
    %v2930 = vld [vmem:[%s2923 + $0x18] sm:$0xf]
    %v2931 = vld [vmem:[%s2923 + $0x1c] sm:$0xf]
    %v2940 = vunpack.c.l.b16 %v2924
    %v2941 = vunpack.c.l.b16 %v2925
    %v2942 = vunpack.c.l.b16 %v2926
    %v2943 = vunpack.c.l.b16 %v2927
    %v2944 = vunpack.c.l.b16 %v2928
    %v2945 = vunpack.c.l.b16 %v2929
    %v2946 = vunpack.c.l.b16 %v2930
    %v2947 = vunpack.c.l.b16 %v2931
    %v2948 = vpack.c.b16 %v2941, %v2940
    %v2949 = vpack.c.b16 %v2943, %v2942
    %v2950 = vpack.c.b16 %v2945, %v2944
    %v2951 = vpack.c.b16 %v2947, %v2946
    %v2957 = vsel %vm871, %v2922, 0
    %2959 = vmatpush.bf16.msra.mxu0 0
    %2960 = vmatpush.bf16.msra.mxu0 0
    %2961 = vmatpush.bf16.msra.mxu0 0
    %2962 = vmatpush.bf16.msra.mxu0 0
    %2963 = vmatpush.bf16.msra.mxu0 %v2951
    %2964 = vmatpush.bf16.msra.mxu0 %v2950
    %2965 = vmatpush.bf16.msra.mxu0 %v2949
    %2966 = vmatpush.bf16.msra.mxu0 %v2948
    %2967 = vmatmul.bf16.gmra.mxu0 %v2957
    %v2968 = vpop.f32.mrf.mxu0
    %v2969 = vadd.f32 0.0, %v2968
    %v2970 = vpop.f32.mrf.mxu0
    %v2971 = vadd.f32 0.0, %v2970
    %2972 = vdwg.mxu0
    %v2973 = vperm.slane %v2768, 6
    %v2974 = vadd.f32 %v2969, %v2973
    %v2975 = vadd.f32 %v2971, %v2973
    %vm2976 = vcmp.gt.f32.partialorder %v2974, 20.0
    %vm2977 = vcmp.gt.f32.partialorder %v2975, 20.0
    %v2978 = vmin.f32 %v2974, 20.0
    %v2979 = vmin.f32 %v2975, 20.0
    %v2980 = vmul.f32 %v2978, 1.442695
    %v2981 = vpow.pop %v2980
    %v2982 = vmul.f32 %v2979, 1.442695
    %v2983 = vpow.pop %v2982
    %v2984 = vadd.f32 %v2981, 1.0
    %v2985 = vlog2.pop %v2984
    %v2986 = vmul.f32 %v2985, 0.6931472
    %v2987 = vmul.f32 -0.5, %v2981
    %v2988 = vadd.f32 %v2987, 1.0
    %v2989 = vmul.f32 %v2988, %v2981
    %v2990 = vand.u32 2147483647, %v2981
    %vm2991 = vcmp.lt.f32.partialorder %v2990, 0.0004427343
    %v2992 = vsel %vm2991, %v2989, %v2986
    %v2993 = vadd.f32 %v2983, 1.0
    %v2994 = vlog2.pop %v2993
    %v2995 = vmul.f32 %v2994, 0.6931472
    %v2996 = vmul.f32 -0.5, %v2983
    %v2997 = vadd.f32 %v2996, 1.0
    %v2998 = vmul.f32 %v2997, %v2983
    %v2999 = vand.u32 2147483647, %v2983
    %vm3000 = vcmp.lt.f32.partialorder %v2999, 0.0004427343
    %v3001 = vsel %vm3000, %v2998, %v2995
    %v3002 = vsel %vm2976, %v2974, %v2992
    %v3003 = vsel %vm2977, %v2975, %v3001
    %v3004 = vmul.f32 %v3002, %v2920
    %v3005 = vmul.f32 %v3003, %v2921
    %v3007 = vrot.slane %v3002, 1
    %v3008 = vrot.slane %v3002, 2
    %v3009 = vrot.slane %v3002, 3
    %v3010 = vrot.slane %v3002, 4
    %v3011 = vrot.slane %v3002, 5
    %v3012 = vrot.slane %v3002, 6
    %v3013 = vrot.slane %v3002, 7
    %v3014 = vperm.slane %v3002, 0
    %v3015 = vperm.slane %v3007, 0
    %v3016 = vperm.slane %v3008, 0
    %v3017 = vperm.slane %v3009, 0
    %v3018 = vperm.slane %v3010, 0
    %v3019 = vperm.slane %v3011, 0
    %v3020 = vperm.slane %v3012, 0
    %v3021 = vperm.slane %v3013, 0
    %v3030 = vmul.f32 %v3014, %v2769
    %v3031 = vmul.f32 %v3014, %v2770
    %v3032 = vmul.f32 %v3015, %v2769
    %v3033 = vmul.f32 %v3015, %v2770
    %v3034 = vmul.f32 %v3016, %v2769
    %v3035 = vmul.f32 %v3016, %v2770
    %v3036 = vmul.f32 %v3017, %v2769
    %v3037 = vmul.f32 %v3017, %v2770
    %v3038 = vmul.f32 %v3018, %v2769
    %v3039 = vmul.f32 %v3018, %v2770
    %v3040 = vmul.f32 %v3019, %v2769
    %v3041 = vmul.f32 %v3019, %v2770
    %v3042 = vmul.f32 %v3020, %v2769
    %v3043 = vmul.f32 %v3020, %v2770
    %v3044 = vmul.f32 %v3021, %v2769
    %v3045 = vmul.f32 %v3021, %v2770
    %v3046 = vmul.f32 %v3030, 1.442695
    %v3047 = vpow.pop %v3046
    %v3048 = vmul.f32 %v3031, 1.442695
    %v3049 = vpow.pop %v3048
    %v3050 = vmul.f32 %v3032, 1.442695
    %v3051 = vpow.pop %v3050
    %v3052 = vmul.f32 %v3033, 1.442695
    %v3053 = vpow.pop %v3052
    %v3054 = vmul.f32 %v3034, 1.442695
    %v3055 = vpow.pop %v3054
    %v3056 = vmul.f32 %v3035, 1.442695
    %v3057 = vpow.pop %v3056
    %v3058 = vmul.f32 %v3036, 1.442695
    %v3059 = vpow.pop %v3058
    %v3060 = vmul.f32 %v3037, 1.442695
    %v3061 = vpow.pop %v3060
    %v3062 = vmul.f32 %v3038, 1.442695
    %v3063 = vpow.pop %v3062
    %v3064 = vmul.f32 %v3039, 1.442695
    %v3065 = vpow.pop %v3064
    %v3066 = vmul.f32 %v3040, 1.442695
    %v3067 = vpow.pop %v3066
    %v3068 = vmul.f32 %v3041, 1.442695
    %v3069 = vpow.pop %v3068
    %v3070 = vmul.f32 %v3042, 1.442695
    %v3071 = vpow.pop %v3070
    %v3072 = vmul.f32 %v3043, 1.442695
    %v3073 = vpow.pop %v3072
    %v3074 = vmul.f32 %v3044, 1.442695
    %v3075 = vpow.pop %v3074
    %v3076 = vmul.f32 %v3045, 1.442695
    %v3077 = vpow.pop %v3076
    %3079 = vrot.lane.b32.xlu0 %v2969, 64
    %v3080 = vpop.permute.xlu0 %3079
    %3082 = vxpose.xlu0.b32.start [1/16] %v3080, 128
    %3083 = vxpose.xlu0.b32.cont [2/16] 0.0, 128
    %3084 = vxpose.xlu0.b32.cont [3/16] 0.0, 128
    %3085 = vxpose.xlu0.b32.cont [4/16] 0.0, 128
    %3086 = vxpose.xlu0.b32.cont [5/16] 0.0, 128
    %3087 = vxpose.xlu0.b32.cont [6/16] 0.0, 128
    %3088 = vxpose.xlu0.b32.cont [7/16] 0.0, 128
    %3089 = vxpose.xlu0.b32.cont [8/16] 0.0, 128
    %3090 = vxpose.xlu0.b32.cont [9/16] 0.0, 128
    %3091 = vxpose.xlu0.b32.cont [10/16] 0.0, 128
    %3092 = vxpose.xlu0.b32.cont [11/16] 0.0, 128
    %3093 = vxpose.xlu0.b32.cont [12/16] 0.0, 128
    %3094 = vxpose.xlu0.b32.cont [13/16] 0.0, 128
    %3095 = vxpose.xlu0.b32.cont [14/16] 0.0, 128
    %3096 = vxpose.xlu0.b32.cont [15/16] 0.0, 128
    %3097 = vxpose.xlu0.b32.end [16/16] 0.0, 128
    %v3098 = vpop.trf.xlu0
    %v3099 = vpop.trf.xlu0
    %v3100 = vpop.trf.xlu0
    %v3101 = vpop.trf.xlu0
    %v3102 = vpop.trf.xlu0
    %v3103 = vpop.trf.xlu0
    %v3104 = vpop.trf.xlu0
    %v3105 = vpop.trf.xlu0
    %v3106 = vpop.trf.xlu0
    %v3107 = vpop.trf.xlu0
    %v3108 = vpop.trf.xlu0
    %v3109 = vpop.trf.xlu0
    %v3110 = vpop.trf.xlu0
    %v3111 = vpop.trf.xlu0
    %v3112 = vpop.trf.xlu0
    %v3113 = vpop.trf.xlu0
    %v3115 = vsel %vm1030, %v3098, 0
    %v3118 = vsel %vm1030, %v3099, 0
    %v3121 = vsel %vm245, %v3004, 0
    %3123 = vmatpush.msra.mxu0 0.0
    %3124 = vmatpush.msra.mxu0 0.0
    %3125 = vmatpush.msra.mxu0 0.0
    %3126 = vmatpush.msra.mxu0 0.0
    %3127 = vmatpush.msra.mxu0 0.0
    %3128 = vmatpush.msra.mxu0 0.0
    %3129 = vmatpush.msra.mxu0 0.0
    %3130 = vmatpush.msra.mxu0 0.0
    %3131 = vmatpush.msra.mxu0 0.0
    %3132 = vmatpush.msra.mxu0 0.0
    %3133 = vmatpush.msra.mxu0 0.0
    %3134 = vmatpush.msra.mxu0 0.0
    %3135 = vmatpush.msra.mxu0 0.0
    %3136 = vmatpush.msra.mxu0 0.0
    %3137 = vmatpush.msra.mxu0 0.0
    %3138 = vmatpush.msra.mxu0 %v3121
    %3139 = vmatmul.f32.gmra.mxu0 %v3115
    %v3140 = vpop.f32.mrf.mxu0
    %v3141 = vadd.f32 0.0, %v3140
    %3142 = vmatmul.f32.gmra.mxu0 %v3118
    %v3143 = vpop.f32.mrf.mxu0
    %v3144 = vadd.f32 0.0, %v3143
    %3145 = vdwg.mxu0
    %v3146 = vmul.f32 %v3047, 0.0
    %v3147 = vmul.f32 %v3049, 0.0
    %v3148 = vadd.f32 %v3146, %v3141
    %v3149 = vadd.f32 %v3147, %v3144
    %3150 = vrot.lane.b32.xlu0 %v2969, 48
    %v3151 = vpop.permute.xlu0 %3150
    %v3152 = vsel %vm1069, %v3151, 0
    %3154 = vmatpush.msra.mxu0 0.0
    %3155 = vmatpush.msra.mxu0 0.0
    %3156 = vmatpush.msra.mxu0 0.0
    %3157 = vmatpush.msra.mxu0 0.0
    %3158 = vmatpush.msra.mxu0 0.0
    %3159 = vmatpush.msra.mxu0 0.0
    %3160 = vmatpush.msra.mxu0 0.0
    %3161 = vmatpush.msra.mxu0 0.0
    %3162 = vmatpush.msra.mxu0 0.0
    %3163 = vmatpush.msra.mxu0 0.0
    %3164 = vmatpush.msra.mxu0 0.0
    %3165 = vmatpush.msra.mxu0 0.0
    %3166 = vmatpush.msra.mxu0 0.0
    %3167 = vmatpush.msra.mxu0 0.0
    %3168 = vmatpush.msra.mxu0 %v3149
    %3169 = vmatpush.msra.mxu0 %v3148
    %3170 = vmatmul.f32.gmra.mxu0 %v3152
    %v3171 = vpop.f32.mrf.mxu0
    %v3172 = vadd.f32 0.0, %v3171
    %3173 = vdwg.mxu0
    %v3174 = vrot.slane %v2969, 1
    %3175 = vrot.lane.b32.xlu0 %v3174, 64
    %v3176 = vpop.permute.xlu0 %3175
    %3178 = vxpose.xlu0.b32.start [1/16] %v3176, 128
    %3179 = vxpose.xlu0.b32.cont [2/16] 0.0, 128
    %3180 = vxpose.xlu0.b32.cont [3/16] 0.0, 128
    %3181 = vxpose.xlu0.b32.cont [4/16] 0.0, 128
    %3182 = vxpose.xlu0.b32.cont [5/16] 0.0, 128
    %3183 = vxpose.xlu0.b32.cont [6/16] 0.0, 128
    %3184 = vxpose.xlu0.b32.cont [7/16] 0.0, 128
    %3185 = vxpose.xlu0.b32.cont [8/16] 0.0, 128
    %3186 = vxpose.xlu0.b32.cont [9/16] 0.0, 128
    %3187 = vxpose.xlu0.b32.cont [10/16] 0.0, 128
    %3188 = vxpose.xlu0.b32.cont [11/16] 0.0, 128
    %3189 = vxpose.xlu0.b32.cont [12/16] 0.0, 128
    %3190 = vxpose.xlu0.b32.cont [13/16] 0.0, 128
    %3191 = vxpose.xlu0.b32.cont [14/16] 0.0, 128
    %3192 = vxpose.xlu0.b32.cont [15/16] 0.0, 128
    %3193 = vxpose.xlu0.b32.end [16/16] 0.0, 128
    %v3194 = vpop.trf.xlu0
    %v3195 = vpop.trf.xlu0
    %v3196 = vpop.trf.xlu0
    %v3197 = vpop.trf.xlu0
    %v3198 = vpop.trf.xlu0
    %v3199 = vpop.trf.xlu0
    %v3200 = vpop.trf.xlu0
    %v3201 = vpop.trf.xlu0
    %v3202 = vpop.trf.xlu0
    %v3203 = vpop.trf.xlu0
    %v3204 = vpop.trf.xlu0
    %v3205 = vpop.trf.xlu0
    %v3206 = vpop.trf.xlu0
    %v3207 = vpop.trf.xlu0
    %v3208 = vpop.trf.xlu0
    %v3209 = vpop.trf.xlu0
    %v3210 = vrot.slane %v3004, 1
    %v3212 = vsel %vm1030, %v3194, 0
    %v3215 = vsel %vm1030, %v3195, 0
    %v3217 = vsel %vm245, %v3210, 0
    %3219 = vmatpush.msra.mxu0 0.0
    %3220 = vmatpush.msra.mxu0 0.0
    %3221 = vmatpush.msra.mxu0 0.0
    %3222 = vmatpush.msra.mxu0 0.0
    %3223 = vmatpush.msra.mxu0 0.0
    %3224 = vmatpush.msra.mxu0 0.0
    %3225 = vmatpush.msra.mxu0 0.0
    %3226 = vmatpush.msra.mxu0 0.0
    %3227 = vmatpush.msra.mxu0 0.0
    %3228 = vmatpush.msra.mxu0 0.0
    %3229 = vmatpush.msra.mxu0 0.0
    %3230 = vmatpush.msra.mxu0 0.0
    %3231 = vmatpush.msra.mxu0 0.0
    %3232 = vmatpush.msra.mxu0 0.0
    %3233 = vmatpush.msra.mxu0 0.0
    %3234 = vmatpush.msra.mxu0 %v3217
    %3235 = vmatmul.f32.gmra.mxu0 %v3212
    %v3236 = vpop.f32.mrf.mxu0
    %v3237 = vadd.f32 0.0, %v3236
    %3238 = vmatmul.f32.gmra.mxu0 %v3215
    %v3239 = vpop.f32.mrf.mxu0
    %v3240 = vadd.f32 0.0, %v3239
    %3241 = vdwg.mxu0
    %v3242 = vmul.f32 %v3148, %v3051
    %v3243 = vmul.f32 %v3149, %v3053
    %v3244 = vadd.f32 %v3242, %v3237
    %v3245 = vadd.f32 %v3243, %v3240
    %3246 = vrot.lane.b32.xlu0 %v3174, 48
    %v3247 = vpop.permute.xlu0 %3246
    %v3248 = vsel %vm1069, %v3247, 0
    %3250 = vmatpush.msra.mxu0 0.0
    %3251 = vmatpush.msra.mxu0 0.0
    %3252 = vmatpush.msra.mxu0 0.0
    %3253 = vmatpush.msra.mxu0 0.0
    %3254 = vmatpush.msra.mxu0 0.0
    %3255 = vmatpush.msra.mxu0 0.0
    %3256 = vmatpush.msra.mxu0 0.0
    %3257 = vmatpush.msra.mxu0 0.0
    %3258 = vmatpush.msra.mxu0 0.0
    %3259 = vmatpush.msra.mxu0 0.0
    %3260 = vmatpush.msra.mxu0 0.0
    %3261 = vmatpush.msra.mxu0 0.0
    %3262 = vmatpush.msra.mxu0 0.0
    %3263 = vmatpush.msra.mxu0 0.0
    %3264 = vmatpush.msra.mxu0 %v3245
    %3265 = vmatpush.msra.mxu0 %v3244
    %3266 = vmatmul.f32.gmra.mxu0 %v3248
    %v3267 = vpop.f32.mrf.mxu0
    %v3268 = vadd.f32 0.0, %v3267
    %3269 = vdwg.mxu0
    %v3270 = vrot.slane %v2969, 2
    %3271 = vrot.lane.b32.xlu0 %v3270, 64
    %v3272 = vpop.permute.xlu0 %3271
    %3274 = vxpose.xlu0.b32.start [1/16] %v3272, 128
    %3275 = vxpose.xlu0.b32.cont [2/16] 0.0, 128
    %3276 = vxpose.xlu0.b32.cont [3/16] 0.0, 128
    %3277 = vxpose.xlu0.b32.cont [4/16] 0.0, 128
    %3278 = vxpose.xlu0.b32.cont [5/16] 0.0, 128
    %3279 = vxpose.xlu0.b32.cont [6/16] 0.0, 128
    %3280 = vxpose.xlu0.b32.cont [7/16] 0.0, 128
    %3281 = vxpose.xlu0.b32.cont [8/16] 0.0, 128
    %3282 = vxpose.xlu0.b32.cont [9/16] 0.0, 128
    %3283 = vxpose.xlu0.b32.cont [10/16] 0.0, 128
    %3284 = vxpose.xlu0.b32.cont [11/16] 0.0, 128
    %3285 = vxpose.xlu0.b32.cont [12/16] 0.0, 128
    %3286 = vxpose.xlu0.b32.cont [13/16] 0.0, 128
    %3287 = vxpose.xlu0.b32.cont [14/16] 0.0, 128
    %3288 = vxpose.xlu0.b32.cont [15/16] 0.0, 128
    %3289 = vxpose.xlu0.b32.end [16/16] 0.0, 128
    %v3290 = vpop.trf.xlu0
    %v3291 = vpop.trf.xlu0
    %v3292 = vpop.trf.xlu0
    %v3293 = vpop.trf.xlu0
    %v3294 = vpop.trf.xlu0
    %v3295 = vpop.trf.xlu0
    %v3296 = vpop.trf.xlu0
    %v3297 = vpop.trf.xlu0
    %v3298 = vpop.trf.xlu0
    %v3299 = vpop.trf.xlu0
    %v3300 = vpop.trf.xlu0
    %v3301 = vpop.trf.xlu0
    %v3302 = vpop.trf.xlu0
    %v3303 = vpop.trf.xlu0
    %v3304 = vpop.trf.xlu0
    %v3305 = vpop.trf.xlu0
    %v3306 = vrot.slane %v3004, 2
    %v3308 = vsel %vm1030, %v3290, 0
    %v3311 = vsel %vm1030, %v3291, 0
    %v3313 = vsel %vm245, %v3306, 0
    %3315 = vmatpush.msra.mxu0 0.0
    %3316 = vmatpush.msra.mxu0 0.0
    %3317 = vmatpush.msra.mxu0 0.0
    %3318 = vmatpush.msra.mxu0 0.0
    %3319 = vmatpush.msra.mxu0 0.0
    %3320 = vmatpush.msra.mxu0 0.0
    %3321 = vmatpush.msra.mxu0 0.0
    %3322 = vmatpush.msra.mxu0 0.0
    %3323 = vmatpush.msra.mxu0 0.0
    %3324 = vmatpush.msra.mxu0 0.0
    %3325 = vmatpush.msra.mxu0 0.0
    %3326 = vmatpush.msra.mxu0 0.0
    %3327 = vmatpush.msra.mxu0 0.0
    %3328 = vmatpush.msra.mxu0 0.0
    %3329 = vmatpush.msra.mxu0 0.0
    %3330 = vmatpush.msra.mxu0 %v3313
    %3331 = vmatmul.f32.gmra.mxu0 %v3308
    %v3332 = vpop.f32.mrf.mxu0
    %v3333 = vadd.f32 0.0, %v3332
    %3334 = vmatmul.f32.gmra.mxu0 %v3311
    %v3335 = vpop.f32.mrf.mxu0
    %v3336 = vadd.f32 0.0, %v3335
    %3337 = vdwg.mxu0
    %v3338 = vmul.f32 %v3244, %v3055
    %v3339 = vmul.f32 %v3245, %v3057
    %v3340 = vadd.f32 %v3338, %v3333
    %v3341 = vadd.f32 %v3339, %v3336
    %3342 = vrot.lane.b32.xlu0 %v3270, 48
    %v3343 = vpop.permute.xlu0 %3342
    %v3344 = vsel %vm1069, %v3343, 0
    %3346 = vmatpush.msra.mxu0 0.0
    %3347 = vmatpush.msra.mxu0 0.0
    %3348 = vmatpush.msra.mxu0 0.0
    %3349 = vmatpush.msra.mxu0 0.0
    %3350 = vmatpush.msra.mxu0 0.0
    %3351 = vmatpush.msra.mxu0 0.0
    %3352 = vmatpush.msra.mxu0 0.0
    %3353 = vmatpush.msra.mxu0 0.0
    %3354 = vmatpush.msra.mxu0 0.0
    %3355 = vmatpush.msra.mxu0 0.0
    %3356 = vmatpush.msra.mxu0 0.0
    %3357 = vmatpush.msra.mxu0 0.0
    %3358 = vmatpush.msra.mxu0 0.0
    %3359 = vmatpush.msra.mxu0 0.0
    %3360 = vmatpush.msra.mxu0 %v3341
    %3361 = vmatpush.msra.mxu0 %v3340
    %3362 = vmatmul.f32.gmra.mxu0 %v3344
    %v3363 = vpop.f32.mrf.mxu0
    %v3364 = vadd.f32 0.0, %v3363
    %3365 = vdwg.mxu0
    %v3366 = vrot.slane %v2969, 3
    %3367 = vrot.lane.b32.xlu0 %v3366, 64
    %v3368 = vpop.permute.xlu0 %3367
    %3370 = vxpose.xlu0.b32.start [1/16] %v3368, 128
    %3371 = vxpose.xlu0.b32.cont [2/16] 0.0, 128
    %3372 = vxpose.xlu0.b32.cont [3/16] 0.0, 128
    %3373 = vxpose.xlu0.b32.cont [4/16] 0.0, 128
    %3374 = vxpose.xlu0.b32.cont [5/16] 0.0, 128
    %3375 = vxpose.xlu0.b32.cont [6/16] 0.0, 128
    %3376 = vxpose.xlu0.b32.cont [7/16] 0.0, 128
    %3377 = vxpose.xlu0.b32.cont [8/16] 0.0, 128
    %3378 = vxpose.xlu0.b32.cont [9/16] 0.0, 128
    %3379 = vxpose.xlu0.b32.cont [10/16] 0.0, 128
    %3380 = vxpose.xlu0.b32.cont [11/16] 0.0, 128
    %3381 = vxpose.xlu0.b32.cont [12/16] 0.0, 128
    %3382 = vxpose.xlu0.b32.cont [13/16] 0.0, 128
    %3383 = vxpose.xlu0.b32.cont [14/16] 0.0, 128
    %3384 = vxpose.xlu0.b32.cont [15/16] 0.0, 128
    %3385 = vxpose.xlu0.b32.end [16/16] 0.0, 128
    %v3386 = vpop.trf.xlu0
    %v3387 = vpop.trf.xlu0
    %v3388 = vpop.trf.xlu0
    %v3389 = vpop.trf.xlu0
    %v3390 = vpop.trf.xlu0
    %v3391 = vpop.trf.xlu0
    %v3392 = vpop.trf.xlu0
    %v3393 = vpop.trf.xlu0
    %v3394 = vpop.trf.xlu0
    %v3395 = vpop.trf.xlu0
    %v3396 = vpop.trf.xlu0
    %v3397 = vpop.trf.xlu0
    %v3398 = vpop.trf.xlu0
    %v3399 = vpop.trf.xlu0
    %v3400 = vpop.trf.xlu0
    %v3401 = vpop.trf.xlu0
    %v3402 = vrot.slane %v3004, 3
    %v3404 = vsel %vm1030, %v3386, 0
    %v3407 = vsel %vm1030, %v3387, 0
    %v3409 = vsel %vm245, %v3402, 0
    %3411 = vmatpush.msra.mxu0 0.0
    %3412 = vmatpush.msra.mxu0 0.0
    %3413 = vmatpush.msra.mxu0 0.0
    %3414 = vmatpush.msra.mxu0 0.0
    %3415 = vmatpush.msra.mxu0 0.0
    %3416 = vmatpush.msra.mxu0 0.0
    %3417 = vmatpush.msra.mxu0 0.0
    %3418 = vmatpush.msra.mxu0 0.0
    %3419 = vmatpush.msra.mxu0 0.0
    %3420 = vmatpush.msra.mxu0 0.0
    %3421 = vmatpush.msra.mxu0 0.0
    %3422 = vmatpush.msra.mxu0 0.0
    %3423 = vmatpush.msra.mxu0 0.0
    %3424 = vmatpush.msra.mxu0 0.0
    %3425 = vmatpush.msra.mxu0 0.0
    %3426 = vmatpush.msra.mxu0 %v3409
    %3427 = vmatmul.f32.gmra.mxu0 %v3404
    %v3428 = vpop.f32.mrf.mxu0
    %v3429 = vadd.f32 0.0, %v3428
    %3430 = vmatmul.f32.gmra.mxu0 %v3407
    %v3431 = vpop.f32.mrf.mxu0
    %v3432 = vadd.f32 0.0, %v3431
    %3433 = vdwg.mxu0
    %v3434 = vmul.f32 %v3340, %v3059
    %v3435 = vmul.f32 %v3341, %v3061
    %v3436 = vadd.f32 %v3434, %v3429
    %v3437 = vadd.f32 %v3435, %v3432
    %3438 = vrot.lane.b32.xlu0 %v3366, 48
    %v3439 = vpop.permute.xlu0 %3438
    %v3440 = vsel %vm1069, %v3439, 0
    %3442 = vmatpush.msra.mxu0 0.0
    %3443 = vmatpush.msra.mxu0 0.0
    %3444 = vmatpush.msra.mxu0 0.0
    %3445 = vmatpush.msra.mxu0 0.0
    %3446 = vmatpush.msra.mxu0 0.0
    %3447 = vmatpush.msra.mxu0 0.0
    %3448 = vmatpush.msra.mxu0 0.0
    %3449 = vmatpush.msra.mxu0 0.0
    %3450 = vmatpush.msra.mxu0 0.0
    %3451 = vmatpush.msra.mxu0 0.0
    %3452 = vmatpush.msra.mxu0 0.0
    %3453 = vmatpush.msra.mxu0 0.0
    %3454 = vmatpush.msra.mxu0 0.0
    %3455 = vmatpush.msra.mxu0 0.0
    %3456 = vmatpush.msra.mxu0 %v3437
    %3457 = vmatpush.msra.mxu0 %v3436
    %3458 = vmatmul.f32.gmra.mxu0 %v3440
    %v3459 = vpop.f32.mrf.mxu0
    %v3460 = vadd.f32 0.0, %v3459
    %3461 = vdwg.mxu0
    %v3462 = vrot.slane %v2969, 4
    %3463 = vrot.lane.b32.xlu0 %v3462, 64
    %v3464 = vpop.permute.xlu0 %3463
    %3466 = vxpose.xlu0.b32.start [1/16] %v3464, 128
    %3467 = vxpose.xlu0.b32.cont [2/16] 0.0, 128
    %3468 = vxpose.xlu0.b32.cont [3/16] 0.0, 128
    %3469 = vxpose.xlu0.b32.cont [4/16] 0.0, 128
    %3470 = vxpose.xlu0.b32.cont [5/16] 0.0, 128
    %3471 = vxpose.xlu0.b32.cont [6/16] 0.0, 128
    %3472 = vxpose.xlu0.b32.cont [7/16] 0.0, 128
    %3473 = vxpose.xlu0.b32.cont [8/16] 0.0, 128
    %3474 = vxpose.xlu0.b32.cont [9/16] 0.0, 128
    %3475 = vxpose.xlu0.b32.cont [10/16] 0.0, 128
    %3476 = vxpose.xlu0.b32.cont [11/16] 0.0, 128
    %3477 = vxpose.xlu0.b32.cont [12/16] 0.0, 128
    %3478 = vxpose.xlu0.b32.cont [13/16] 0.0, 128
    %3479 = vxpose.xlu0.b32.cont [14/16] 0.0, 128
    %3480 = vxpose.xlu0.b32.cont [15/16] 0.0, 128
    %3481 = vxpose.xlu0.b32.end [16/16] 0.0, 128
    %v3482 = vpop.trf.xlu0
    %v3483 = vpop.trf.xlu0
    %v3484 = vpop.trf.xlu0
    %v3485 = vpop.trf.xlu0
    %v3486 = vpop.trf.xlu0
    %v3487 = vpop.trf.xlu0
    %v3488 = vpop.trf.xlu0
    %v3489 = vpop.trf.xlu0
    %v3490 = vpop.trf.xlu0
    %v3491 = vpop.trf.xlu0
    %v3492 = vpop.trf.xlu0
    %v3493 = vpop.trf.xlu0
    %v3494 = vpop.trf.xlu0
    %v3495 = vpop.trf.xlu0
    %v3496 = vpop.trf.xlu0
    %v3497 = vpop.trf.xlu0
    %v3498 = vrot.slane %v3004, 4
    %v3500 = vsel %vm1030, %v3482, 0
    %v3503 = vsel %vm1030, %v3483, 0
    %v3505 = vsel %vm245, %v3498, 0
    %3507 = vmatpush.msra.mxu0 0.0
    %3508 = vmatpush.msra.mxu0 0.0
    %3509 = vmatpush.msra.mxu0 0.0
    %3510 = vmatpush.msra.mxu0 0.0
    %3511 = vmatpush.msra.mxu0 0.0
    %3512 = vmatpush.msra.mxu0 0.0
    %3513 = vmatpush.msra.mxu0 0.0
    %3514 = vmatpush.msra.mxu0 0.0
    %3515 = vmatpush.msra.mxu0 0.0
    %3516 = vmatpush.msra.mxu0 0.0
    %3517 = vmatpush.msra.mxu0 0.0
    %3518 = vmatpush.msra.mxu0 0.0
    %3519 = vmatpush.msra.mxu0 0.0
    %3520 = vmatpush.msra.mxu0 0.0
    %3521 = vmatpush.msra.mxu0 0.0
    %3522 = vmatpush.msra.mxu0 %v3505
    %3523 = vmatmul.f32.gmra.mxu0 %v3500
    %v3524 = vpop.f32.mrf.mxu0
    %v3525 = vadd.f32 0.0, %v3524
    %3526 = vmatmul.f32.gmra.mxu0 %v3503
    %v3527 = vpop.f32.mrf.mxu0
    %v3528 = vadd.f32 0.0, %v3527
    %3529 = vdwg.mxu0
    %v3530 = vmul.f32 %v3436, %v3063
    %v3531 = vmul.f32 %v3437, %v3065
    %v3532 = vadd.f32 %v3530, %v3525
    %v3533 = vadd.f32 %v3531, %v3528
    %3534 = vrot.lane.b32.xlu0 %v3462, 48
    %v3535 = vpop.permute.xlu0 %3534
    %v3536 = vsel %vm1069, %v3535, 0
    %3538 = vmatpush.msra.mxu0 0.0
    %3539 = vmatpush.msra.mxu0 0.0
    %3540 = vmatpush.msra.mxu0 0.0
    %3541 = vmatpush.msra.mxu0 0.0
    %3542 = vmatpush.msra.mxu0 0.0
    %3543 = vmatpush.msra.mxu0 0.0
    %3544 = vmatpush.msra.mxu0 0.0
    %3545 = vmatpush.msra.mxu0 0.0
    %3546 = vmatpush.msra.mxu0 0.0
    %3547 = vmatpush.msra.mxu0 0.0
    %3548 = vmatpush.msra.mxu0 0.0
    %3549 = vmatpush.msra.mxu0 0.0
    %3550 = vmatpush.msra.mxu0 0.0
    %3551 = vmatpush.msra.mxu0 0.0
    %3552 = vmatpush.msra.mxu0 %v3533
    %3553 = vmatpush.msra.mxu0 %v3532
    %3554 = vmatmul.f32.gmra.mxu0 %v3536
    %v3555 = vpop.f32.mrf.mxu0
    %v3556 = vadd.f32 0.0, %v3555
    %3557 = vdwg.mxu0
    %v3558 = vrot.slane %v2969, 5
    %3559 = vrot.lane.b32.xlu0 %v3558, 64
    %v3560 = vpop.permute.xlu0 %3559
    %3562 = vxpose.xlu0.b32.start [1/16] %v3560, 128
    %3563 = vxpose.xlu0.b32.cont [2/16] 0.0, 128
    %3564 = vxpose.xlu0.b32.cont [3/16] 0.0, 128
    %3565 = vxpose.xlu0.b32.cont [4/16] 0.0, 128
    %3566 = vxpose.xlu0.b32.cont [5/16] 0.0, 128
    %3567 = vxpose.xlu0.b32.cont [6/16] 0.0, 128
    %3568 = vxpose.xlu0.b32.cont [7/16] 0.0, 128
    %3569 = vxpose.xlu0.b32.cont [8/16] 0.0, 128
    %3570 = vxpose.xlu0.b32.cont [9/16] 0.0, 128
    %3571 = vxpose.xlu0.b32.cont [10/16] 0.0, 128
    %3572 = vxpose.xlu0.b32.cont [11/16] 0.0, 128
    %3573 = vxpose.xlu0.b32.cont [12/16] 0.0, 128
    %3574 = vxpose.xlu0.b32.cont [13/16] 0.0, 128
    %3575 = vxpose.xlu0.b32.cont [14/16] 0.0, 128
    %3576 = vxpose.xlu0.b32.cont [15/16] 0.0, 128
    %3577 = vxpose.xlu0.b32.end [16/16] 0.0, 128
    %v3578 = vpop.trf.xlu0
    %v3579 = vpop.trf.xlu0
    %v3580 = vpop.trf.xlu0
    %v3581 = vpop.trf.xlu0
    %v3582 = vpop.trf.xlu0
    %v3583 = vpop.trf.xlu0
    %v3584 = vpop.trf.xlu0
    %v3585 = vpop.trf.xlu0
    %v3586 = vpop.trf.xlu0
    %v3587 = vpop.trf.xlu0
    %v3588 = vpop.trf.xlu0
    %v3589 = vpop.trf.xlu0
    %v3590 = vpop.trf.xlu0
    %v3591 = vpop.trf.xlu0
    %v3592 = vpop.trf.xlu0
    %v3593 = vpop.trf.xlu0
    %v3594 = vrot.slane %v3004, 5
    %v3596 = vsel %vm1030, %v3578, 0
    %v3599 = vsel %vm1030, %v3579, 0
    %v3601 = vsel %vm245, %v3594, 0
    %3603 = vmatpush.msra.mxu0 0.0
    %3604 = vmatpush.msra.mxu0 0.0
    %3605 = vmatpush.msra.mxu0 0.0
    %3606 = vmatpush.msra.mxu0 0.0
    %3607 = vmatpush.msra.mxu0 0.0
    %3608 = vmatpush.msra.mxu0 0.0
    %3609 = vmatpush.msra.mxu0 0.0
    %3610 = vmatpush.msra.mxu0 0.0
    %3611 = vmatpush.msra.mxu0 0.0
    %3612 = vmatpush.msra.mxu0 0.0
    %3613 = vmatpush.msra.mxu0 0.0
    %3614 = vmatpush.msra.mxu0 0.0
    %3615 = vmatpush.msra.mxu0 0.0
    %3616 = vmatpush.msra.mxu0 0.0
    %3617 = vmatpush.msra.mxu0 0.0
    %3618 = vmatpush.msra.mxu0 %v3601
    %3619 = vmatmul.f32.gmra.mxu0 %v3596
    %v3620 = vpop.f32.mrf.mxu0
    %v3621 = vadd.f32 0.0, %v3620
    %3622 = vmatmul.f32.gmra.mxu0 %v3599
    %v3623 = vpop.f32.mrf.mxu0
    %v3624 = vadd.f32 0.0, %v3623
    %3625 = vdwg.mxu0
    %v3626 = vmul.f32 %v3532, %v3067
    %v3627 = vmul.f32 %v3533, %v3069
    %v3628 = vadd.f32 %v3626, %v3621
    %v3629 = vadd.f32 %v3627, %v3624
    %3630 = vrot.lane.b32.xlu0 %v3558, 48
    %v3631 = vpop.permute.xlu0 %3630
    %v3632 = vsel %vm1069, %v3631, 0
    %3634 = vmatpush.msra.mxu0 0.0
    %3635 = vmatpush.msra.mxu0 0.0
    %3636 = vmatpush.msra.mxu0 0.0
    %3637 = vmatpush.msra.mxu0 0.0
    %3638 = vmatpush.msra.mxu0 0.0
    %3639 = vmatpush.msra.mxu0 0.0
    %3640 = vmatpush.msra.mxu0 0.0
    %3641 = vmatpush.msra.mxu0 0.0
    %3642 = vmatpush.msra.mxu0 0.0
    %3643 = vmatpush.msra.mxu0 0.0
    %3644 = vmatpush.msra.mxu0 0.0
    %3645 = vmatpush.msra.mxu0 0.0
    %3646 = vmatpush.msra.mxu0 0.0
    %3647 = vmatpush.msra.mxu0 0.0
    %3648 = vmatpush.msra.mxu0 %v3629
    %3649 = vmatpush.msra.mxu0 %v3628
    %3650 = vmatmul.f32.gmra.mxu0 %v3632
    %v3651 = vpop.f32.mrf.mxu0
    %v3652 = vadd.f32 0.0, %v3651
    %3653 = vdwg.mxu0
    %v3654 = vrot.slane %v2969, 6
    %3655 = vrot.lane.b32.xlu0 %v3654, 64
    %v3656 = vpop.permute.xlu0 %3655
    %3658 = vxpose.xlu0.b32.start [1/16] %v3656, 128
    %3659 = vxpose.xlu0.b32.cont [2/16] 0.0, 128
    %3660 = vxpose.xlu0.b32.cont [3/16] 0.0, 128
    %3661 = vxpose.xlu0.b32.cont [4/16] 0.0, 128
    %3662 = vxpose.xlu0.b32.cont [5/16] 0.0, 128
    %3663 = vxpose.xlu0.b32.cont [6/16] 0.0, 128
    %3664 = vxpose.xlu0.b32.cont [7/16] 0.0, 128
    %3665 = vxpose.xlu0.b32.cont [8/16] 0.0, 128
    %3666 = vxpose.xlu0.b32.cont [9/16] 0.0, 128
    %3667 = vxpose.xlu0.b32.cont [10/16] 0.0, 128
    %3668 = vxpose.xlu0.b32.cont [11/16] 0.0, 128
    %3669 = vxpose.xlu0.b32.cont [12/16] 0.0, 128
    %3670 = vxpose.xlu0.b32.cont [13/16] 0.0, 128
    %3671 = vxpose.xlu0.b32.cont [14/16] 0.0, 128
    %3672 = vxpose.xlu0.b32.cont [15/16] 0.0, 128
    %3673 = vxpose.xlu0.b32.end [16/16] 0.0, 128
    %v3674 = vpop.trf.xlu0
    %v3675 = vpop.trf.xlu0
    %v3676 = vpop.trf.xlu0
    %v3677 = vpop.trf.xlu0
    %v3678 = vpop.trf.xlu0
    %v3679 = vpop.trf.xlu0
    %v3680 = vpop.trf.xlu0
    %v3681 = vpop.trf.xlu0
    %v3682 = vpop.trf.xlu0
    %v3683 = vpop.trf.xlu0
    %v3684 = vpop.trf.xlu0
    %v3685 = vpop.trf.xlu0
    %v3686 = vpop.trf.xlu0
    %v3687 = vpop.trf.xlu0
    %v3688 = vpop.trf.xlu0
    %v3689 = vpop.trf.xlu0
    %v3690 = vrot.slane %v3004, 6
    %v3692 = vsel %vm1030, %v3674, 0
    %v3695 = vsel %vm1030, %v3675, 0
    %v3697 = vsel %vm245, %v3690, 0
    %3699 = vmatpush.msra.mxu0 0.0
    %3700 = vmatpush.msra.mxu0 0.0
    %3701 = vmatpush.msra.mxu0 0.0
    %3702 = vmatpush.msra.mxu0 0.0
    %3703 = vmatpush.msra.mxu0 0.0
    %3704 = vmatpush.msra.mxu0 0.0
    %3705 = vmatpush.msra.mxu0 0.0
    %3706 = vmatpush.msra.mxu0 0.0
    %3707 = vmatpush.msra.mxu0 0.0
    %3708 = vmatpush.msra.mxu0 0.0
    %3709 = vmatpush.msra.mxu0 0.0
    %3710 = vmatpush.msra.mxu0 0.0
    %3711 = vmatpush.msra.mxu0 0.0
    %3712 = vmatpush.msra.mxu0 0.0
    %3713 = vmatpush.msra.mxu0 0.0
    %3714 = vmatpush.msra.mxu0 %v3697
    %3715 = vmatmul.f32.gmra.mxu0 %v3692
    %v3716 = vpop.f32.mrf.mxu0
    %v3717 = vadd.f32 0.0, %v3716
    %3718 = vmatmul.f32.gmra.mxu0 %v3695
    %v3719 = vpop.f32.mrf.mxu0
    %v3720 = vadd.f32 0.0, %v3719
    %3721 = vdwg.mxu0
    %v3722 = vmul.f32 %v3628, %v3071
    %v3723 = vmul.f32 %v3629, %v3073
    %v3724 = vadd.f32 %v3722, %v3717
    %v3725 = vadd.f32 %v3723, %v3720
    %3726 = vrot.lane.b32.xlu0 %v3654, 48
    %v3727 = vpop.permute.xlu0 %3726
    %v3728 = vsel %vm1069, %v3727, 0
    %3730 = vmatpush.msra.mxu0 0.0
    %3731 = vmatpush.msra.mxu0 0.0
    %3732 = vmatpush.msra.mxu0 0.0
    %3733 = vmatpush.msra.mxu0 0.0
    %3734 = vmatpush.msra.mxu0 0.0
    %3735 = vmatpush.msra.mxu0 0.0
    %3736 = vmatpush.msra.mxu0 0.0
    %3737 = vmatpush.msra.mxu0 0.0
    %3738 = vmatpush.msra.mxu0 0.0
    %3739 = vmatpush.msra.mxu0 0.0
    %3740 = vmatpush.msra.mxu0 0.0
    %3741 = vmatpush.msra.mxu0 0.0
    %3742 = vmatpush.msra.mxu0 0.0
    %3743 = vmatpush.msra.mxu0 0.0
    %3744 = vmatpush.msra.mxu0 %v3725
    %3745 = vmatpush.msra.mxu0 %v3724
    %3746 = vmatmul.f32.gmra.mxu0 %v3728
    %v3747 = vpop.f32.mrf.mxu0
    %v3748 = vadd.f32 0.0, %v3747
    %3749 = vdwg.mxu0
    %v3750 = vrot.slane %v2969, 7
    %3751 = vrot.lane.b32.xlu0 %v3750, 64
    %v3752 = vpop.permute.xlu0 %3751
    %3754 = vxpose.xlu0.b32.start [1/16] %v3752, 128
    %3755 = vxpose.xlu0.b32.cont [2/16] 0.0, 128
    %3756 = vxpose.xlu0.b32.cont [3/16] 0.0, 128
    %3757 = vxpose.xlu0.b32.cont [4/16] 0.0, 128
    %3758 = vxpose.xlu0.b32.cont [5/16] 0.0, 128
    %3759 = vxpose.xlu0.b32.cont [6/16] 0.0, 128
    %3760 = vxpose.xlu0.b32.cont [7/16] 0.0, 128
    %3761 = vxpose.xlu0.b32.cont [8/16] 0.0, 128
    %3762 = vxpose.xlu0.b32.cont [9/16] 0.0, 128
    %3763 = vxpose.xlu0.b32.cont [10/16] 0.0, 128
    %3764 = vxpose.xlu0.b32.cont [11/16] 0.0, 128
    %3765 = vxpose.xlu0.b32.cont [12/16] 0.0, 128
    %3766 = vxpose.xlu0.b32.cont [13/16] 0.0, 128
    %3767 = vxpose.xlu0.b32.cont [14/16] 0.0, 128
    %3768 = vxpose.xlu0.b32.cont [15/16] 0.0, 128
    %3769 = vxpose.xlu0.b32.end [16/16] 0.0, 128
    %v3770 = vpop.trf.xlu0
    %v3771 = vpop.trf.xlu0
    %v3772 = vpop.trf.xlu0
    %v3773 = vpop.trf.xlu0
    %v3774 = vpop.trf.xlu0
    %v3775 = vpop.trf.xlu0
    %v3776 = vpop.trf.xlu0
    %v3777 = vpop.trf.xlu0
    %v3778 = vpop.trf.xlu0
    %v3779 = vpop.trf.xlu0
    %v3780 = vpop.trf.xlu0
    %v3781 = vpop.trf.xlu0
    %v3782 = vpop.trf.xlu0
    %v3783 = vpop.trf.xlu0
    %v3784 = vpop.trf.xlu0
    %v3785 = vpop.trf.xlu0
    %v3786 = vrot.slane %v3004, 7
    %v3788 = vsel %vm1030, %v3770, 0
    %v3791 = vsel %vm1030, %v3771, 0
    %v3793 = vsel %vm245, %v3786, 0
    %3795 = vmatpush.msra.mxu0 0.0
    %3796 = vmatpush.msra.mxu0 0.0
    %3797 = vmatpush.msra.mxu0 0.0
    %3798 = vmatpush.msra.mxu0 0.0
    %3799 = vmatpush.msra.mxu0 0.0
    %3800 = vmatpush.msra.mxu0 0.0
    %3801 = vmatpush.msra.mxu0 0.0
    %3802 = vmatpush.msra.mxu0 0.0
    %3803 = vmatpush.msra.mxu0 0.0
    %3804 = vmatpush.msra.mxu0 0.0
    %3805 = vmatpush.msra.mxu0 0.0
    %3806 = vmatpush.msra.mxu0 0.0
    %3807 = vmatpush.msra.mxu0 0.0
    %3808 = vmatpush.msra.mxu0 0.0
    %3809 = vmatpush.msra.mxu0 0.0
    %3810 = vmatpush.msra.mxu0 %v3793
    %3811 = vmatmul.f32.gmra.mxu0 %v3788
    %v3812 = vpop.f32.mrf.mxu0
    %v3813 = vadd.f32 0.0, %v3812
    %3814 = vmatmul.f32.gmra.mxu0 %v3791
    %v3815 = vpop.f32.mrf.mxu0
    %v3816 = vadd.f32 0.0, %v3815
    %3817 = vdwg.mxu0
    %v3818 = vmul.f32 %v3724, %v3075
    %v3819 = vmul.f32 %v3725, %v3077
    %v3820 = vadd.f32 %v3818, %v3813
    %v3821 = vadd.f32 %v3819, %v3816
    %3822 = vrot.lane.b32.xlu0 %v3750, 48
    %v3823 = vpop.permute.xlu0 %3822
    %v3824 = vsel %vm1069, %v3823, 0
    %3826 = vmatpush.msra.mxu0 0.0
    %3827 = vmatpush.msra.mxu0 0.0
    %3828 = vmatpush.msra.mxu0 0.0
    %3829 = vmatpush.msra.mxu0 0.0
    %3830 = vmatpush.msra.mxu0 0.0
    %3831 = vmatpush.msra.mxu0 0.0
    %3832 = vmatpush.msra.mxu0 0.0
    %3833 = vmatpush.msra.mxu0 0.0
    %3834 = vmatpush.msra.mxu0 0.0
    %3835 = vmatpush.msra.mxu0 0.0
    %3836 = vmatpush.msra.mxu0 0.0
    %3837 = vmatpush.msra.mxu0 0.0
    %3838 = vmatpush.msra.mxu0 0.0
    %3839 = vmatpush.msra.mxu0 0.0
    %3840 = vmatpush.msra.mxu0 %v3821
    %3841 = vmatpush.msra.mxu0 %v3820
    %3842 = vmatmul.f32.gmra.mxu0 %v3824
    %v3843 = vpop.f32.mrf.mxu0
    %v3844 = vadd.f32 0.0, %v3843
    %3845 = vdwg.mxu0
    %v3847 = vrot.slane %v3268, 7
    %v3850 = vrot.slane %v3364, 6
    %v3853 = vrot.slane %v3460, 5
    %v3856 = vrot.slane %v3556, 4
    %v3859 = vrot.slane %v3652, 3
    %v3862 = vrot.slane %v3748, 2
    %v3865 = vrot.slane %v3844, 1
    %v3867 = vsel %vm245, %v3172, %v3847
    %v3868 = vsel %vm247, %v3867, %v3850
    %v3869 = vsel %vm249, %v3868, %v3853
    %v3870 = vsel %vm251, %v3869, %v3856
    %v3871 = vsel %vm253, %v3870, %v3859
    %v3872 = vsel %vm255, %v3871, %v3862
    %v3873 = vsel %vm257, %v3872, %v3865
    %v3875 = vrot.slane %v3003, 1
    %v3876 = vrot.slane %v3003, 2
    %v3877 = vrot.slane %v3003, 3
    %v3878 = vrot.slane %v3003, 4
    %v3879 = vrot.slane %v3003, 5
    %v3880 = vrot.slane %v3003, 6
    %v3881 = vrot.slane %v3003, 7
    %v3882 = vperm.slane %v3003, 0
    %v3883 = vperm.slane %v3875, 0
    %v3884 = vperm.slane %v3876, 0
    %v3885 = vperm.slane %v3877, 0
    %v3886 = vperm.slane %v3878, 0
    %v3887 = vperm.slane %v3879, 0
    %v3888 = vperm.slane %v3880, 0
    %v3889 = vperm.slane %v3881, 0
    %v3898 = vmul.f32 %v3882, %v2769
    %v3899 = vmul.f32 %v3882, %v2770
    %v3900 = vmul.f32 %v3883, %v2769
    %v3901 = vmul.f32 %v3883, %v2770
    %v3902 = vmul.f32 %v3884, %v2769
    %v3903 = vmul.f32 %v3884, %v2770
    %v3904 = vmul.f32 %v3885, %v2769
    %v3905 = vmul.f32 %v3885, %v2770
    %v3906 = vmul.f32 %v3886, %v2769
    %v3907 = vmul.f32 %v3886, %v2770
    %v3908 = vmul.f32 %v3887, %v2769
    %v3909 = vmul.f32 %v3887, %v2770
    %v3910 = vmul.f32 %v3888, %v2769
    %v3911 = vmul.f32 %v3888, %v2770
    %v3912 = vmul.f32 %v3889, %v2769
    %v3913 = vmul.f32 %v3889, %v2770
    %v3914 = vmul.f32 %v3898, 1.442695
    %v3915 = vpow.pop %v3914
    %v3916 = vmul.f32 %v3899, 1.442695
    %v3917 = vpow.pop %v3916
    %v3918 = vmul.f32 %v3900, 1.442695
    %v3919 = vpow.pop %v3918
    %v3920 = vmul.f32 %v3901, 1.442695
    %v3921 = vpow.pop %v3920
    %v3922 = vmul.f32 %v3902, 1.442695
    %v3923 = vpow.pop %v3922
    %v3924 = vmul.f32 %v3903, 1.442695
    %v3925 = vpow.pop %v3924
    %v3926 = vmul.f32 %v3904, 1.442695
    %v3927 = vpow.pop %v3926
    %v3928 = vmul.f32 %v3905, 1.442695
    %v3929 = vpow.pop %v3928
    %v3930 = vmul.f32 %v3906, 1.442695
    %v3931 = vpow.pop %v3930
    %v3932 = vmul.f32 %v3907, 1.442695
    %v3933 = vpow.pop %v3932
    %v3934 = vmul.f32 %v3908, 1.442695
    %v3935 = vpow.pop %v3934
    %v3936 = vmul.f32 %v3909, 1.442695
    %v3937 = vpow.pop %v3936
    %v3938 = vmul.f32 %v3910, 1.442695
    %v3939 = vpow.pop %v3938
    %v3940 = vmul.f32 %v3911, 1.442695
    %v3941 = vpow.pop %v3940
    %v3942 = vmul.f32 %v3912, 1.442695
    %v3943 = vpow.pop %v3942
    %v3944 = vmul.f32 %v3913, 1.442695
    %v3945 = vpow.pop %v3944
    %3947 = vrot.lane.b32.xlu0 %v2971, 64
    %v3948 = vpop.permute.xlu0 %3947
    %3950 = vxpose.xlu0.b32.start [1/16] %v3948, 128
    %3951 = vxpose.xlu0.b32.cont [2/16] 0.0, 128
    %3952 = vxpose.xlu0.b32.cont [3/16] 0.0, 128
    %3953 = vxpose.xlu0.b32.cont [4/16] 0.0, 128
    %3954 = vxpose.xlu0.b32.cont [5/16] 0.0, 128
    %3955 = vxpose.xlu0.b32.cont [6/16] 0.0, 128
    %3956 = vxpose.xlu0.b32.cont [7/16] 0.0, 128
    %3957 = vxpose.xlu0.b32.cont [8/16] 0.0, 128
    %3958 = vxpose.xlu0.b32.cont [9/16] 0.0, 128
    %3959 = vxpose.xlu0.b32.cont [10/16] 0.0, 128
    %3960 = vxpose.xlu0.b32.cont [11/16] 0.0, 128
    %3961 = vxpose.xlu0.b32.cont [12/16] 0.0, 128
    %3962 = vxpose.xlu0.b32.cont [13/16] 0.0, 128
    %3963 = vxpose.xlu0.b32.cont [14/16] 0.0, 128
    %3964 = vxpose.xlu0.b32.cont [15/16] 0.0, 128
    %3965 = vxpose.xlu0.b32.end [16/16] 0.0, 128
    %v3966 = vpop.trf.xlu0
    %v3967 = vpop.trf.xlu0
    %v3968 = vpop.trf.xlu0
    %v3969 = vpop.trf.xlu0
    %v3970 = vpop.trf.xlu0
    %v3971 = vpop.trf.xlu0
    %v3972 = vpop.trf.xlu0
    %v3973 = vpop.trf.xlu0
    %v3974 = vpop.trf.xlu0
    %v3975 = vpop.trf.xlu0
    %v3976 = vpop.trf.xlu0
    %v3977 = vpop.trf.xlu0
    %v3978 = vpop.trf.xlu0
    %v3979 = vpop.trf.xlu0
    %v3980 = vpop.trf.xlu0
    %v3981 = vpop.trf.xlu0
    %v3983 = vsel %vm1030, %v3966, 0
    %v3986 = vsel %vm1030, %v3967, 0
    %v3989 = vsel %vm245, %v3005, 0
    %3991 = vmatpush.msra.mxu0 0.0
    %3992 = vmatpush.msra.mxu0 0.0
    %3993 = vmatpush.msra.mxu0 0.0
    %3994 = vmatpush.msra.mxu0 0.0
    %3995 = vmatpush.msra.mxu0 0.0
    %3996 = vmatpush.msra.mxu0 0.0
    %3997 = vmatpush.msra.mxu0 0.0
    %3998 = vmatpush.msra.mxu0 0.0
    %3999 = vmatpush.msra.mxu0 0.0
    %4000 = vmatpush.msra.mxu0 0.0
    %4001 = vmatpush.msra.mxu0 0.0
    %4002 = vmatpush.msra.mxu0 0.0
    %4003 = vmatpush.msra.mxu0 0.0
    %4004 = vmatpush.msra.mxu0 0.0
    %4005 = vmatpush.msra.mxu0 0.0
    %4006 = vmatpush.msra.mxu0 %v3989
    %4007 = vmatmul.f32.gmra.mxu0 %v3983
    %v4008 = vpop.f32.mrf.mxu0
    %v4009 = vadd.f32 0.0, %v4008
    %4010 = vmatmul.f32.gmra.mxu0 %v3986
    %v4011 = vpop.f32.mrf.mxu0
    %v4012 = vadd.f32 0.0, %v4011
    %4013 = vdwg.mxu0
    %v4014 = vmul.f32 %v3915, 0.0
    %v4015 = vmul.f32 %v3917, 0.0
    %v4016 = vadd.f32 %v4014, %v4009
    %v4017 = vadd.f32 %v4015, %v4012
    %4018 = vrot.lane.b32.xlu0 %v2971, 48
    %v4019 = vpop.permute.xlu0 %4018
    %v4020 = vsel %vm1069, %v4019, 0
    %4022 = vmatpush.msra.mxu0 0.0
    %4023 = vmatpush.msra.mxu0 0.0
    %4024 = vmatpush.msra.mxu0 0.0
    %4025 = vmatpush.msra.mxu0 0.0
    %4026 = vmatpush.msra.mxu0 0.0
    %4027 = vmatpush.msra.mxu0 0.0
    %4028 = vmatpush.msra.mxu0 0.0
    %4029 = vmatpush.msra.mxu0 0.0
    %4030 = vmatpush.msra.mxu0 0.0
    %4031 = vmatpush.msra.mxu0 0.0
    %4032 = vmatpush.msra.mxu0 0.0
    %4033 = vmatpush.msra.mxu0 0.0
    %4034 = vmatpush.msra.mxu0 0.0
    %4035 = vmatpush.msra.mxu0 0.0
    %4036 = vmatpush.msra.mxu0 %v4017
    %4037 = vmatpush.msra.mxu0 %v4016
    %4038 = vmatmul.f32.gmra.mxu0 %v4020
    %v4039 = vpop.f32.mrf.mxu0
    %v4040 = vadd.f32 0.0, %v4039
    %4041 = vdwg.mxu0
    %v4042 = vrot.slane %v2971, 1
    %4043 = vrot.lane.b32.xlu0 %v4042, 64
    %v4044 = vpop.permute.xlu0 %4043
    %4046 = vxpose.xlu0.b32.start [1/16] %v4044, 128
    %4047 = vxpose.xlu0.b32.cont [2/16] 0.0, 128
    %4048 = vxpose.xlu0.b32.cont [3/16] 0.0, 128
    %4049 = vxpose.xlu0.b32.cont [4/16] 0.0, 128
    %4050 = vxpose.xlu0.b32.cont [5/16] 0.0, 128
    %4051 = vxpose.xlu0.b32.cont [6/16] 0.0, 128
    %4052 = vxpose.xlu0.b32.cont [7/16] 0.0, 128
    %4053 = vxpose.xlu0.b32.cont [8/16] 0.0, 128
    %4054 = vxpose.xlu0.b32.cont [9/16] 0.0, 128
    %4055 = vxpose.xlu0.b32.cont [10/16] 0.0, 128
    %4056 = vxpose.xlu0.b32.cont [11/16] 0.0, 128
    %4057 = vxpose.xlu0.b32.cont [12/16] 0.0, 128
    %4058 = vxpose.xlu0.b32.cont [13/16] 0.0, 128
    %4059 = vxpose.xlu0.b32.cont [14/16] 0.0, 128
    %4060 = vxpose.xlu0.b32.cont [15/16] 0.0, 128
    %4061 = vxpose.xlu0.b32.end [16/16] 0.0, 128
    %v4062 = vpop.trf.xlu0
    %v4063 = vpop.trf.xlu0
    %v4064 = vpop.trf.xlu0
    %v4065 = vpop.trf.xlu0
    %v4066 = vpop.trf.xlu0
    %v4067 = vpop.trf.xlu0
    %v4068 = vpop.trf.xlu0
    %v4069 = vpop.trf.xlu0
    %v4070 = vpop.trf.xlu0
    %v4071 = vpop.trf.xlu0
    %v4072 = vpop.trf.xlu0
    %v4073 = vpop.trf.xlu0
    %v4074 = vpop.trf.xlu0
    %v4075 = vpop.trf.xlu0
    %v4076 = vpop.trf.xlu0
    %v4077 = vpop.trf.xlu0
    %v4078 = vrot.slane %v3005, 1
    %v4080 = vsel %vm1030, %v4062, 0
    %v4083 = vsel %vm1030, %v4063, 0
    %v4085 = vsel %vm245, %v4078, 0
    %4087 = vmatpush.msra.mxu0 0.0
    %4088 = vmatpush.msra.mxu0 0.0
    %4089 = vmatpush.msra.mxu0 0.0
    %4090 = vmatpush.msra.mxu0 0.0
    %4091 = vmatpush.msra.mxu0 0.0
    %4092 = vmatpush.msra.mxu0 0.0
    %4093 = vmatpush.msra.mxu0 0.0
    %4094 = vmatpush.msra.mxu0 0.0
    %4095 = vmatpush.msra.mxu0 0.0
    %4096 = vmatpush.msra.mxu0 0.0
    %4097 = vmatpush.msra.mxu0 0.0
    %4098 = vmatpush.msra.mxu0 0.0
    %4099 = vmatpush.msra.mxu0 0.0
    %4100 = vmatpush.msra.mxu0 0.0
    %4101 = vmatpush.msra.mxu0 0.0
    %4102 = vmatpush.msra.mxu0 %v4085
    %4103 = vmatmul.f32.gmra.mxu0 %v4080
    %v4104 = vpop.f32.mrf.mxu0
    %v4105 = vadd.f32 0.0, %v4104
    %4106 = vmatmul.f32.gmra.mxu0 %v4083
    %v4107 = vpop.f32.mrf.mxu0
    %v4108 = vadd.f32 0.0, %v4107
    %4109 = vdwg.mxu0
    %v4110 = vmul.f32 %v4016, %v3919
    %v4111 = vmul.f32 %v4017, %v3921
    %v4112 = vadd.f32 %v4110, %v4105
    %v4113 = vadd.f32 %v4111, %v4108
    %4114 = vrot.lane.b32.xlu0 %v4042, 48
    %v4115 = vpop.permute.xlu0 %4114
    %v4116 = vsel %vm1069, %v4115, 0
    %4118 = vmatpush.msra.mxu0 0.0
    %4119 = vmatpush.msra.mxu0 0.0
    %4120 = vmatpush.msra.mxu0 0.0
    %4121 = vmatpush.msra.mxu0 0.0
    %4122 = vmatpush.msra.mxu0 0.0
    %4123 = vmatpush.msra.mxu0 0.0
    %4124 = vmatpush.msra.mxu0 0.0
    %4125 = vmatpush.msra.mxu0 0.0
    %4126 = vmatpush.msra.mxu0 0.0
    %4127 = vmatpush.msra.mxu0 0.0
    %4128 = vmatpush.msra.mxu0 0.0
    %4129 = vmatpush.msra.mxu0 0.0
    %4130 = vmatpush.msra.mxu0 0.0
    %4131 = vmatpush.msra.mxu0 0.0
    %4132 = vmatpush.msra.mxu0 %v4113
    %4133 = vmatpush.msra.mxu0 %v4112
    %4134 = vmatmul.f32.gmra.mxu0 %v4116
    %v4135 = vpop.f32.mrf.mxu0
    %v4136 = vadd.f32 0.0, %v4135
    %4137 = vdwg.mxu0
    %v4138 = vrot.slane %v2971, 2
    %4139 = vrot.lane.b32.xlu0 %v4138, 64
    %v4140 = vpop.permute.xlu0 %4139
    %4142 = vxpose.xlu0.b32.start [1/16] %v4140, 128
    %4143 = vxpose.xlu0.b32.cont [2/16] 0.0, 128
    %4144 = vxpose.xlu0.b32.cont [3/16] 0.0, 128
    %4145 = vxpose.xlu0.b32.cont [4/16] 0.0, 128
    %4146 = vxpose.xlu0.b32.cont [5/16] 0.0, 128
    %4147 = vxpose.xlu0.b32.cont [6/16] 0.0, 128
    %4148 = vxpose.xlu0.b32.cont [7/16] 0.0, 128
    %4149 = vxpose.xlu0.b32.cont [8/16] 0.0, 128
    %4150 = vxpose.xlu0.b32.cont [9/16] 0.0, 128
    %4151 = vxpose.xlu0.b32.cont [10/16] 0.0, 128
    %4152 = vxpose.xlu0.b32.cont [11/16] 0.0, 128
    %4153 = vxpose.xlu0.b32.cont [12/16] 0.0, 128
    %4154 = vxpose.xlu0.b32.cont [13/16] 0.0, 128
    %4155 = vxpose.xlu0.b32.cont [14/16] 0.0, 128
    %4156 = vxpose.xlu0.b32.cont [15/16] 0.0, 128
    %4157 = vxpose.xlu0.b32.end [16/16] 0.0, 128
    %v4158 = vpop.trf.xlu0
    %v4159 = vpop.trf.xlu0
    %v4160 = vpop.trf.xlu0
    %v4161 = vpop.trf.xlu0
    %v4162 = vpop.trf.xlu0
    %v4163 = vpop.trf.xlu0
    %v4164 = vpop.trf.xlu0
    %v4165 = vpop.trf.xlu0
    %v4166 = vpop.trf.xlu0
    %v4167 = vpop.trf.xlu0
    %v4168 = vpop.trf.xlu0
    %v4169 = vpop.trf.xlu0
    %v4170 = vpop.trf.xlu0
    %v4171 = vpop.trf.xlu0
    %v4172 = vpop.trf.xlu0
    %v4173 = vpop.trf.xlu0
    %v4174 = vrot.slane %v3005, 2
    %v4176 = vsel %vm1030, %v4158, 0
    %v4179 = vsel %vm1030, %v4159, 0
    %v4181 = vsel %vm245, %v4174, 0
    %4183 = vmatpush.msra.mxu0 0.0
    %4184 = vmatpush.msra.mxu0 0.0
    %4185 = vmatpush.msra.mxu0 0.0
    %4186 = vmatpush.msra.mxu0 0.0
    %4187 = vmatpush.msra.mxu0 0.0
    %4188 = vmatpush.msra.mxu0 0.0
    %4189 = vmatpush.msra.mxu0 0.0
    %4190 = vmatpush.msra.mxu0 0.0
    %4191 = vmatpush.msra.mxu0 0.0
    %4192 = vmatpush.msra.mxu0 0.0
    %4193 = vmatpush.msra.mxu0 0.0
    %4194 = vmatpush.msra.mxu0 0.0
    %4195 = vmatpush.msra.mxu0 0.0
    %4196 = vmatpush.msra.mxu0 0.0
    %4197 = vmatpush.msra.mxu0 0.0
    %4198 = vmatpush.msra.mxu0 %v4181
    %4199 = vmatmul.f32.gmra.mxu0 %v4176
    %v4200 = vpop.f32.mrf.mxu0
    %v4201 = vadd.f32 0.0, %v4200
    %4202 = vmatmul.f32.gmra.mxu0 %v4179
    %v4203 = vpop.f32.mrf.mxu0
    %v4204 = vadd.f32 0.0, %v4203
    %4205 = vdwg.mxu0
    %v4206 = vmul.f32 %v4112, %v3923
    %v4207 = vmul.f32 %v4113, %v3925
    %v4208 = vadd.f32 %v4206, %v4201
    %v4209 = vadd.f32 %v4207, %v4204
    %4210 = vrot.lane.b32.xlu0 %v4138, 48
    %v4211 = vpop.permute.xlu0 %4210
    %v4212 = vsel %vm1069, %v4211, 0
    %4214 = vmatpush.msra.mxu0 0.0
    %4215 = vmatpush.msra.mxu0 0.0
    %4216 = vmatpush.msra.mxu0 0.0
    %4217 = vmatpush.msra.mxu0 0.0
    %4218 = vmatpush.msra.mxu0 0.0
    %4219 = vmatpush.msra.mxu0 0.0
    %4220 = vmatpush.msra.mxu0 0.0
    %4221 = vmatpush.msra.mxu0 0.0
    %4222 = vmatpush.msra.mxu0 0.0
    %4223 = vmatpush.msra.mxu0 0.0
    %4224 = vmatpush.msra.mxu0 0.0
    %4225 = vmatpush.msra.mxu0 0.0
    %4226 = vmatpush.msra.mxu0 0.0
    %4227 = vmatpush.msra.mxu0 0.0
    %4228 = vmatpush.msra.mxu0 %v4209
    %4229 = vmatpush.msra.mxu0 %v4208
    %4230 = vmatmul.f32.gmra.mxu0 %v4212
    %v4231 = vpop.f32.mrf.mxu0
    %v4232 = vadd.f32 0.0, %v4231
    %4233 = vdwg.mxu0
    %v4234 = vrot.slane %v2971, 3
    %4235 = vrot.lane.b32.xlu0 %v4234, 64
    %v4236 = vpop.permute.xlu0 %4235
    %4238 = vxpose.xlu0.b32.start [1/16] %v4236, 128
    %4239 = vxpose.xlu0.b32.cont [2/16] 0.0, 128
    %4240 = vxpose.xlu0.b32.cont [3/16] 0.0, 128
    %4241 = vxpose.xlu0.b32.cont [4/16] 0.0, 128
    %4242 = vxpose.xlu0.b32.cont [5/16] 0.0, 128
    %4243 = vxpose.xlu0.b32.cont [6/16] 0.0, 128
    %4244 = vxpose.xlu0.b32.cont [7/16] 0.0, 128
    %4245 = vxpose.xlu0.b32.cont [8/16] 0.0, 128
    %4246 = vxpose.xlu0.b32.cont [9/16] 0.0, 128
    %4247 = vxpose.xlu0.b32.cont [10/16] 0.0, 128
    %4248 = vxpose.xlu0.b32.cont [11/16] 0.0, 128
    %4249 = vxpose.xlu0.b32.cont [12/16] 0.0, 128
    %4250 = vxpose.xlu0.b32.cont [13/16] 0.0, 128
    %4251 = vxpose.xlu0.b32.cont [14/16] 0.0, 128
    %4252 = vxpose.xlu0.b32.cont [15/16] 0.0, 128
    %4253 = vxpose.xlu0.b32.end [16/16] 0.0, 128
    %v4254 = vpop.trf.xlu0
    %v4255 = vpop.trf.xlu0
    %v4256 = vpop.trf.xlu0
    %v4257 = vpop.trf.xlu0
    %v4258 = vpop.trf.xlu0
    %v4259 = vpop.trf.xlu0
    %v4260 = vpop.trf.xlu0
    %v4261 = vpop.trf.xlu0
    %v4262 = vpop.trf.xlu0
    %v4263 = vpop.trf.xlu0
    %v4264 = vpop.trf.xlu0
    %v4265 = vpop.trf.xlu0
    %v4266 = vpop.trf.xlu0
    %v4267 = vpop.trf.xlu0
    %v4268 = vpop.trf.xlu0
    %v4269 = vpop.trf.xlu0
    %v4270 = vrot.slane %v3005, 3
    %v4272 = vsel %vm1030, %v4254, 0
    %v4275 = vsel %vm1030, %v4255, 0
    %v4277 = vsel %vm245, %v4270, 0
    %4279 = vmatpush.msra.mxu0 0.0
    %4280 = vmatpush.msra.mxu0 0.0
    %4281 = vmatpush.msra.mxu0 0.0
    %4282 = vmatpush.msra.mxu0 0.0
    %4283 = vmatpush.msra.mxu0 0.0
    %4284 = vmatpush.msra.mxu0 0.0
    %4285 = vmatpush.msra.mxu0 0.0
    %4286 = vmatpush.msra.mxu0 0.0
    %4287 = vmatpush.msra.mxu0 0.0
    %4288 = vmatpush.msra.mxu0 0.0
    %4289 = vmatpush.msra.mxu0 0.0
    %4290 = vmatpush.msra.mxu0 0.0
    %4291 = vmatpush.msra.mxu0 0.0
    %4292 = vmatpush.msra.mxu0 0.0
    %4293 = vmatpush.msra.mxu0 0.0
    %4294 = vmatpush.msra.mxu0 %v4277
    %4295 = vmatmul.f32.gmra.mxu0 %v4272
    %v4296 = vpop.f32.mrf.mxu0
    %v4297 = vadd.f32 0.0, %v4296
    %4298 = vmatmul.f32.gmra.mxu0 %v4275
    %v4299 = vpop.f32.mrf.mxu0
    %v4300 = vadd.f32 0.0, %v4299
    %4301 = vdwg.mxu0
    %v4302 = vmul.f32 %v4208, %v3927
    %v4303 = vmul.f32 %v4209, %v3929
    %v4304 = vadd.f32 %v4302, %v4297
    %v4305 = vadd.f32 %v4303, %v4300
    %4306 = vrot.lane.b32.xlu0 %v4234, 48
    %v4307 = vpop.permute.xlu0 %4306
    %v4308 = vsel %vm1069, %v4307, 0
    %4310 = vmatpush.msra.mxu0 0.0
    %4311 = vmatpush.msra.mxu0 0.0
    %4312 = vmatpush.msra.mxu0 0.0
    %4313 = vmatpush.msra.mxu0 0.0
    %4314 = vmatpush.msra.mxu0 0.0
    %4315 = vmatpush.msra.mxu0 0.0
    %4316 = vmatpush.msra.mxu0 0.0
    %4317 = vmatpush.msra.mxu0 0.0
    %4318 = vmatpush.msra.mxu0 0.0
    %4319 = vmatpush.msra.mxu0 0.0
    %4320 = vmatpush.msra.mxu0 0.0
    %4321 = vmatpush.msra.mxu0 0.0
    %4322 = vmatpush.msra.mxu0 0.0
    %4323 = vmatpush.msra.mxu0 0.0
    %4324 = vmatpush.msra.mxu0 %v4305
    %4325 = vmatpush.msra.mxu0 %v4304
    %4326 = vmatmul.f32.gmra.mxu0 %v4308
    %v4327 = vpop.f32.mrf.mxu0
    %v4328 = vadd.f32 0.0, %v4327
    %4329 = vdwg.mxu0
    %v4330 = vrot.slane %v2971, 4
    %4331 = vrot.lane.b32.xlu0 %v4330, 64
    %v4332 = vpop.permute.xlu0 %4331
    %4334 = vxpose.xlu0.b32.start [1/16] %v4332, 128
    %4335 = vxpose.xlu0.b32.cont [2/16] 0.0, 128
    %4336 = vxpose.xlu0.b32.cont [3/16] 0.0, 128
    %4337 = vxpose.xlu0.b32.cont [4/16] 0.0, 128
    %4338 = vxpose.xlu0.b32.cont [5/16] 0.0, 128
    %4339 = vxpose.xlu0.b32.cont [6/16] 0.0, 128
    %4340 = vxpose.xlu0.b32.cont [7/16] 0.0, 128
    %4341 = vxpose.xlu0.b32.cont [8/16] 0.0, 128
    %4342 = vxpose.xlu0.b32.cont [9/16] 0.0, 128
    %4343 = vxpose.xlu0.b32.cont [10/16] 0.0, 128
    %4344 = vxpose.xlu0.b32.cont [11/16] 0.0, 128
    %4345 = vxpose.xlu0.b32.cont [12/16] 0.0, 128
    %4346 = vxpose.xlu0.b32.cont [13/16] 0.0, 128
    %4347 = vxpose.xlu0.b32.cont [14/16] 0.0, 128
    %4348 = vxpose.xlu0.b32.cont [15/16] 0.0, 128
    %4349 = vxpose.xlu0.b32.end [16/16] 0.0, 128
    %v4350 = vpop.trf.xlu0
    %v4351 = vpop.trf.xlu0
    %v4352 = vpop.trf.xlu0
    %v4353 = vpop.trf.xlu0
    %v4354 = vpop.trf.xlu0
    %v4355 = vpop.trf.xlu0
    %v4356 = vpop.trf.xlu0
    %v4357 = vpop.trf.xlu0
    %v4358 = vpop.trf.xlu0
    %v4359 = vpop.trf.xlu0
    %v4360 = vpop.trf.xlu0
    %v4361 = vpop.trf.xlu0
    %v4362 = vpop.trf.xlu0
    %v4363 = vpop.trf.xlu0
    %v4364 = vpop.trf.xlu0
    %v4365 = vpop.trf.xlu0
    %v4366 = vrot.slane %v3005, 4
    %v4368 = vsel %vm1030, %v4350, 0
    %v4371 = vsel %vm1030, %v4351, 0
    %v4373 = vsel %vm245, %v4366, 0
    %4375 = vmatpush.msra.mxu0 0.0
    %4376 = vmatpush.msra.mxu0 0.0
    %4377 = vmatpush.msra.mxu0 0.0
    %4378 = vmatpush.msra.mxu0 0.0
    %4379 = vmatpush.msra.mxu0 0.0
    %4380 = vmatpush.msra.mxu0 0.0
    %4381 = vmatpush.msra.mxu0 0.0
    %4382 = vmatpush.msra.mxu0 0.0
    %4383 = vmatpush.msra.mxu0 0.0
    %4384 = vmatpush.msra.mxu0 0.0
    %4385 = vmatpush.msra.mxu0 0.0
    %4386 = vmatpush.msra.mxu0 0.0
    %4387 = vmatpush.msra.mxu0 0.0
    %4388 = vmatpush.msra.mxu0 0.0
    %4389 = vmatpush.msra.mxu0 0.0
    %4390 = vmatpush.msra.mxu0 %v4373
    %4391 = vmatmul.f32.gmra.mxu0 %v4368
    %v4392 = vpop.f32.mrf.mxu0
    %v4393 = vadd.f32 0.0, %v4392
    %4394 = vmatmul.f32.gmra.mxu0 %v4371
    %v4395 = vpop.f32.mrf.mxu0
    %v4396 = vadd.f32 0.0, %v4395
    %4397 = vdwg.mxu0
    %v4398 = vmul.f32 %v4304, %v3931
    %v4399 = vmul.f32 %v4305, %v3933
    %v4400 = vadd.f32 %v4398, %v4393
    %v4401 = vadd.f32 %v4399, %v4396
    %4402 = vrot.lane.b32.xlu0 %v4330, 48
    %v4403 = vpop.permute.xlu0 %4402
    %v4404 = vsel %vm1069, %v4403, 0
    %4406 = vmatpush.msra.mxu0 0.0
    %4407 = vmatpush.msra.mxu0 0.0
    %4408 = vmatpush.msra.mxu0 0.0
    %4409 = vmatpush.msra.mxu0 0.0
    %4410 = vmatpush.msra.mxu0 0.0
    %4411 = vmatpush.msra.mxu0 0.0
    %4412 = vmatpush.msra.mxu0 0.0
    %4413 = vmatpush.msra.mxu0 0.0
    %4414 = vmatpush.msra.mxu0 0.0
    %4415 = vmatpush.msra.mxu0 0.0
    %4416 = vmatpush.msra.mxu0 0.0
    %4417 = vmatpush.msra.mxu0 0.0
    %4418 = vmatpush.msra.mxu0 0.0
    %4419 = vmatpush.msra.mxu0 0.0
    %4420 = vmatpush.msra.mxu0 %v4401
    %4421 = vmatpush.msra.mxu0 %v4400
    %4422 = vmatmul.f32.gmra.mxu0 %v4404
    %v4423 = vpop.f32.mrf.mxu0
    %v4424 = vadd.f32 0.0, %v4423
    %4425 = vdwg.mxu0
    %v4426 = vrot.slane %v2971, 5
    %4427 = vrot.lane.b32.xlu0 %v4426, 64
    %v4428 = vpop.permute.xlu0 %4427
    %4430 = vxpose.xlu0.b32.start [1/16] %v4428, 128
    %4431 = vxpose.xlu0.b32.cont [2/16] 0.0, 128
    %4432 = vxpose.xlu0.b32.cont [3/16] 0.0, 128
    %4433 = vxpose.xlu0.b32.cont [4/16] 0.0, 128
    %4434 = vxpose.xlu0.b32.cont [5/16] 0.0, 128
    %4435 = vxpose.xlu0.b32.cont [6/16] 0.0, 128
    %4436 = vxpose.xlu0.b32.cont [7/16] 0.0, 128
    %4437 = vxpose.xlu0.b32.cont [8/16] 0.0, 128
    %4438 = vxpose.xlu0.b32.cont [9/16] 0.0, 128
    %4439 = vxpose.xlu0.b32.cont [10/16] 0.0, 128
    %4440 = vxpose.xlu0.b32.cont [11/16] 0.0, 128
    %4441 = vxpose.xlu0.b32.cont [12/16] 0.0, 128
    %4442 = vxpose.xlu0.b32.cont [13/16] 0.0, 128
    %4443 = vxpose.xlu0.b32.cont [14/16] 0.0, 128
    %4444 = vxpose.xlu0.b32.cont [15/16] 0.0, 128
    %4445 = vxpose.xlu0.b32.end [16/16] 0.0, 128
    %v4446 = vpop.trf.xlu0
    %v4447 = vpop.trf.xlu0
    %v4448 = vpop.trf.xlu0
    %v4449 = vpop.trf.xlu0
    %v4450 = vpop.trf.xlu0
    %v4451 = vpop.trf.xlu0
    %v4452 = vpop.trf.xlu0
    %v4453 = vpop.trf.xlu0
    %v4454 = vpop.trf.xlu0
    %v4455 = vpop.trf.xlu0
    %v4456 = vpop.trf.xlu0
    %v4457 = vpop.trf.xlu0
    %v4458 = vpop.trf.xlu0
    %v4459 = vpop.trf.xlu0
    %v4460 = vpop.trf.xlu0
    %v4461 = vpop.trf.xlu0
    %v4462 = vrot.slane %v3005, 5
    %v4464 = vsel %vm1030, %v4446, 0
    %v4467 = vsel %vm1030, %v4447, 0
    %v4469 = vsel %vm245, %v4462, 0
    %4471 = vmatpush.msra.mxu0 0.0
    %4472 = vmatpush.msra.mxu0 0.0
    %4473 = vmatpush.msra.mxu0 0.0
    %4474 = vmatpush.msra.mxu0 0.0
    %4475 = vmatpush.msra.mxu0 0.0
    %4476 = vmatpush.msra.mxu0 0.0
    %4477 = vmatpush.msra.mxu0 0.0
    %4478 = vmatpush.msra.mxu0 0.0
    %4479 = vmatpush.msra.mxu0 0.0
    %4480 = vmatpush.msra.mxu0 0.0
    %4481 = vmatpush.msra.mxu0 0.0
    %4482 = vmatpush.msra.mxu0 0.0
    %4483 = vmatpush.msra.mxu0 0.0
    %4484 = vmatpush.msra.mxu0 0.0
    %4485 = vmatpush.msra.mxu0 0.0
    %4486 = vmatpush.msra.mxu0 %v4469
    %4487 = vmatmul.f32.gmra.mxu0 %v4464
    %v4488 = vpop.f32.mrf.mxu0
    %v4489 = vadd.f32 0.0, %v4488
    %4490 = vmatmul.f32.gmra.mxu0 %v4467
    %v4491 = vpop.f32.mrf.mxu0
    %v4492 = vadd.f32 0.0, %v4491
    %4493 = vdwg.mxu0
    %v4494 = vmul.f32 %v4400, %v3935
    %v4495 = vmul.f32 %v4401, %v3937
    %v4496 = vadd.f32 %v4494, %v4489
    %v4497 = vadd.f32 %v4495, %v4492
    %4498 = vrot.lane.b32.xlu0 %v4426, 48
    %v4499 = vpop.permute.xlu0 %4498
    %v4500 = vsel %vm1069, %v4499, 0
    %4502 = vmatpush.msra.mxu0 0.0
    %4503 = vmatpush.msra.mxu0 0.0
    %4504 = vmatpush.msra.mxu0 0.0
    %4505 = vmatpush.msra.mxu0 0.0
    %4506 = vmatpush.msra.mxu0 0.0
    %4507 = vmatpush.msra.mxu0 0.0
    %4508 = vmatpush.msra.mxu0 0.0
    %4509 = vmatpush.msra.mxu0 0.0
    %4510 = vmatpush.msra.mxu0 0.0
    %4511 = vmatpush.msra.mxu0 0.0
    %4512 = vmatpush.msra.mxu0 0.0
    %4513 = vmatpush.msra.mxu0 0.0
    %4514 = vmatpush.msra.mxu0 0.0
    %4515 = vmatpush.msra.mxu0 0.0
    %4516 = vmatpush.msra.mxu0 %v4497
    %4517 = vmatpush.msra.mxu0 %v4496
    %4518 = vmatmul.f32.gmra.mxu0 %v4500
    %v4519 = vpop.f32.mrf.mxu0
    %v4520 = vadd.f32 0.0, %v4519
    %4521 = vdwg.mxu0
    %v4522 = vrot.slane %v2971, 6
    %4523 = vrot.lane.b32.xlu0 %v4522, 64
    %v4524 = vpop.permute.xlu0 %4523
    %4526 = vxpose.xlu0.b32.start [1/16] %v4524, 128
    %4527 = vxpose.xlu0.b32.cont [2/16] 0.0, 128
    %4528 = vxpose.xlu0.b32.cont [3/16] 0.0, 128
    %4529 = vxpose.xlu0.b32.cont [4/16] 0.0, 128
    %4530 = vxpose.xlu0.b32.cont [5/16] 0.0, 128
    %4531 = vxpose.xlu0.b32.cont [6/16] 0.0, 128
    %4532 = vxpose.xlu0.b32.cont [7/16] 0.0, 128
    %4533 = vxpose.xlu0.b32.cont [8/16] 0.0, 128
    %4534 = vxpose.xlu0.b32.cont [9/16] 0.0, 128
    %4535 = vxpose.xlu0.b32.cont [10/16] 0.0, 128
    %4536 = vxpose.xlu0.b32.cont [11/16] 0.0, 128
    %4537 = vxpose.xlu0.b32.cont [12/16] 0.0, 128
    %4538 = vxpose.xlu0.b32.cont [13/16] 0.0, 128
    %4539 = vxpose.xlu0.b32.cont [14/16] 0.0, 128
    %4540 = vxpose.xlu0.b32.cont [15/16] 0.0, 128
    %4541 = vxpose.xlu0.b32.end [16/16] 0.0, 128
    %v4542 = vpop.trf.xlu0
    %v4543 = vpop.trf.xlu0
    %v4544 = vpop.trf.xlu0
    %v4545 = vpop.trf.xlu0
    %v4546 = vpop.trf.xlu0
    %v4547 = vpop.trf.xlu0
    %v4548 = vpop.trf.xlu0
    %v4549 = vpop.trf.xlu0
    %v4550 = vpop.trf.xlu0
    %v4551 = vpop.trf.xlu0
    %v4552 = vpop.trf.xlu0
    %v4553 = vpop.trf.xlu0
    %v4554 = vpop.trf.xlu0
    %v4555 = vpop.trf.xlu0
    %v4556 = vpop.trf.xlu0
    %v4557 = vpop.trf.xlu0
    %v4558 = vrot.slane %v3005, 6
    %v4560 = vsel %vm1030, %v4542, 0
    %v4563 = vsel %vm1030, %v4543, 0
    %v4565 = vsel %vm245, %v4558, 0
    %4567 = vmatpush.msra.mxu0 0.0
    %4568 = vmatpush.msra.mxu0 0.0
    %4569 = vmatpush.msra.mxu0 0.0
    %4570 = vmatpush.msra.mxu0 0.0
    %4571 = vmatpush.msra.mxu0 0.0
    %4572 = vmatpush.msra.mxu0 0.0
    %4573 = vmatpush.msra.mxu0 0.0
    %4574 = vmatpush.msra.mxu0 0.0
    %4575 = vmatpush.msra.mxu0 0.0
    %4576 = vmatpush.msra.mxu0 0.0
    %4577 = vmatpush.msra.mxu0 0.0
    %4578 = vmatpush.msra.mxu0 0.0
    %4579 = vmatpush.msra.mxu0 0.0
    %4580 = vmatpush.msra.mxu0 0.0
    %4581 = vmatpush.msra.mxu0 0.0
    %4582 = vmatpush.msra.mxu0 %v4565
    %4583 = vmatmul.f32.gmra.mxu0 %v4560
    %v4584 = vpop.f32.mrf.mxu0
    %v4585 = vadd.f32 0.0, %v4584
    %4586 = vmatmul.f32.gmra.mxu0 %v4563
    %v4587 = vpop.f32.mrf.mxu0
    %v4588 = vadd.f32 0.0, %v4587
    %4589 = vdwg.mxu0
    %v4590 = vmul.f32 %v4496, %v3939
    %v4591 = vmul.f32 %v4497, %v3941
    %v4592 = vadd.f32 %v4590, %v4585
    %v4593 = vadd.f32 %v4591, %v4588
    %4594 = vrot.lane.b32.xlu0 %v4522, 48
    %v4595 = vpop.permute.xlu0 %4594
    %v4596 = vsel %vm1069, %v4595, 0
    %4598 = vmatpush.msra.mxu0 0.0
    %4599 = vmatpush.msra.mxu0 0.0
    %4600 = vmatpush.msra.mxu0 0.0
    %4601 = vmatpush.msra.mxu0 0.0
    %4602 = vmatpush.msra.mxu0 0.0
    %4603 = vmatpush.msra.mxu0 0.0
    %4604 = vmatpush.msra.mxu0 0.0
    %4605 = vmatpush.msra.mxu0 0.0
    %4606 = vmatpush.msra.mxu0 0.0
    %4607 = vmatpush.msra.mxu0 0.0
    %4608 = vmatpush.msra.mxu0 0.0
    %4609 = vmatpush.msra.mxu0 0.0
    %4610 = vmatpush.msra.mxu0 0.0
    %4611 = vmatpush.msra.mxu0 0.0
    %4612 = vmatpush.msra.mxu0 %v4593
    %4613 = vmatpush.msra.mxu0 %v4592
    %4614 = vmatmul.f32.gmra.mxu0 %v4596
    %v4615 = vpop.f32.mrf.mxu0
    %v4616 = vadd.f32 0.0, %v4615
    %4617 = vdwg.mxu0
    %v4618 = vrot.slane %v2971, 7
    %4619 = vrot.lane.b32.xlu0 %v4618, 64
    %v4620 = vpop.permute.xlu0 %4619
    %4622 = vxpose.xlu0.b32.start [1/16] %v4620, 128
    %4623 = vxpose.xlu0.b32.cont [2/16] 0.0, 128
    %4624 = vxpose.xlu0.b32.cont [3/16] 0.0, 128
    %4625 = vxpose.xlu0.b32.cont [4/16] 0.0, 128
    %4626 = vxpose.xlu0.b32.cont [5/16] 0.0, 128
    %4627 = vxpose.xlu0.b32.cont [6/16] 0.0, 128
    %4628 = vxpose.xlu0.b32.cont [7/16] 0.0, 128
    %4629 = vxpose.xlu0.b32.cont [8/16] 0.0, 128
    %4630 = vxpose.xlu0.b32.cont [9/16] 0.0, 128
    %4631 = vxpose.xlu0.b32.cont [10/16] 0.0, 128
    %4632 = vxpose.xlu0.b32.cont [11/16] 0.0, 128
    %4633 = vxpose.xlu0.b32.cont [12/16] 0.0, 128
    %4634 = vxpose.xlu0.b32.cont [13/16] 0.0, 128
    %4635 = vxpose.xlu0.b32.cont [14/16] 0.0, 128
    %4636 = vxpose.xlu0.b32.cont [15/16] 0.0, 128
    %4637 = vxpose.xlu0.b32.end [16/16] 0.0, 128
    %v4638 = vpop.trf.xlu0
    %v4639 = vpop.trf.xlu0
    %v4640 = vpop.trf.xlu0
    %v4641 = vpop.trf.xlu0
    %v4642 = vpop.trf.xlu0
    %v4643 = vpop.trf.xlu0
    %v4644 = vpop.trf.xlu0
    %v4645 = vpop.trf.xlu0
    %v4646 = vpop.trf.xlu0
    %v4647 = vpop.trf.xlu0
    %v4648 = vpop.trf.xlu0
    %v4649 = vpop.trf.xlu0
    %v4650 = vpop.trf.xlu0
    %v4651 = vpop.trf.xlu0
    %v4652 = vpop.trf.xlu0
    %v4653 = vpop.trf.xlu0
    %v4654 = vrot.slane %v3005, 7
    %v4656 = vsel %vm1030, %v4638, 0
    %v4659 = vsel %vm1030, %v4639, 0
    %v4661 = vsel %vm245, %v4654, 0
    %4663 = vmatpush.msra.mxu0 0.0
    %4664 = vmatpush.msra.mxu0 0.0
    %4665 = vmatpush.msra.mxu0 0.0
    %4666 = vmatpush.msra.mxu0 0.0
    %4667 = vmatpush.msra.mxu0 0.0
    %4668 = vmatpush.msra.mxu0 0.0
    %4669 = vmatpush.msra.mxu0 0.0
    %4670 = vmatpush.msra.mxu0 0.0
    %4671 = vmatpush.msra.mxu0 0.0
    %4672 = vmatpush.msra.mxu0 0.0
    %4673 = vmatpush.msra.mxu0 0.0
    %4674 = vmatpush.msra.mxu0 0.0
    %4675 = vmatpush.msra.mxu0 0.0
    %4676 = vmatpush.msra.mxu0 0.0
    %4677 = vmatpush.msra.mxu0 0.0
    %4678 = vmatpush.msra.mxu0 %v4661
    %4679 = vmatmul.f32.gmra.mxu0 %v4656
    %v4680 = vpop.f32.mrf.mxu0
    %v4681 = vadd.f32 0.0, %v4680
    %4682 = vmatmul.f32.gmra.mxu0 %v4659
    %v4683 = vpop.f32.mrf.mxu0
    %v4684 = vadd.f32 0.0, %v4683
    %4685 = vdwg.mxu0
    %v4686 = vmul.f32 %v4592, %v3943
    %v4687 = vmul.f32 %v4593, %v3945
    %v4688 = vadd.f32 %v4686, %v4681
    %v4689 = vadd.f32 %v4687, %v4684
    %4690 = vrot.lane.b32.xlu0 %v4618, 48
    %v4691 = vpop.permute.xlu0 %4690
    %v4692 = vsel %vm1069, %v4691, 0
    %4694 = vmatpush.msra.mxu0 0.0
    %4695 = vmatpush.msra.mxu0 0.0
    %4696 = vmatpush.msra.mxu0 0.0
    %4697 = vmatpush.msra.mxu0 0.0
    %4698 = vmatpush.msra.mxu0 0.0
    %4699 = vmatpush.msra.mxu0 0.0
    %4700 = vmatpush.msra.mxu0 0.0
    %4701 = vmatpush.msra.mxu0 0.0
    %4702 = vmatpush.msra.mxu0 0.0
    %4703 = vmatpush.msra.mxu0 0.0
    %4704 = vmatpush.msra.mxu0 0.0
    %4705 = vmatpush.msra.mxu0 0.0
    %4706 = vmatpush.msra.mxu0 0.0
    %4707 = vmatpush.msra.mxu0 0.0
    %4708 = vmatpush.msra.mxu0 %v4689
    %4709 = vmatpush.msra.mxu0 %v4688
    %4710 = vmatmul.f32.gmra.mxu0 %v4692
    %v4711 = vpop.f32.mrf.mxu0
    %v4712 = vadd.f32 0.0, %v4711
    %4713 = vdwg.mxu0
    %v4715 = vrot.slane %v4136, 7
    %v4718 = vrot.slane %v4232, 6
    %v4721 = vrot.slane %v4328, 5
    %v4724 = vrot.slane %v4424, 4
    %v4727 = vrot.slane %v4520, 3
    %v4730 = vrot.slane %v4616, 2
    %v4733 = vrot.slane %v4712, 1
    %v4735 = vsel %vm245, %v4040, %v4715
    %v4736 = vsel %vm247, %v4735, %v4718
    %v4737 = vsel %vm249, %v4736, %v4721
    %v4738 = vsel %vm251, %v4737, %v4724
    %v4739 = vsel %vm253, %v4738, %v4727
    %v4740 = vsel %vm255, %v4739, %v4730
    %v4741 = vsel %vm257, %v4740, %v4733
    %v4742 = vperm.slane %v2768, 7
    %v4743 = vmul.f32 %v4742, %v2920
    %v4744 = vmul.f32 %v4742, %v2921
    %v4745 = vadd.f32 %v3873, %v4743
    %v4746 = vadd.f32 %v4741, %v4744
    %v4747 = vxor.u32 %v2839, 2147483648
    %v4748 = vxor.u32 %v2841, 2147483648
    %v4749 = vmul.f32 %v4747, 1.442695
    %v4750 = vpow.pop %v4749
    %v4751 = vmul.f32 %v4748, 1.442695
    %v4752 = vpow.pop %v4751
    %v4753 = vadd.f32 %v4750, 1.0
    %v4754 = vadd.f32 %v4752, 1.0
    %v4755 = vrcp.pop %v4753
    %v4756 = vmul.f32 %v4753, %v4755
    %v4757 = vsub.f32 1.0, %v4756
    %v4758 = vmul.f32 %v4755, %v4757
    %v4759 = vadd.f32 %v4755, %v4758
    %vm4760 = vweird.f32 %v4753
    %vm4761 = vweird.f32 %v4755
    %vm4762 = vmor %vm4760, %vm4761
    %v4763 = vsel %vm4762, %v4755, %v4759
    %v4764 = vand.u32 2147483647, %v4753
    %vm4765 = vcmp.eq.f32.partialorder %v4764, 8.507059e+37
    %v4766 = vand.u32 %v4753, 2147483648
    %v4767 = vor.u32 1.1754944e-38, %v4766
    %v4768 = vsel %vm4765, %v4767, %v4763
    %v4769 = vmul.f32 1.0, %v4768
    %v4770 = vrcp.pop %v4754
    %v4771 = vmul.f32 %v4754, %v4770
    %v4772 = vsub.f32 1.0, %v4771
    %v4773 = vmul.f32 %v4770, %v4772
    %v4774 = vadd.f32 %v4770, %v4773
    %vm4775 = vweird.f32 %v4754
    %vm4776 = vweird.f32 %v4770
    %vm4777 = vmor %vm4775, %vm4776
    %v4778 = vsel %vm4777, %v4770, %v4774
    %v4779 = vand.u32 2147483647, %v4754
    %vm4780 = vcmp.eq.f32.partialorder %v4779, 8.507059e+37
    %v4781 = vand.u32 %v4754, 2147483648
    %v4782 = vor.u32 1.1754944e-38, %v4781
    %v4783 = vsel %vm4780, %v4782, %v4778
    %v4784 = vmul.f32 1.0, %v4783
    %v4785 = vmul.f32 %v2839, %v4769
    %v4786 = vmul.f32 %v2841, %v4784
    %4789 = vrot.lane.b32.xlu0 %v4785, 64
    %v4790 = vpop.permute.xlu0 %4789
    %4791 = vrot.lane.b32.xlu0 %v4786, 64
    %v4792 = vpop.permute.xlu0 %4791
    %v4795 = vmul.f32 %v4745, %v4790
    %v4796 = vmul.f32 %v4746, %v4792
    %v4797 = vpack.c.bf16 %v4796, %v4795
    %s4798 = scalar_lea.vmem [#allocation13], 32
    %v4799 = vld [vmem:[%s4798] sm:$0xf]
    %v4800 = vld [vmem:[%s4798 + $0x4] sm:$0xf]
    %v4801 = vld [vmem:[%s4798 + $0x8] sm:$0xf]
    %v4802 = vld [vmem:[%s4798 + $0xc] sm:$0xf]
    %v4803 = vld [vmem:[%s4798 + $0x10] sm:$0xf]
    %v4804 = vld [vmem:[%s4798 + $0x14] sm:$0xf]
    %v4805 = vld [vmem:[%s4798 + $0x18] sm:$0xf]
    %v4806 = vld [vmem:[%s4798 + $0x1c] sm:$0xf]
    %v4815 = vunpack.c.l.b16 %v4799
    %v4816 = vunpack.c.l.b16 %v4800
    %v4817 = vunpack.c.l.b16 %v4801
    %v4818 = vunpack.c.l.b16 %v4802
    %v4819 = vunpack.c.l.b16 %v4803
    %v4820 = vunpack.c.l.b16 %v4804
    %v4821 = vunpack.c.l.b16 %v4805
    %v4822 = vunpack.c.l.b16 %v4806
    %v4823 = vpack.c.b16 %v4816, %v4815
    %v4824 = vpack.c.b16 %v4818, %v4817
    %v4825 = vpack.c.b16 %v4820, %v4819
    %v4826 = vpack.c.b16 %v4822, %v4821
    %v4832 = vsel %vm871, %v4797, 0
    %4834 = vmatpush.bf16.msra.mxu0 0
    %4835 = vmatpush.bf16.msra.mxu0 0
    %4836 = vmatpush.bf16.msra.mxu0 0
    %4837 = vmatpush.bf16.msra.mxu0 0
    %4838 = vmatpush.bf16.msra.mxu0 %v4826
    %4839 = vmatpush.bf16.msra.mxu0 %v4825
    %4840 = vmatpush.bf16.msra.mxu0 %v4824
    %4841 = vmatpush.bf16.msra.mxu0 %v4823
    %4842 = vmatmul.bf16.gmra.mxu0 %v4832
    %v4843 = vpop.f32.mrf.mxu0
    %v4844 = vadd.f32 0.0, %v4843
    %v4845 = vpop.f32.mrf.mxu0
    %v4846 = vadd.f32 0.0, %v4845
    %4847 = vdwg.mxu0
    %v4848 = vadd.f32 %v2765, %v4844
    %v4849 = vadd.f32 %v2766, %v4846
    %v4850 = vld [vmem:[%s4 + $0x1] sm:$0x1]
    %v4851 = vmul.f32 %v4848, %v4848
    %v4852 = vmul.f32 %v4849, %v4849
    %v4853 = vsel %vm673, %v4851, 0.0
    %4854 = vadd.xlane.f32.xlu0 %v4853
    %v4855 = vpop.xlane.xlu0 %4854
    %v4856 = vsel %vm673, %v4852, 0.0
    %4857 = vadd.xlane.f32.xlu0 %v4856
    %v4858 = vpop.xlane.xlu0 %4857
    %v4859 = vmul.f32 %v4855, %v686
    %v4860 = vmul.f32 %v4858, %v686
    %v4861 = vadd.f32 %v4859, 1e-05
    %v4862 = vadd.f32 %v4860, 1e-05
    %v4863 = vrsqrt.pop %v4861
    %v4864 = vmul.f32 %v4863, %v4861
    %v4865 = vmul.f32 %v4864, %v4863
    %v4866 = vmul.f32 0.5, %v4865
    %v4867 = vsub.f32 1.5, %v4866
    %v4868 = vmul.f32 %v4863, %v4867
    %vm4869 = vweird.f32 %v4861
    %vm4870 = vweird.f32 %v4863
    %vm4871 = vmor %vm4869, %vm4870
    %v4872 = vsel %vm4871, %v4863, %v4868
    %v4873 = vrsqrt.pop %v4862
    %v4874 = vmul.f32 %v4873, %v4862
    %v4875 = vmul.f32 %v4874, %v4873
    %v4876 = vmul.f32 0.5, %v4875
    %v4877 = vsub.f32 1.5, %v4876
    %v4878 = vmul.f32 %v4873, %v4877
    %vm4879 = vweird.f32 %v4862
    %vm4880 = vweird.f32 %v4873
    %vm4881 = vmor %vm4879, %vm4880
    %v4882 = vsel %vm4881, %v4873, %v4878
    %v4883 = vmul.f32 %v4848, %v4872
    %v4884 = vmul.f32 %v4849, %v4882
    %v4885 = vperm.slane %v4850, 0
    %v4886 = vmul.f32 %v4883, %v4885
    %v4887 = vmul.f32 %v4884, %v4885
    %v4888 = vpack.c.bf16 %v4887, %v4886
    %v4889 = vld [vmem:[%s9] sm:$0xf]
    %v4890 = vld [vmem:[%s9 + $0x4] sm:$0xf]
    %v4891 = vld [vmem:[%s9 + $0x8] sm:$0xf]
    %v4892 = vld [vmem:[%s9 + $0xc] sm:$0xf]
    %v4897 = vunpack.c.l.b16 %v4889
    %v4898 = vunpack.c.l.b16 %v4890
    %v4899 = vunpack.c.l.b16 %v4891
    %v4900 = vunpack.c.l.b16 %v4892
    %v4901 = vpack.c.b16 %v4898, %v4897
    %v4902 = vpack.c.b16 %v4900, %v4899
    %v4906 = vsel %vm673, %v4888, 0
    %4908 = vmatpush.bf16.msra.mxu0 0
    %4909 = vmatpush.bf16.msra.mxu0 0
    %4910 = vmatpush.bf16.msra.mxu0 0
    %4911 = vmatpush.bf16.msra.mxu0 0
    %4912 = vmatpush.bf16.msra.mxu0 0
    %4913 = vmatpush.bf16.msra.mxu0 0
    %4914 = vmatpush.bf16.msra.mxu0 %v4902
    %4915 = vmatpush.bf16.msra.mxu0 %v4901
    %4916 = vmatmul.bf16.gmra.mxu0 %v4906
    %v4917 = vpop.f32.mrf.mxu0
    %v4918 = vadd.f32 0.0, %v4917
    %v4919 = vpop.f32.mrf.mxu0
    %v4920 = vadd.f32 0.0, %v4919
    %4921 = vdwg.mxu0
    %4922 = vst [vmem:[#allocation15] sm:$0xff] %v4918
    %s4923 = scalar_lea.vmem [#allocation15], 8
    %4924 = vst [vmem:[%s4923] sm:$0xff] %v4920
    // Predicated region
    $region62: #{aim_forward.1} parent=1 // pred_check
      _
    $region63: #{aim_forward.1} parent=1 // pred_check_branch
      %4926 = sbr.rel (0) target = $region65
    $region64: #{aim_forward.1} parent=1 // pred_region
      %4928 = vsyncadd [#allocation6], 0
      %s4929 = sshll.u32 [#allocation15], 4
      %s4930 = int_to_ptr.vmem [resolvable:$true] %s4929
      %s4931 = sshll.u32 %s10, 4
      %s4932 = int_to_ptr.hbm [resolvable:$true] %s4931
      %4937 = dma.vmem_to_hbm [thread:$0]  %s4930, 256, %s4932, [#allocation6], 128, 128, 8
    $region65: #{aim_forward.1} parent=1 // pred_fallthru
      _
    // Predicated region
    $region66: #{aim_forward.1} parent=1 // pred_check
      _
    $region67: #{aim_forward.1} parent=1 // pred_check_branch
      %4939 = sbr.rel (0) target = $region69
    $region68: #{aim_forward.1} parent=1 // pred_region
      %4941 = dma.done [#allocation6], 256
    $region69: #{aim_forward.1} parent=1 // pred_fallthru
      _
    %4942 = vsyncpa [#allocation5], 1
    %4943 = vsyncpa [#allocation8], 1
    %4944 = vsyncpa [#allocation11], 1
    %4945 = vsyncpa [#allocation14], 1
    %4946 = vsyncpa [#allocation6], 1

</llo_original>
